<compile_context>
chip_gen: v5e
topology: v5e:2x2
jax: 0.10.0
libtpu: 0.0.40
codegen_flags: <defaults>
</compile_context>

<pallas_src>
import functools

import jax
import jax.numpy as jnp
from jax.experimental import pallas as pl
from jax.experimental.pallas import tpu as pltpu


def _round_up(x, m):
    return ((x + m - 1) // m) * m


def _sentiment_lstm_kernel(emb_ref, wih_ref, whh_ref, b_ref, h0_ref, c0_ref,
                           fcw_ref, fcb_ref,
                           sig_ref, hn_ref, cn_ref,
                           io_ref,
                           *, n_layers, seq_len, batch_p, hp):
    """All-VMEM kernel: multi-layer LSTM over time + fc + sigmoid.

    emb_ref : (seq*Bp, P)            time-major, flattened, padded embeddings
    wih_ref : (n_layers, P, 4P)      W_ih^T, gate-block padded
    whh_ref : (n_layers, P, 4P)      W_hh^T, gate-block padded
    b_ref   : (n_layers, 1, 4P)      b_ih + b_hh, gate-block padded
    h0_ref  : (n_layers, Bp, P)
    c0_ref  : (n_layers, Bp, P)
    fcw_ref : (P, Op)                fc weight^T, padded
    fcb_ref : (1, Op)
    sig_ref : (Bp, Op)               sigmoid(fc(h_lastlayer[t = seq-1]))
    hn_ref  : (n_layers, Bp, P)
    cn_ref  : (n_layers, Bp, P)
    io_ref  : VMEM scratch (seq*Bp, P) -- holds layer l's outputs for layer l+1
    """
    P = hp
    B = batch_p

    h = None
    for layer in range(n_layers):                 # n_layers is small and static
        w_ih = wih_ref[layer]                     # (P, 4P)
        w_hh = whh_ref[layer]                     # (P, 4P)
        b = b_ref[layer]                          # (1, 4P)

        # Hoisted input projection + bias: one MXU matmul for ALL timesteps.
        x_flat = emb_ref[...] if layer == 0 else io_ref[...]     # (seq*Bp, P)
        gates_in = jnp.dot(x_flat, w_ih,
                           preferred_element_type=jnp.float32) + b  # (seq*Bp, 4P)

        h = h0_ref[layer]                         # (Bp, P)  -- stays in vregs
        c = c0_ref[layer]
        last_layer = (layer + 1 == n_layers)

        # Fully unrolled serial recurrence (seq is short and static): only the
        # hidden-state matmul + gate math is on the critical path.
        for t in range(seq_len):
            gates = gates_in[t * B:(t + 1) * B, :] + jnp.dot(
                h, w_hh, preferred_element_type=jnp.float32)        # (Bp, 4P)
            # each slice below is an aligned block of full 128-lane groups
            i_g = jax.nn.sigmoid(gates[:, 0 * P:1 * P])
            f_g = jax.nn.sigmoid(gates[:, 1 * P:2 * P])
            g_g = jnp.tanh(gates[:, 2 * P:3 * P])
            o_g = jax.nn.sigmoid(gates[:, 3 * P:4 * P])
            c = f_g * c + i_g * g_g
            h = o_g * jnp.tanh(c)
            if not last_layer:
                io_ref[t * B:(t + 1) * B, :] = h  # next layer's input
        hn_ref[layer] = h
        cn_ref[layer] = c
        # nn.LSTM inter-layer dropout is only active in train mode; eval => no-op.

    # fc + sigmoid on last timestep of last layer (== view(batch,-1)[:, -1])
    logits = jnp.dot(h, fcw_ref[...],
                     preferred_element_type=jnp.float32) + fcb_ref[...]
    sig_ref[...] = jax.nn.sigmoid(logits)


def sentiment_rnn_forward(x_tokens, hidden, params):
    """Pallas-backed forward pass mirroring SentimentRNN.forward.

    x_tokens : (batch, seq) int32 token ids
    hidden   : (h0, c0), each (n_layers, batch, hidden_dim) float32
    returns  : (sig_out (batch,), (h_n, c_n))
    """
    emb_table, wih_T, whh_T, b_sum, fcw_T, fcb = params
    h0, c0 = hidden
    n_layers, batch, H = h0.shape
    seq = x_tokens.shape[1]
    E = emb_table.shape[1]
    output_size = fcw_T.shape[1]

    # padded sizes: lanes -> 128 per gate, sublanes -> 8, fc output -> 128 lanes
    P = _round_up(max(E, H), 128)
    Bp = _round_up(batch, 8)
    Op = _round_up(output_size, 128)
    f32 = jnp.float32

    # ---- glue: embedding gather, time-major transpose, zero-pad, flatten ----
    embeds = emb_table[x_tokens]                         # (batch, seq, E)
    emb_sbh = jnp.transpose(embeds, (1, 0, 2))           # (seq, batch, E)
    emb_p = jnp.zeros((seq, Bp, P), f32).at[:, :batch, :E].set(emb_sbh.astype(f32))
    emb_flat = emb_p.reshape(seq * Bp, P)

    # ---- gate-block-aware zero padding: gate k occupies lanes [k*P, k*P+H) ----
    def pad_w(w):                                        # (L, in, 4H) -> (L, P, 4P)
        w4 = w.reshape(n_layers, w.shape[1], 4, H)
        out = jnp.zeros((n_layers, P, 4, P), f32)
        out = out.at[:, :w.shape[1], :, :H].set(w4.astype(f32))
        return out.reshape(n_layers, P, 4 * P)

    wih_p = pad_w(wih_T)
    whh_p = pad_w(whh_T)
    b4 = b_sum.reshape(n_layers, 1, 4, H)
    b_p = (jnp.zeros((n_layers, 1, 4, P), f32)
           .at[:, :, :, :H].set(b4.astype(f32))
           .reshape(n_layers, 1, 4 * P))

    h0_p = jnp.zeros((n_layers, Bp, P), f32).at[:, :batch, :H].set(h0.astype(f32))
    c0_p = jnp.zeros((n_layers, Bp, P), f32).at[:, :batch, :H].set(c0.astype(f32))

    fcw_p = jnp.zeros((P, Op), f32).at[:H, :output_size].set(fcw_T.astype(f32))
    fcb_p = jnp.zeros((1, Op), f32).at[:, :output_size].set(fcb.astype(f32))

    kernel = functools.partial(_sentiment_lstm_kernel,
                               n_layers=n_layers, seq_len=seq, batch_p=Bp, hp=P)

    vmem = pl.BlockSpec(memory_space=pltpu.MemorySpace.VMEM)
    sig_p, hn_p, cn_p = pl.pallas_call(
        kernel,
        out_shape=(
            jax.ShapeDtypeStruct((Bp, Op), f32),
            jax.ShapeDtypeStruct((n_layers, Bp, P), f32),
            jax.ShapeDtypeStruct((n_layers, Bp, P), f32),
        ),
        in_specs=[vmem] * 8,
        out_specs=(vmem, vmem, vmem),
        scratch_shapes=[pltpu.VMEM((seq * Bp, P), f32)],
    )(emb_flat, wih_p, whh_p, b_p, h0_p, c0_p, fcw_p, fcb_p)

    # slice padding away
    sig = sig_p[:batch, :output_size]
    h_n = hn_p[:, :batch, :H]
    c_n = cn_p[:, :batch, :H]
    sig_out = sig[:, -1]                                  # == view(batch,-1)[:, -1]
    return sig_out, (h_n, c_n)


def reference_forward(x_tokens, hidden, params):
    """Pure-JAX reference (same math) for correctness checking."""
    emb_table, wih_T, whh_T, b_sum, fcw_T, fcb = params
    h0, c0 = hidden
    n_layers, batch, H = h0.shape
    x = jnp.transpose(emb_table[x_tokens], (1, 0, 2))     # (seq, batch, E)
    h_n, c_n = [], []
    for layer in range(n_layers):
        h = h0[layer]
        c = c0[layer]
        outs = []
        for t in range(x.shape[0]):
            gates = x[t] @ wih_T[layer] + h @ whh_T[layer] + b_sum[layer]
            i_g = jax.nn.sigmoid(gates[:, 0 * H:1 * H])
            f_g = jax.nn.sigmoid(gates[:, 1 * H:2 * H])
            g_g = jnp.tanh(gates[:, 2 * H:3 * H])
            o_g = jax.nn.sigmoid(gates[:, 3 * H:4 * H])
            c = f_g * c + i_g * g_g
            h = o_g * jnp.tanh(c)
            outs.append(h)
        x = jnp.stack(outs, axis=0)
        h_n.append(h)
        c_n.append(c)
    logits = x[-1] @ fcw_T + fcb
    sig = jax.nn.sigmoid(logits)
    return sig[:, -1], (jnp.stack(h_n), jnp.stack(c_n))


if __name__ == "__main__":
    # small shapes consistent with the module's forward
    vocab_size = 50
    output_size = 1
    embedding_dim = 32
    hidden_dim = 32
    n_layers = 2
    batch = 4
    seq = 8

    key = jax.random.PRNGKey(0)
    keys = jax.random.split(key, 10)
    scale = 1.0 / jnp.sqrt(hidden_dim)

    # deterministic synthetic parameters (shapes follow nn.Embedding / nn.LSTM / nn.Linear)
    emb_table = jax.random.normal(keys[0], (vocab_size, embedding_dim), jnp.float32)
    # nn.LSTM weights: weight_ih_l{k}: (4H, in), weight_hh_l{k}: (4H, H) -> pass transposed
    wih_T = scale * jax.random.normal(keys[1], (n_layers, embedding_dim, 4 * hidden_dim), jnp.float32)
    whh_T = scale * jax.random.normal(keys[2], (n_layers, hidden_dim, 4 * hidden_dim), jnp.float32)
    b_ih = scale * jax.random.normal(keys[3], (n_layers, 1, 4 * hidden_dim), jnp.float32)
    b_hh = scale * jax.random.normal(keys[4], (n_layers, 1, 4 * hidden_dim), jnp.float32)
    b_sum = b_ih + b_hh
    # nn.Linear(hidden_dim, output_size): weight (out, H) -> pass transposed
    fcw_T = scale * jax.random.normal(keys[5], (hidden_dim, output_size), jnp.float32)
    fcb = scale * jax.random.normal(keys[6], (1, output_size), jnp.float32)
    params = (emb_table, wih_T, whh_T, b_sum, fcw_T, fcb)

    # inputs: token ids + initial hidden state (as in init_hidden: randn)
    x_tokens = jax.random.randint(keys[7], (batch, seq), 0, vocab_size, jnp.int32)
    h0 = jax.random.normal(keys[8], (n_layers, batch, hidden_dim), jnp.float32)
    c0 = jax.random.normal(keys[9], (n_layers, batch, hidden_dim), jnp.float32)

    sig_out, (h_n, c_n) = sentiment_rnn_forward(x_tokens, (h0, c0), params)
    jax.block_until_ready((sig_out, h_n, c_n))

    # correctness check against the pure-JAX reference
    ref_sig, (ref_h, ref_c) = reference_forward(x_tokens, (h0, c0), params)
    assert sig_out.shape == (batch,)
    assert h_n.shape == (n_layers, batch, hidden_dim)
    assert c_n.shape == (n_layers, batch, hidden_dim)
    assert float(jnp.max(jnp.abs(sig_out - ref_sig))) < 1e-2
    assert float(jnp.max(jnp.abs(h_n - ref_h))) < 1e-2
    assert float(jnp.max(jnp.abs(c_n - ref_c))) < 1e-2

    print("KERNEL_OK")
</pallas_src>

<mosaic_0001>
module attributes {stable_mosaic.version = 11 : i64} {
  func.func @_sentiment_lstm_kernel(%arg0: memref<64x128xf32, #tpu.memory_space<vmem>>, %arg1: memref<2x128x512xf32, #tpu.memory_space<vmem>>, %arg2: memref<2x128x512xf32, #tpu.memory_space<vmem>>, %arg3: memref<2x1x512xf32, #tpu.memory_space<vmem>>, %arg4: memref<2x8x128xf32, #tpu.memory_space<vmem>>, %arg5: memref<2x8x128xf32, #tpu.memory_space<vmem>>, %arg6: memref<128x128xf32, #tpu.memory_space<vmem>>, %arg7: memref<1x128xf32, #tpu.memory_space<vmem>>, %arg8: memref<8x128xf32, #tpu.memory_space<vmem>>, %arg9: memref<2x8x128xf32, #tpu.memory_space<vmem>>, %arg10: memref<2x8x128xf32, #tpu.memory_space<vmem>>, %arg11: memref<64x128xf32, #tpu.memory_space<vmem>>) attributes {dimension_semantics = [], scalar_prefetch = 0 : i64, scratch_operands = 1 : i64, tpu.core_type = #tpu.core_type<tc>} {
    %c0 = arith.constant 0 : index
    %c0_0 = arith.constant 0 : index
    %c0_1 = arith.constant 0 : index
    %0 = vector.load %arg1[%c0, %c0_0, %c0_1] : memref<2x128x512xf32, #tpu.memory_space<vmem>>, vector<1x128x512xf32>
    %1 = vector.shape_cast %0 : vector<1x128x512xf32> to vector<128x512xf32>
    %c0_2 = arith.constant 0 : index
    %c0_3 = arith.constant 0 : index
    %c0_4 = arith.constant 0 : index
    %2 = vector.load %arg2[%c0_2, %c0_3, %c0_4] : memref<2x128x512xf32, #tpu.memory_space<vmem>>, vector<1x128x512xf32>
    %3 = vector.shape_cast %2 : vector<1x128x512xf32> to vector<128x512xf32>
    %c0_5 = arith.constant 0 : index
    %c0_6 = arith.constant 0 : index
    %c0_7 = arith.constant 0 : index
    %4 = vector.load %arg3[%c0_5, %c0_6, %c0_7] : memref<2x1x512xf32, #tpu.memory_space<vmem>>, vector<1x1x512xf32>
    %5 = vector.shape_cast %4 : vector<1x1x512xf32> to vector<1x512xf32>
    %c0_8 = arith.constant 0 : index
    %c0_9 = arith.constant 0 : index
    %6 = vector.load %arg0[%c0_8, %c0_9] : memref<64x128xf32, #tpu.memory_space<vmem>>, vector<64x128xf32>
    %cst = arith.constant dense<0.000000e+00> : vector<64x512xf32>
    %7 = tpu.matmul %6, %1, %cst {dimension_numbers = #tpu.dot_dimension_numbers<[1], [0], [0], [1], [0, 0, 1, 1], [], []>} : vector<64x128xf32>, vector<128x512xf32>, vector<64x512xf32> -> vector<64x512xf32>
    %8 = vector.broadcast %5 : vector<1x512xf32> to vector<64x512xf32>
    %9 = arith.addf %7, %8 : vector<64x512xf32>
    %c0_10 = arith.constant 0 : index
    %c0_11 = arith.constant 0 : index
    %c0_12 = arith.constant 0 : index
    %10 = vector.load %arg4[%c0_10, %c0_11, %c0_12] : memref<2x8x128xf32, #tpu.memory_space<vmem>>, vector<1x8x128xf32>
    %11 = vector.shape_cast %10 : vector<1x8x128xf32> to vector<8x128xf32>
    %c0_13 = arith.constant 0 : index
    %c0_14 = arith.constant 0 : index
    %c0_15 = arith.constant 0 : index
    %12 = vector.load %arg5[%c0_13, %c0_14, %c0_15] : memref<2x8x128xf32, #tpu.memory_space<vmem>>, vector<1x8x128xf32>
    %13 = vector.shape_cast %12 : vector<1x8x128xf32> to vector<8x128xf32>
    %14 = vector.extract_strided_slice %9 {offsets = [0, 0], sizes = [8, 512], strides = [1, 1]} : vector<64x512xf32> to vector<8x512xf32>
    %cst_16 = arith.constant dense<0.000000e+00> : vector<8x512xf32>
    %15 = tpu.matmul %11, %3, %cst_16 {dimension_numbers = #tpu.dot_dimension_numbers<[1], [0], [0], [1], [0, 0, 1, 1], [], []>} : vector<8x128xf32>, vector<128x512xf32>, vector<8x512xf32> -> vector<8x512xf32>
    %16 = arith.addf %14, %15 : vector<8x512xf32>
    %17 = vector.extract_strided_slice %16 {offsets = [0, 0], sizes = [8, 128], strides = [1, 1]} : vector<8x512xf32> to vector<8x128xf32>
    %18 = arith.negf %17 : vector<8x128xf32>
    %19 = math.exp %18 : vector<8x128xf32>
    %cst_17 = arith.constant 1.000000e+00 : f32
    %20 = vector.broadcast %cst_17 : f32 to vector<8x128xf32>
    %21 = arith.addf %20, %19 : vector<8x128xf32>
    %22 = arith.divf %20, %21 : vector<8x128xf32>
    %23 = vector.extract_strided_slice %16 {offsets = [0, 128], sizes = [8, 128], strides = [1, 1]} : vector<8x512xf32> to vector<8x128xf32>
    %24 = arith.negf %23 : vector<8x128xf32>
    %25 = math.exp %24 : vector<8x128xf32>
    %cst_18 = arith.constant 1.000000e+00 : f32
    %26 = vector.broadcast %cst_18 : f32 to vector<8x128xf32>
    %27 = arith.addf %26, %25 : vector<8x128xf32>
    %28 = arith.divf %26, %27 : vector<8x128xf32>
    %29 = vector.extract_strided_slice %16 {offsets = [0, 256], sizes = [8, 128], strides = [1, 1]} : vector<8x512xf32> to vector<8x128xf32>
    %30 = math.tanh %29 : vector<8x128xf32>
    %31 = vector.extract_strided_slice %16 {offsets = [0, 384], sizes = [8, 128], strides = [1, 1]} : vector<8x512xf32> to vector<8x128xf32>
    %32 = arith.negf %31 : vector<8x128xf32>
    %33 = math.exp %32 : vector<8x128xf32>
    %cst_19 = arith.constant 1.000000e+00 : f32
    %34 = vector.broadcast %cst_19 : f32 to vector<8x128xf32>
    %35 = arith.addf %34, %33 : vector<8x128xf32>
    %36 = arith.divf %34, %35 : vector<8x128xf32>
    %37 = arith.mulf %28, %13 : vector<8x128xf32>
    %38 = arith.mulf %22, %30 : vector<8x128xf32>
    %39 = arith.addf %37, %38 : vector<8x128xf32>
    %40 = math.tanh %39 : vector<8x128xf32>
    %41 = arith.mulf %36, %40 : vector<8x128xf32>
    %c0_20 = arith.constant 0 : index
    %c0_21 = arith.constant 0 : index
    %42 = vector.load %arg11[%c0_20, %c0_21] : memref<64x128xf32, #tpu.memory_space<vmem>>, vector<8x128xf32>
    tpu.vector_store %arg11[%c0_20, %c0_21], %41 {strides = array<i32>} : memref<64x128xf32, #tpu.memory_space<vmem>>, vector<8x128xf32>,
    %43 = vector.extract_strided_slice %9 {offsets = [8, 0], sizes = [8, 512], strides = [1, 1]} : vector<64x512xf32> to vector<8x512xf32>
    %cst_22 = arith.constant dense<0.000000e+00> : vector<8x512xf32>
    %44 = tpu.matmul %41, %3, %cst_22 {dimension_numbers = #tpu.dot_dimension_numbers<[1], [0], [0], [1], [0, 0, 1, 1], [], []>} : vector<8x128xf32>, vector<128x512xf32>, vector<8x512xf32> -> vector<8x512xf32>
    %45 = arith.addf %43, %44 : vector<8x512xf32>
    %46 = vector.extract_strided_slice %45 {offsets = [0, 0], sizes = [8, 128], strides = [1, 1]} : vector<8x512xf32> to vector<8x128xf32>
    %47 = arith.negf %46 : vector<8x128xf32>
    %48 = math.exp %47 : vector<8x128xf32>
    %cst_23 = arith.constant 1.000000e+00 : f32
    %49 = vector.broadcast %cst_23 : f32 to vector<8x128xf32>
    %50 = arith.addf %49, %48 : vector<8x128xf32>
    %51 = arith.divf %49, %50 : vector<8x128xf32>
    %52 = vector.extract_strided_slice %45 {offsets = [0, 128], sizes = [8, 128], strides = [1, 1]} : vector<8x512xf32> to vector<8x128xf32>
    %53 = arith.negf %52 : vector<8x128xf32>
    %54 = math.exp %53 : vector<8x128xf32>
    %cst_24 = arith.constant 1.000000e+00 : f32
    %55 = vector.broadcast %cst_24 : f32 to vector<8x128xf32>
    %56 = arith.addf %55, %54 : vector<8x128xf32>
    %57 = arith.divf %55, %56 : vector<8x128xf32>
    %58 = vector.extract_strided_slice %45 {offsets = [0, 256], sizes = [8, 128], strides = [1, 1]} : vector<8x512xf32> to vector<8x128xf32>
    %59 = math.tanh %58 : vector<8x128xf32>
    %60 = vector.extract_strided_slice %45 {offsets = [0, 384], sizes = [8, 128], strides = [1, 1]} : vector<8x512xf32> to vector<8x128xf32>
    %61 = arith.negf %60 : vector<8x128xf32>
    %62 = math.exp %61 : vector<8x128xf32>
    %cst_25 = arith.constant 1.000000e+00 : f32
    %63 = vector.broadcast %cst_25 : f32 to vector<8x128xf32>
    %64 = arith.addf %63, %62 : vector<8x128xf32>
    %65 = arith.divf %63, %64 : vector<8x128xf32>
    %66 = arith.mulf %57, %39 : vector<8x128xf32>
    %67 = arith.mulf %51, %59 : vector<8x128xf32>
    %68 = arith.addf %66, %67 : vector<8x128xf32>
    %69 = math.tanh %68 : vector<8x128xf32>
    %70 = arith.mulf %65, %69 : vector<8x128xf32>
    %c8 = arith.constant 8 : index
    %c0_26 = arith.constant 0 : index
    %71 = vector.load %arg11[%c8, %c0_26] : memref<64x128xf32, #tpu.memory_space<vmem>>, vector<8x128xf32>
    tpu.vector_store %arg11[%c8, %c0_26], %70 {strides = array<i32>} : memref<64x128xf32, #tpu.memory_space<vmem>>, vector<8x128xf32>,
    %72 = vector.extract_strided_slice %9 {offsets = [16, 0], sizes = [8, 512], strides = [1, 1]} : vector<64x512xf32> to vector<8x512xf32>
    %cst_27 = arith.constant dense<0.000000e+00> : vector<8x512xf32>
    %73 = tpu.matmul %70, %3, %cst_27 {dimension_numbers = #tpu.dot_dimension_numbers<[1], [0], [0], [1], [0, 0, 1, 1], [], []>} : vector<8x128xf32>, vector<128x512xf32>, vector<8x512xf32> -> vector<8x512xf32>
    %74 = arith.addf %72, %73 : vector<8x512xf32>
    %75 = vector.extract_strided_slice %74 {offsets = [0, 0], sizes = [8, 128], strides = [1, 1]} : vector<8x512xf32> to vector<8x128xf32>
    %76 = arith.negf %75 : vector<8x128xf32>
    %77 = math.exp %76 : vector<8x128xf32>
    %cst_28 = arith.constant 1.000000e+00 : f32
    %78 = vector.broadcast %cst_28 : f32 to vector<8x128xf32>
    %79 = arith.addf %78, %77 : vector<8x128xf32>
    %80 = arith.divf %78, %79 : vector<8x128xf32>
    %81 = vector.extract_strided_slice %74 {offsets = [0, 128], sizes = [8, 128], strides = [1, 1]} : vector<8x512xf32> to vector<8x128xf32>
    %82 = arith.negf %81 : vector<8x128xf32>
    %83 = math.exp %82 : vector<8x128xf32>
    %cst_29 = arith.constant 1.000000e+00 : f32
    %84 = vector.broadcast %cst_29 : f32 to vector<8x128xf32>
    %85 = arith.addf %84, %83 : vector<8x128xf32>
    %86 = arith.divf %84, %85 : vector<8x128xf32>
    %87 = vector.extract_strided_slice %74 {offsets = [0, 256], sizes = [8, 128], strides = [1, 1]} : vector<8x512xf32> to vector<8x128xf32>
    %88 = math.tanh %87 : vector<8x128xf32>
    %89 = vector.extract_strided_slice %74 {offsets = [0, 384], sizes = [8, 128], strides = [1, 1]} : vector<8x512xf32> to vector<8x128xf32>
    %90 = arith.negf %89 : vector<8x128xf32>
    %91 = math.exp %90 : vector<8x128xf32>
    %cst_30 = arith.constant 1.000000e+00 : f32
    %92 = vector.broadcast %cst_30 : f32 to vector<8x128xf32>
    %93 = arith.addf %92, %91 : vector<8x128xf32>
    %94 = arith.divf %92, %93 : vector<8x128xf32>
    %95 = arith.mulf %86, %68 : vector<8x128xf32>
    %96 = arith.mulf %80, %88 : vector<8x128xf32>
    %97 = arith.addf %95, %96 : vector<8x128xf32>
    %98 = math.tanh %97 : vector<8x128xf32>
    %99 = arith.mulf %94, %98 : vector<8x128xf32>
    %c16 = arith.constant 16 : index
    %c0_31 = arith.constant 0 : index
    %100 = vector.load %arg11[%c16, %c0_31] : memref<64x128xf32, #tpu.memory_space<vmem>>, vector<8x128xf32>
    tpu.vector_store %arg11[%c16, %c0_31], %99 {strides = array<i32>} : memref<64x128xf32, #tpu.memory_space<vmem>>, vector<8x128xf32>,
    %101 = vector.extract_strided_slice %9 {offsets = [24, 0], sizes = [8, 512], strides = [1, 1]} : vector<64x512xf32> to vector<8x512xf32>
    %cst_32 = arith.constant dense<0.000000e+00> : vector<8x512xf32>
    %102 = tpu.matmul %99, %3, %cst_32 {dimension_numbers = #tpu.dot_dimension_numbers<[1], [0], [0], [1], [0, 0, 1, 1], [], []>} : vector<8x128xf32>, vector<128x512xf32>, vector<8x512xf32> -> vector<8x512xf32>
    %103 = arith.addf %101, %102 : vector<8x512xf32>
    %104 = vector.extract_strided_slice %103 {offsets = [0, 0], sizes = [8, 128], strides = [1, 1]} : vector<8x512xf32> to vector<8x128xf32>
    %105 = arith.negf %104 : vector<8x128xf32>
    %106 = math.exp %105 : vector<8x128xf32>
    %cst_33 = arith.constant 1.000000e+00 : f32
    %107 = vector.broadcast %cst_33 : f32 to vector<8x128xf32>
    %108 = arith.addf %107, %106 : vector<8x128xf32>
    %109 = arith.divf %107, %108 : vector<8x128xf32>
    %110 = vector.extract_strided_slice %103 {offsets = [0, 128], sizes = [8, 128], strides = [1, 1]} : vector<8x512xf32> to vector<8x128xf32>
    %111 = arith.negf %110 : vector<8x128xf32>
    %112 = math.exp %111 : vector<8x128xf32>
    %cst_34 = arith.constant 1.000000e+00 : f32
    %113 = vector.broadcast %cst_34 : f32 to vector<8x128xf32>
    %114 = arith.addf %113, %112 : vector<8x128xf32>
    %115 = arith.divf %113, %114 : vector<8x128xf32>
    %116 = vector.extract_strided_slice %103 {offsets = [0, 256], sizes = [8, 128], strides = [1, 1]} : vector<8x512xf32> to vector<8x128xf32>
    %117 = math.tanh %116 : vector<8x128xf32>
    %118 = vector.extract_strided_slice %103 {offsets = [0, 384], sizes = [8, 128], strides = [1, 1]} : vector<8x512xf32> to vector<8x128xf32>
    %119 = arith.negf %118 : vector<8x128xf32>
    %120 = math.exp %119 : vector<8x128xf32>
    %cst_35 = arith.constant 1.000000e+00 : f32
    %121 = vector.broadcast %cst_35 : f32 to vector<8x128xf32>
    %122 = arith.addf %121, %120 : vector<8x128xf32>
    %123 = arith.divf %121, %122 : vector<8x128xf32>
    %124 = arith.mulf %115, %97 : vector<8x128xf32>
    %125 = arith.mulf %109, %117 : vector<8x128xf32>
    %126 = arith.addf %124, %125 : vector<8x128xf32>
    %127 = math.tanh %126 : vector<8x128xf32>
    %128 = arith.mulf %123, %127 : vector<8x128xf32>
    %c24 = arith.constant 24 : index
    %c0_36 = arith.constant 0 : index
    %129 = vector.load %arg11[%c24, %c0_36] : memref<64x128xf32, #tpu.memory_space<vmem>>, vector<8x128xf32>
    tpu.vector_store %arg11[%c24, %c0_36], %128 {strides = array<i32>} : memref<64x128xf32, #tpu.memory_space<vmem>>, vector<8x128xf32>,
    %130 = vector.extract_strided_slice %9 {offsets = [32, 0], sizes = [8, 512], strides = [1, 1]} : vector<64x512xf32> to vector<8x512xf32>
    %cst_37 = arith.constant dense<0.000000e+00> : vector<8x512xf32>
    %131 = tpu.matmul %128, %3, %cst_37 {dimension_numbers = #tpu.dot_dimension_numbers<[1], [0], [0], [1], [0, 0, 1, 1], [], []>} : vector<8x128xf32>, vector<128x512xf32>, vector<8x512xf32> -> vector<8x512xf32>
    %132 = arith.addf %130, %131 : vector<8x512xf32>
    %133 = vector.extract_strided_slice %132 {offsets = [0, 0], sizes = [8, 128], strides = [1, 1]} : vector<8x512xf32> to vector<8x128xf32>
    %134 = arith.negf %133 : vector<8x128xf32>
    %135 = math.exp %134 : vector<8x128xf32>
    %cst_38 = arith.constant 1.000000e+00 : f32
    %136 = vector.broadcast %cst_38 : f32 to vector<8x128xf32>
    %137 = arith.addf %136, %135 : vector<8x128xf32>
    %138 = arith.divf %136, %137 : vector<8x128xf32>
    %139 = vector.extract_strided_slice %132 {offsets = [0, 128], sizes = [8, 128], strides = [1, 1]} : vector<8x512xf32> to vector<8x128xf32>
    %140 = arith.negf %139 : vector<8x128xf32>
    %141 = math.exp %140 : vector<8x128xf32>
    %cst_39 = arith.constant 1.000000e+00 : f32
    %142 = vector.broadcast %cst_39 : f32 to vector<8x128xf32>
    %143 = arith.addf %142, %141 : vector<8x128xf32>
    %144 = arith.divf %142, %143 : vector<8x128xf32>
    %145 = vector.extract_strided_slice %132 {offsets = [0, 256], sizes = [8, 128], strides = [1, 1]} : vector<8x512xf32> to vector<8x128xf32>
    %146 = math.tanh %145 : vector<8x128xf32>
    %147 = vector.extract_strided_slice %132 {offsets = [0, 384], sizes = [8, 128], strides = [1, 1]} : vector<8x512xf32> to vector<8x128xf32>
    %148 = arith.negf %147 : vector<8x128xf32>
    %149 = math.exp %148 : vector<8x128xf32>
    %cst_40 = arith.constant 1.000000e+00 : f32
    %150 = vector.broadcast %cst_40 : f32 to vector<8x128xf32>
    %151 = arith.addf %150, %149 : vector<8x128xf32>
    %152 = arith.divf %150, %151 : vector<8x128xf32>
    %153 = arith.mulf %144, %126 : vector<8x128xf32>
    %154 = arith.mulf %138, %146 : vector<8x128xf32>
    %155 = arith.addf %153, %154 : vector<8x128xf32>
    %156 = math.tanh %155 : vector<8x128xf32>
    %157 = arith.mulf %152, %156 : vector<8x128xf32>
    %c32 = arith.constant 32 : index
    %c0_41 = arith.constant 0 : index
    %158 = vector.load %arg11[%c32, %c0_41] : memref<64x128xf32, #tpu.memory_space<vmem>>, vector<8x128xf32>
    tpu.vector_store %arg11[%c32, %c0_41], %157 {strides = array<i32>} : memref<64x128xf32, #tpu.memory_space<vmem>>, vector<8x128xf32>,
    %159 = vector.extract_strided_slice %9 {offsets = [40, 0], sizes = [8, 512], strides = [1, 1]} : vector<64x512xf32> to vector<8x512xf32>
    %cst_42 = arith.constant dense<0.000000e+00> : vector<8x512xf32>
    %160 = tpu.matmul %157, %3, %cst_42 {dimension_numbers = #tpu.dot_dimension_numbers<[1], [0], [0], [1], [0, 0, 1, 1], [], []>} : vector<8x128xf32>, vector<128x512xf32>, vector<8x512xf32> -> vector<8x512xf32>
    %161 = arith.addf %159, %160 : vector<8x512xf32>
    %162 = vector.extract_strided_slice %161 {offsets = [0, 0], sizes = [8, 128], strides = [1, 1]} : vector<8x512xf32> to vector<8x128xf32>
    %163 = arith.negf %162 : vector<8x128xf32>
    %164 = math.exp %163 : vector<8x128xf32>
    %cst_43 = arith.constant 1.000000e+00 : f32
    %165 = vector.broadcast %cst_43 : f32 to vector<8x128xf32>
    %166 = arith.addf %165, %164 : vector<8x128xf32>
    %167 = arith.divf %165, %166 : vector<8x128xf32>
    %168 = vector.extract_strided_slice %161 {offsets = [0, 128], sizes = [8, 128], strides = [1, 1]} : vector<8x512xf32> to vector<8x128xf32>
    %169 = arith.negf %168 : vector<8x128xf32>
    %170 = math.exp %169 : vector<8x128xf32>
    %cst_44 = arith.constant 1.000000e+00 : f32
    %171 = vector.broadcast %cst_44 : f32 to vector<8x128xf32>
    %172 = arith.addf %171, %170 : vector<8x128xf32>
    %173 = arith.divf %171, %172 : vector<8x128xf32>
    %174 = vector.extract_strided_slice %161 {offsets = [0, 256], sizes = [8, 128], strides = [1, 1]} : vector<8x512xf32> to vector<8x128xf32>
    %175 = math.tanh %174 : vector<8x128xf32>
    %176 = vector.extract_strided_slice %161 {offsets = [0, 384], sizes = [8, 128], strides = [1, 1]} : vector<8x512xf32> to vector<8x128xf32>
    %177 = arith.negf %176 : vector<8x128xf32>
    %178 = math.exp %177 : vector<8x128xf32>
    %cst_45 = arith.constant 1.000000e+00 : f32
    %179 = vector.broadcast %cst_45 : f32 to vector<8x128xf32>
    %180 = arith.addf %179, %178 : vector<8x128xf32>
    %181 = arith.divf %179, %180 : vector<8x128xf32>
    %182 = arith.mulf %173, %155 : vector<8x128xf32>
    %183 = arith.mulf %167, %175 : vector<8x128xf32>
    %184 = arith.addf %182, %183 : vector<8x128xf32>
    %185 = math.tanh %184 : vector<8x128xf32>
    %186 = arith.mulf %181, %185 : vector<8x128xf32>
    %c40 = arith.constant 40 : index
    %c0_46 = arith.constant 0 : index
    %187 = vector.load %arg11[%c40, %c0_46] : memref<64x128xf32, #tpu.memory_space<vmem>>, vector<8x128xf32>
    tpu.vector_store %arg11[%c40, %c0_46], %186 {strides = array<i32>} : memref<64x128xf32, #tpu.memory_space<vmem>>, vector<8x128xf32>,
    %188 = vector.extract_strided_slice %9 {offsets = [48, 0], sizes = [8, 512], strides = [1, 1]} : vector<64x512xf32> to vector<8x512xf32>
    %cst_47 = arith.constant dense<0.000000e+00> : vector<8x512xf32>
    %189 = tpu.matmul %186, %3, %cst_47 {dimension_numbers = #tpu.dot_dimension_numbers<[1], [0], [0], [1], [0, 0, 1, 1], [], []>} : vector<8x128xf32>, vector<128x512xf32>, vector<8x512xf32> -> vector<8x512xf32>
    %190 = arith.addf %188, %189 : vector<8x512xf32>
    %191 = vector.extract_strided_slice %190 {offsets = [0, 0], sizes = [8, 128], strides = [1, 1]} : vector<8x512xf32> to vector<8x128xf32>
    %192 = arith.negf %191 : vector<8x128xf32>
    %193 = math.exp %192 : vector<8x128xf32>
    %cst_48 = arith.constant 1.000000e+00 : f32
    %194 = vector.broadcast %cst_48 : f32 to vector<8x128xf32>
    %195 = arith.addf %194, %193 : vector<8x128xf32>
    %196 = arith.divf %194, %195 : vector<8x128xf32>
    %197 = vector.extract_strided_slice %190 {offsets = [0, 128], sizes = [8, 128], strides = [1, 1]} : vector<8x512xf32> to vector<8x128xf32>
    %198 = arith.negf %197 : vector<8x128xf32>
    %199 = math.exp %198 : vector<8x128xf32>
    %cst_49 = arith.constant 1.000000e+00 : f32
    %200 = vector.broadcast %cst_49 : f32 to vector<8x128xf32>
    %201 = arith.addf %200, %199 : vector<8x128xf32>
    %202 = arith.divf %200, %201 : vector<8x128xf32>
    %203 = vector.extract_strided_slice %190 {offsets = [0, 256], sizes = [8, 128], strides = [1, 1]} : vector<8x512xf32> to vector<8x128xf32>
    %204 = math.tanh %203 : vector<8x128xf32>
    %205 = vector.extract_strided_slice %190 {offsets = [0, 384], sizes = [8, 128], strides = [1, 1]} : vector<8x512xf32> to vector<8x128xf32>
    %206 = arith.negf %205 : vector<8x128xf32>
    %207 = math.exp %206 : vector<8x128xf32>
    %cst_50 = arith.constant 1.000000e+00 : f32
    %208 = vector.broadcast %cst_50 : f32 to vector<8x128xf32>
    %209 = arith.addf %208, %207 : vector<8x128xf32>
    %210 = arith.divf %208, %209 : vector<8x128xf32>
    %211 = arith.mulf %202, %184 : vector<8x128xf32>
    %212 = arith.mulf %196, %204 : vector<8x128xf32>
    %213 = arith.addf %211, %212 : vector<8x128xf32>
    %214 = math.tanh %213 : vector<8x128xf32>
    %215 = arith.mulf %210, %214 : vector<8x128xf32>
    %c48 = arith.constant 48 : index
    %c0_51 = arith.constant 0 : index
    %216 = vector.load %arg11[%c48, %c0_51] : memref<64x128xf32, #tpu.memory_space<vmem>>, vector<8x128xf32>
    tpu.vector_store %arg11[%c48, %c0_51], %215 {strides = array<i32>} : memref<64x128xf32, #tpu.memory_space<vmem>>, vector<8x128xf32>,
    %217 = vector.extract_strided_slice %9 {offsets = [56, 0], sizes = [8, 512], strides = [1, 1]} : vector<64x512xf32> to vector<8x512xf32>
    %cst_52 = arith.constant dense<0.000000e+00> : vector<8x512xf32>
    %218 = tpu.matmul %215, %3, %cst_52 {dimension_numbers = #tpu.dot_dimension_numbers<[1], [0], [0], [1], [0, 0, 1, 1], [], []>} : vector<8x128xf32>, vector<128x512xf32>, vector<8x512xf32> -> vector<8x512xf32>
    %219 = arith.addf %217, %218 : vector<8x512xf32>
    %220 = vector.extract_strided_slice %219 {offsets = [0, 0], sizes = [8, 128], strides = [1, 1]} : vector<8x512xf32> to vector<8x128xf32>
    %221 = arith.negf %220 : vector<8x128xf32>
    %222 = math.exp %221 : vector<8x128xf32>
    %cst_53 = arith.constant 1.000000e+00 : f32
    %223 = vector.broadcast %cst_53 : f32 to vector<8x128xf32>
    %224 = arith.addf %223, %222 : vector<8x128xf32>
    %225 = arith.divf %223, %224 : vector<8x128xf32>
    %226 = vector.extract_strided_slice %219 {offsets = [0, 128], sizes = [8, 128], strides = [1, 1]} : vector<8x512xf32> to vector<8x128xf32>
    %227 = arith.negf %226 : vector<8x128xf32>
    %228 = math.exp %227 : vector<8x128xf32>
    %cst_54 = arith.constant 1.000000e+00 : f32
    %229 = vector.broadcast %cst_54 : f32 to vector<8x128xf32>
    %230 = arith.addf %229, %228 : vector<8x128xf32>
    %231 = arith.divf %229, %230 : vector<8x128xf32>
    %232 = vector.extract_strided_slice %219 {offsets = [0, 256], sizes = [8, 128], strides = [1, 1]} : vector<8x512xf32> to vector<8x128xf32>
    %233 = math.tanh %232 : vector<8x128xf32>
    %234 = vector.extract_strided_slice %219 {offsets = [0, 384], sizes = [8, 128], strides = [1, 1]} : vector<8x512xf32> to vector<8x128xf32>
    %235 = arith.negf %234 : vector<8x128xf32>
    %236 = math.exp %235 : vector<8x128xf32>
    %cst_55 = arith.constant 1.000000e+00 : f32
    %237 = vector.broadcast %cst_55 : f32 to vector<8x128xf32>
    %238 = arith.addf %237, %236 : vector<8x128xf32>
    %239 = arith.divf %237, %238 : vector<8x128xf32>
    %240 = arith.mulf %231, %213 : vector<8x128xf32>
    %241 = arith.mulf %225, %233 : vector<8x128xf32>
    %242 = arith.addf %240, %241 : vector<8x128xf32>
    %243 = math.tanh %242 : vector<8x128xf32>
    %244 = arith.mulf %239, %243 : vector<8x128xf32>
    %c56 = arith.constant 56 : index
    %c0_56 = arith.constant 0 : index
    %245 = vector.load %arg11[%c56, %c0_56] : memref<64x128xf32, #tpu.memory_space<vmem>>, vector<8x128xf32>
    tpu.vector_store %arg11[%c56, %c0_56], %244 {strides = array<i32>} : memref<64x128xf32, #tpu.memory_space<vmem>>, vector<8x128xf32>,
    %c0_57 = arith.constant 0 : index
    %c0_58 = arith.constant 0 : index
    %c0_59 = arith.constant 0 : index
    %246 = vector.load %arg9[%c0_57, %c0_58, %c0_59] : memref<2x8x128xf32, #tpu.memory_space<vmem>>, vector<1x8x128xf32>
    %247 = vector.shape_cast %246 : vector<1x8x128xf32> to vector<8x128xf32>
    %248 = vector.shape_cast %244 : vector<8x128xf32> to vector<1x8x128xf32>
    tpu.vector_store %arg9[%c0_57, %c0_58, %c0_59], %248 {strides = array<i32>} : memref<2x8x128xf32, #tpu.memory_space<vmem>>, vector<1x8x128xf32>,
    %c0_60 = arith.constant 0 : index
    %c0_61 = arith.constant 0 : index
    %c0_62 = arith.constant 0 : index
    %249 = vector.load %arg10[%c0_60, %c0_61, %c0_62] : memref<2x8x128xf32, #tpu.memory_space<vmem>>, vector<1x8x128xf32>
    %250 = vector.shape_cast %249 : vector<1x8x128xf32> to vector<8x128xf32>
    %251 = vector.shape_cast %242 : vector<8x128xf32> to vector<1x8x128xf32>
    tpu.vector_store %arg10[%c0_60, %c0_61, %c0_62], %251 {strides = array<i32>} : memref<2x8x128xf32, #tpu.memory_space<vmem>>, vector<1x8x128xf32>,
    %c1 = arith.constant 1 : index
    %c0_63 = arith.constant 0 : index
    %c0_64 = arith.constant 0 : index
    %252 = vector.load %arg1[%c1, %c0_63, %c0_64] : memref<2x128x512xf32, #tpu.memory_space<vmem>>, vector<1x128x512xf32>
    %253 = vector.shape_cast %252 : vector<1x128x512xf32> to vector<128x512xf32>
    %c1_65 = arith.constant 1 : index
    %c0_66 = arith.constant 0 : index
    %c0_67 = arith.constant 0 : index
    %254 = vector.load %arg2[%c1_65, %c0_66, %c0_67] : memref<2x128x512xf32, #tpu.memory_space<vmem>>, vector<1x128x512xf32>
    %255 = vector.shape_cast %254 : vector<1x128x512xf32> to vector<128x512xf32>
    %c1_68 = arith.constant 1 : index
    %c0_69 = arith.constant 0 : index
    %c0_70 = arith.constant 0 : index
    %256 = vector.load %arg3[%c1_68, %c0_69, %c0_70] : memref<2x1x512xf32, #tpu.memory_space<vmem>>, vector<1x1x512xf32>
    %257 = vector.shape_cast %256 : vector<1x1x512xf32> to vector<1x512xf32>
    %c0_71 = arith.constant 0 : index
    %c0_72 = arith.constant 0 : index
    %258 = vector.load %arg11[%c0_71, %c0_72] : memref<64x128xf32, #tpu.memory_space<vmem>>, vector<64x128xf32>
    %cst_73 = arith.constant dense<0.000000e+00> : vector<64x512xf32>
    %259 = tpu.matmul %258, %253, %cst_73 {dimension_numbers = #tpu.dot_dimension_numbers<[1], [0], [0], [1], [0, 0, 1, 1], [], []>} : vector<64x128xf32>, vector<128x512xf32>, vector<64x512xf32> -> vector<64x512xf32>
    %260 = vector.broadcast %257 : vector<1x512xf32> to vector<64x512xf32>
    %261 = arith.addf %259, %260 : vector<64x512xf32>
    %c1_74 = arith.constant 1 : index
    %c0_75 = arith.constant 0 : index
    %c0_76 = arith.constant 0 : index
    %262 = vector.load %arg4[%c1_74, %c0_75, %c0_76] : memref<2x8x128xf32, #tpu.memory_space<vmem>>, vector<1x8x128xf32>
    %263 = vector.shape_cast %262 : vector<1x8x128xf32> to vector<8x128xf32>
    %c1_77 = arith.constant 1 : index
    %c0_78 = arith.constant 0 : index
    %c0_79 = arith.constant 0 : index
    %264 = vector.load %arg5[%c1_77, %c0_78, %c0_79] : memref<2x8x128xf32, #tpu.memory_space<vmem>>, vector<1x8x128xf32>
    %265 = vector.shape_cast %264 : vector<1x8x128xf32> to vector<8x128xf32>
    %266 = vector.extract_strided_slice %261 {offsets = [0, 0], sizes = [8, 512], strides = [1, 1]} : vector<64x512xf32> to vector<8x512xf32>
    %cst_80 = arith.constant dense<0.000000e+00> : vector<8x512xf32>
    %267 = tpu.matmul %263, %255, %cst_80 {dimension_numbers = #tpu.dot_dimension_numbers<[1], [0], [0], [1], [0, 0, 1, 1], [], []>} : vector<8x128xf32>, vector<128x512xf32>, vector<8x512xf32> -> vector<8x512xf32>
    %268 = arith.addf %266, %267 : vector<8x512xf32>
    %269 = vector.extract_strided_slice %268 {offsets = [0, 0], sizes = [8, 128], strides = [1, 1]} : vector<8x512xf32> to vector<8x128xf32>
    %270 = arith.negf %269 : vector<8x128xf32>
    %271 = math.exp %270 : vector<8x128xf32>
    %cst_81 = arith.constant 1.000000e+00 : f32
    %272 = vector.broadcast %cst_81 : f32 to vector<8x128xf32>
    %273 = arith.addf %272, %271 : vector<8x128xf32>
    %274 = arith.divf %272, %273 : vector<8x128xf32>
    %275 = vector.extract_strided_slice %268 {offsets = [0, 128], sizes = [8, 128], strides = [1, 1]} : vector<8x512xf32> to vector<8x128xf32>
    %276 = arith.negf %275 : vector<8x128xf32>
    %277 = math.exp %276 : vector<8x128xf32>
    %cst_82 = arith.constant 1.000000e+00 : f32
    %278 = vector.broadcast %cst_82 : f32 to vector<8x128xf32>
    %279 = arith.addf %278, %277 : vector<8x128xf32>
    %280 = arith.divf %278, %279 : vector<8x128xf32>
    %281 = vector.extract_strided_slice %268 {offsets = [0, 256], sizes = [8, 128], strides = [1, 1]} : vector<8x512xf32> to vector<8x128xf32>
    %282 = math.tanh %281 : vector<8x128xf32>
    %283 = vector.extract_strided_slice %268 {offsets = [0, 384], sizes = [8, 128], strides = [1, 1]} : vector<8x512xf32> to vector<8x128xf32>
    %284 = arith.negf %283 : vector<8x128xf32>
    %285 = math.exp %284 : vector<8x128xf32>
    %cst_83 = arith.constant 1.000000e+00 : f32
    %286 = vector.broadcast %cst_83 : f32 to vector<8x128xf32>
    %287 = arith.addf %286, %285 : vector<8x128xf32>
    %288 = arith.divf %286, %287 : vector<8x128xf32>
    %289 = arith.mulf %280, %265 : vector<8x128xf32>
    %290 = arith.mulf %274, %282 : vector<8x128xf32>
    %291 = arith.addf %289, %290 : vector<8x128xf32>
    %292 = math.tanh %291 : vector<8x128xf32>
    %293 = arith.mulf %288, %292 : vector<8x128xf32>
    %294 = vector.extract_strided_slice %261 {offsets = [8, 0], sizes = [8, 512], strides = [1, 1]} : vector<64x512xf32> to vector<8x512xf32>
    %cst_84 = arith.constant dense<0.000000e+00> : vector<8x512xf32>
    %295 = tpu.matmul %293, %255, %cst_84 {dimension_numbers = #tpu.dot_dimension_numbers<[1], [0], [0], [1], [0, 0, 1, 1], [], []>} : vector<8x128xf32>, vector<128x512xf32>, vector<8x512xf32> -> vector<8x512xf32>
    %296 = arith.addf %294, %295 : vector<8x512xf32>
    %297 = vector.extract_strided_slice %296 {offsets = [0, 0], sizes = [8, 128], strides = [1, 1]} : vector<8x512xf32> to vector<8x128xf32>
    %298 = arith.negf %297 : vector<8x128xf32>
    %299 = math.exp %298 : vector<8x128xf32>
    %cst_85 = arith.constant 1.000000e+00 : f32
    %300 = vector.broadcast %cst_85 : f32 to vector<8x128xf32>
    %301 = arith.addf %300, %299 : vector<8x128xf32>
    %302 = arith.divf %300, %301 : vector<8x128xf32>
    %303 = vector.extract_strided_slice %296 {offsets = [0, 128], sizes = [8, 128], strides = [1, 1]} : vector<8x512xf32> to vector<8x128xf32>
    %304 = arith.negf %303 : vector<8x128xf32>
    %305 = math.exp %304 : vector<8x128xf32>
    %cst_86 = arith.constant 1.000000e+00 : f32
    %306 = vector.broadcast %cst_86 : f32 to vector<8x128xf32>
    %307 = arith.addf %306, %305 : vector<8x128xf32>
    %308 = arith.divf %306, %307 : vector<8x128xf32>
    %309 = vector.extract_strided_slice %296 {offsets = [0, 256], sizes = [8, 128], strides = [1, 1]} : vector<8x512xf32> to vector<8x128xf32>
    %310 = math.tanh %309 : vector<8x128xf32>
    %311 = vector.extract_strided_slice %296 {offsets = [0, 384], sizes = [8, 128], strides = [1, 1]} : vector<8x512xf32> to vector<8x128xf32>
    %312 = arith.negf %311 : vector<8x128xf32>
    %313 = math.exp %312 : vector<8x128xf32>
    %cst_87 = arith.constant 1.000000e+00 : f32
    %314 = vector.broadcast %cst_87 : f32 to vector<8x128xf32>
    %315 = arith.addf %314, %313 : vector<8x128xf32>
    %316 = arith.divf %314, %315 : vector<8x128xf32>
    %317 = arith.mulf %308, %291 : vector<8x128xf32>
    %318 = arith.mulf %302, %310 : vector<8x128xf32>
    %319 = arith.addf %317, %318 : vector<8x128xf32>
    %320 = math.tanh %319 : vector<8x128xf32>
    %321 = arith.mulf %316, %320 : vector<8x128xf32>
    %322 = vector.extract_strided_slice %261 {offsets = [16, 0], sizes = [8, 512], strides = [1, 1]} : vector<64x512xf32> to vector<8x512xf32>
    %cst_88 = arith.constant dense<0.000000e+00> : vector<8x512xf32>
    %323 = tpu.matmul %321, %255, %cst_88 {dimension_numbers = #tpu.dot_dimension_numbers<[1], [0], [0], [1], [0, 0, 1, 1], [], []>} : vector<8x128xf32>, vector<128x512xf32>, vector<8x512xf32> -> vector<8x512xf32>
    %324 = arith.addf %322, %323 : vector<8x512xf32>
    %325 = vector.extract_strided_slice %324 {offsets = [0, 0], sizes = [8, 128], strides = [1, 1]} : vector<8x512xf32> to vector<8x128xf32>
    %326 = arith.negf %325 : vector<8x128xf32>
    %327 = math.exp %326 : vector<8x128xf32>
    %cst_89 = arith.constant 1.000000e+00 : f32
    %328 = vector.broadcast %cst_89 : f32 to vector<8x128xf32>
    %329 = arith.addf %328, %327 : vector<8x128xf32>
    %330 = arith.divf %328, %329 : vector<8x128xf32>
    %331 = vector.extract_strided_slice %324 {offsets = [0, 128], sizes = [8, 128], strides = [1, 1]} : vector<8x512xf32> to vector<8x128xf32>
    %332 = arith.negf %331 : vector<8x128xf32>
    %333 = math.exp %332 : vector<8x128xf32>
    %cst_90 = arith.constant 1.000000e+00 : f32
    %334 = vector.broadcast %cst_90 : f32 to vector<8x128xf32>
    %335 = arith.addf %334, %333 : vector<8x128xf32>
    %336 = arith.divf %334, %335 : vector<8x128xf32>
    %337 = vector.extract_strided_slice %324 {offsets = [0, 256], sizes = [8, 128], strides = [1, 1]} : vector<8x512xf32> to vector<8x128xf32>
    %338 = math.tanh %337 : vector<8x128xf32>
    %339 = vector.extract_strided_slice %324 {offsets = [0, 384], sizes = [8, 128], strides = [1, 1]} : vector<8x512xf32> to vector<8x128xf32>
    %340 = arith.negf %339 : vector<8x128xf32>
    %341 = math.exp %340 : vector<8x128xf32>
    %cst_91 = arith.constant 1.000000e+00 : f32
    %342 = vector.broadcast %cst_91 : f32 to vector<8x128xf32>
    %343 = arith.addf %342, %341 : vector<8x128xf32>
    %344 = arith.divf %342, %343 : vector<8x128xf32>
    %345 = arith.mulf %336, %319 : vector<8x128xf32>
    %346 = arith.mulf %330, %338 : vector<8x128xf32>
    %347 = arith.addf %345, %346 : vector<8x128xf32>
    %348 = math.tanh %347 : vector<8x128xf32>
    %349 = arith.mulf %344, %348 : vector<8x128xf32>
    %350 = vector.extract_strided_slice %261 {offsets = [24, 0], sizes = [8, 512], strides = [1, 1]} : vector<64x512xf32> to vector<8x512xf32>
    %cst_92 = arith.constant dense<0.000000e+00> : vector<8x512xf32>
    %351 = tpu.matmul %349, %255, %cst_92 {dimension_numbers = #tpu.dot_dimension_numbers<[1], [0], [0], [1], [0, 0, 1, 1], [], []>} : vector<8x128xf32>, vector<128x512xf32>, vector<8x512xf32> -> vector<8x512xf32>
    %352 = arith.addf %350, %351 : vector<8x512xf32>
    %353 = vector.extract_strided_slice %352 {offsets = [0, 0], sizes = [8, 128], strides = [1, 1]} : vector<8x512xf32> to vector<8x128xf32>
    %354 = arith.negf %353 : vector<8x128xf32>
    %355 = math.exp %354 : vector<8x128xf32>
    %cst_93 = arith.constant 1.000000e+00 : f32
    %356 = vector.broadcast %cst_93 : f32 to vector<8x128xf32>
    %357 = arith.addf %356, %355 : vector<8x128xf32>
    %358 = arith.divf %356, %357 : vector<8x128xf32>
    %359 = vector.extract_strided_slice %352 {offsets = [0, 128], sizes = [8, 128], strides = [1, 1]} : vector<8x512xf32> to vector<8x128xf32>
    %360 = arith.negf %359 : vector<8x128xf32>
    %361 = math.exp %360 : vector<8x128xf32>
    %cst_94 = arith.constant 1.000000e+00 : f32
    %362 = vector.broadcast %cst_94 : f32 to vector<8x128xf32>
    %363 = arith.addf %362, %361 : vector<8x128xf32>
    %364 = arith.divf %362, %363 : vector<8x128xf32>
    %365 = vector.extract_strided_slice %352 {offsets = [0, 256], sizes = [8, 128], strides = [1, 1]} : vector<8x512xf32> to vector<8x128xf32>
    %366 = math.tanh %365 : vector<8x128xf32>
    %367 = vector.extract_strided_slice %352 {offsets = [0, 384], sizes = [8, 128], strides = [1, 1]} : vector<8x512xf32> to vector<8x128xf32>
    %368 = arith.negf %367 : vector<8x128xf32>
    %369 = math.exp %368 : vector<8x128xf32>
    %cst_95 = arith.constant 1.000000e+00 : f32
    %370 = vector.broadcast %cst_95 : f32 to vector<8x128xf32>
    %371 = arith.addf %370, %369 : vector<8x128xf32>
    %372 = arith.divf %370, %371 : vector<8x128xf32>
    %373 = arith.mulf %364, %347 : vector<8x128xf32>
    %374 = arith.mulf %358, %366 : vector<8x128xf32>
    %375 = arith.addf %373, %374 : vector<8x128xf32>
    %376 = math.tanh %375 : vector<8x128xf32>
    %377 = arith.mulf %372, %376 : vector<8x128xf32>
    %378 = vector.extract_strided_slice %261 {offsets = [32, 0], sizes = [8, 512], strides = [1, 1]} : vector<64x512xf32> to vector<8x512xf32>
    %cst_96 = arith.constant dense<0.000000e+00> : vector<8x512xf32>
    %379 = tpu.matmul %377, %255, %cst_96 {dimension_numbers = #tpu.dot_dimension_numbers<[1], [0], [0], [1], [0, 0, 1, 1], [], []>} : vector<8x128xf32>, vector<128x512xf32>, vector<8x512xf32> -> vector<8x512xf32>
    %380 = arith.addf %378, %379 : vector<8x512xf32>
    %381 = vector.extract_strided_slice %380 {offsets = [0, 0], sizes = [8, 128], strides = [1, 1]} : vector<8x512xf32> to vector<8x128xf32>
    %382 = arith.negf %381 : vector<8x128xf32>
    %383 = math.exp %382 : vector<8x128xf32>
    %cst_97 = arith.constant 1.000000e+00 : f32
    %384 = vector.broadcast %cst_97 : f32 to vector<8x128xf32>
    %385 = arith.addf %384, %383 : vector<8x128xf32>
    %386 = arith.divf %384, %385 : vector<8x128xf32>
    %387 = vector.extract_strided_slice %380 {offsets = [0, 128], sizes = [8, 128], strides = [1, 1]} : vector<8x512xf32> to vector<8x128xf32>
    %388 = arith.negf %387 : vector<8x128xf32>
    %389 = math.exp %388 : vector<8x128xf32>
    %cst_98 = arith.constant 1.000000e+00 : f32
    %390 = vector.broadcast %cst_98 : f32 to vector<8x128xf32>
    %391 = arith.addf %390, %389 : vector<8x128xf32>
    %392 = arith.divf %390, %391 : vector<8x128xf32>
    %393 = vector.extract_strided_slice %380 {offsets = [0, 256], sizes = [8, 128], strides = [1, 1]} : vector<8x512xf32> to vector<8x128xf32>
    %394 = math.tanh %393 : vector<8x128xf32>
    %395 = vector.extract_strided_slice %380 {offsets = [0, 384], sizes = [8, 128], strides = [1, 1]} : vector<8x512xf32> to vector<8x128xf32>
    %396 = arith.negf %395 : vector<8x128xf32>
    %397 = math.exp %396 : vector<8x128xf32>
    %cst_99 = arith.constant 1.000000e+00 : f32
    %398 = vector.broadcast %cst_99 : f32 to vector<8x128xf32>
    %399 = arith.addf %398, %397 : vector<8x128xf32>
    %400 = arith.divf %398, %399 : vector<8x128xf32>
    %401 = arith.mulf %392, %375 : vector<8x128xf32>
    %402 = arith.mulf %386, %394 : vector<8x128xf32>
    %403 = arith.addf %401, %402 : vector<8x128xf32>
    %404 = math.tanh %403 : vector<8x128xf32>
    %405 = arith.mulf %400, %404 : vector<8x128xf32>
    %406 = vector.extract_strided_slice %261 {offsets = [40, 0], sizes = [8, 512], strides = [1, 1]} : vector<64x512xf32> to vector<8x512xf32>
    %cst_100 = arith.constant dense<0.000000e+00> : vector<8x512xf32>
    %407 = tpu.matmul %405, %255, %cst_100 {dimension_numbers = #tpu.dot_dimension_numbers<[1], [0], [0], [1], [0, 0, 1, 1], [], []>} : vector<8x128xf32>, vector<128x512xf32>, vector<8x512xf32> -> vector<8x512xf32>
    %408 = arith.addf %406, %407 : vector<8x512xf32>
    %409 = vector.extract_strided_slice %408 {offsets = [0, 0], sizes = [8, 128], strides = [1, 1]} : vector<8x512xf32> to vector<8x128xf32>
    %410 = arith.negf %409 : vector<8x128xf32>
    %411 = math.exp %410 : vector<8x128xf32>
    %cst_101 = arith.constant 1.000000e+00 : f32
    %412 = vector.broadcast %cst_101 : f32 to vector<8x128xf32>
    %413 = arith.addf %412, %411 : vector<8x128xf32>
    %414 = arith.divf %412, %413 : vector<8x128xf32>
    %415 = vector.extract_strided_slice %408 {offsets = [0, 128], sizes = [8, 128], strides = [1, 1]} : vector<8x512xf32> to vector<8x128xf32>
    %416 = arith.negf %415 : vector<8x128xf32>
    %417 = math.exp %416 : vector<8x128xf32>
    %cst_102 = arith.constant 1.000000e+00 : f32
    %418 = vector.broadcast %cst_102 : f32 to vector<8x128xf32>
    %419 = arith.addf %418, %417 : vector<8x128xf32>
    %420 = arith.divf %418, %419 : vector<8x128xf32>
    %421 = vector.extract_strided_slice %408 {offsets = [0, 256], sizes = [8, 128], strides = [1, 1]} : vector<8x512xf32> to vector<8x128xf32>
    %422 = math.tanh %421 : vector<8x128xf32>
    %423 = vector.extract_strided_slice %408 {offsets = [0, 384], sizes = [8, 128], strides = [1, 1]} : vector<8x512xf32> to vector<8x128xf32>
    %424 = arith.negf %423 : vector<8x128xf32>
    %425 = math.exp %424 : vector<8x128xf32>
    %cst_103 = arith.constant 1.000000e+00 : f32
    %426 = vector.broadcast %cst_103 : f32 to vector<8x128xf32>
    %427 = arith.addf %426, %425 : vector<8x128xf32>
    %428 = arith.divf %426, %427 : vector<8x128xf32>
    %429 = arith.mulf %420, %403 : vector<8x128xf32>
    %430 = arith.mulf %414, %422 : vector<8x128xf32>
    %431 = arith.addf %429, %430 : vector<8x128xf32>
    %432 = math.tanh %431 : vector<8x128xf32>
    %433 = arith.mulf %428, %432 : vector<8x128xf32>
    %434 = vector.extract_strided_slice %261 {offsets = [48, 0], sizes = [8, 512], strides = [1, 1]} : vector<64x512xf32> to vector<8x512xf32>
    %cst_104 = arith.constant dense<0.000000e+00> : vector<8x512xf32>
    %435 = tpu.matmul %433, %255, %cst_104 {dimension_numbers = #tpu.dot_dimension_numbers<[1], [0], [0], [1], [0, 0, 1, 1], [], []>} : vector<8x128xf32>, vector<128x512xf32>, vector<8x512xf32> -> vector<8x512xf32>
    %436 = arith.addf %434, %435 : vector<8x512xf32>
    %437 = vector.extract_strided_slice %436 {offsets = [0, 0], sizes = [8, 128], strides = [1, 1]} : vector<8x512xf32> to vector<8x128xf32>
    %438 = arith.negf %437 : vector<8x128xf32>
    %439 = math.exp %438 : vector<8x128xf32>
    %cst_105 = arith.constant 1.000000e+00 : f32
    %440 = vector.broadcast %cst_105 : f32 to vector<8x128xf32>
    %441 = arith.addf %440, %439 : vector<8x128xf32>
    %442 = arith.divf %440, %441 : vector<8x128xf32>
    %443 = vector.extract_strided_slice %436 {offsets = [0, 128], sizes = [8, 128], strides = [1, 1]} : vector<8x512xf32> to vector<8x128xf32>
    %444 = arith.negf %443 : vector<8x128xf32>
    %445 = math.exp %444 : vector<8x128xf32>
    %cst_106 = arith.constant 1.000000e+00 : f32
    %446 = vector.broadcast %cst_106 : f32 to vector<8x128xf32>
    %447 = arith.addf %446, %445 : vector<8x128xf32>
    %448 = arith.divf %446, %447 : vector<8x128xf32>
    %449 = vector.extract_strided_slice %436 {offsets = [0, 256], sizes = [8, 128], strides = [1, 1]} : vector<8x512xf32> to vector<8x128xf32>
    %450 = math.tanh %449 : vector<8x128xf32>
    %451 = vector.extract_strided_slice %436 {offsets = [0, 384], sizes = [8, 128], strides = [1, 1]} : vector<8x512xf32> to vector<8x128xf32>
    %452 = arith.negf %451 : vector<8x128xf32>
    %453 = math.exp %452 : vector<8x128xf32>
    %cst_107 = arith.constant 1.000000e+00 : f32
    %454 = vector.broadcast %cst_107 : f32 to vector<8x128xf32>
    %455 = arith.addf %454, %453 : vector<8x128xf32>
    %456 = arith.divf %454, %455 : vector<8x128xf32>
    %457 = arith.mulf %448, %431 : vector<8x128xf32>
    %458 = arith.mulf %442, %450 : vector<8x128xf32>
    %459 = arith.addf %457, %458 : vector<8x128xf32>
    %460 = math.tanh %459 : vector<8x128xf32>
    %461 = arith.mulf %456, %460 : vector<8x128xf32>
    %462 = vector.extract_strided_slice %261 {offsets = [56, 0], sizes = [8, 512], strides = [1, 1]} : vector<64x512xf32> to vector<8x512xf32>
    %cst_108 = arith.constant dense<0.000000e+00> : vector<8x512xf32>
    %463 = tpu.matmul %461, %255, %cst_108 {dimension_numbers = #tpu.dot_dimension_numbers<[1], [0], [0], [1], [0, 0, 1, 1], [], []>} : vector<8x128xf32>, vector<128x512xf32>, vector<8x512xf32> -> vector<8x512xf32>
    %464 = arith.addf %462, %463 : vector<8x512xf32>
    %465 = vector.extract_strided_slice %464 {offsets = [0, 0], sizes = [8, 128], strides = [1, 1]} : vector<8x512xf32> to vector<8x128xf32>
    %466 = arith.negf %465 : vector<8x128xf32>
    %467 = math.exp %466 : vector<8x128xf32>
    %cst_109 = arith.constant 1.000000e+00 : f32
    %468 = vector.broadcast %cst_109 : f32 to vector<8x128xf32>
    %469 = arith.addf %468, %467 : vector<8x128xf32>
    %470 = arith.divf %468, %469 : vector<8x128xf32>
    %471 = vector.extract_strided_slice %464 {offsets = [0, 128], sizes = [8, 128], strides = [1, 1]} : vector<8x512xf32> to vector<8x128xf32>
    %472 = arith.negf %471 : vector<8x128xf32>
    %473 = math.exp %472 : vector<8x128xf32>
    %cst_110 = arith.constant 1.000000e+00 : f32
    %474 = vector.broadcast %cst_110 : f32 to vector<8x128xf32>
    %475 = arith.addf %474, %473 : vector<8x128xf32>
    %476 = arith.divf %474, %475 : vector<8x128xf32>
    %477 = vector.extract_strided_slice %464 {offsets = [0, 256], sizes = [8, 128], strides = [1, 1]} : vector<8x512xf32> to vector<8x128xf32>
    %478 = math.tanh %477 : vector<8x128xf32>
    %479 = vector.extract_strided_slice %464 {offsets = [0, 384], sizes = [8, 128], strides = [1, 1]} : vector<8x512xf32> to vector<8x128xf32>
    %480 = arith.negf %479 : vector<8x128xf32>
    %481 = math.exp %480 : vector<8x128xf32>
    %cst_111 = arith.constant 1.000000e+00 : f32
    %482 = vector.broadcast %cst_111 : f32 to vector<8x128xf32>
    %483 = arith.addf %482, %481 : vector<8x128xf32>
    %484 = arith.divf %482, %483 : vector<8x128xf32>
    %485 = arith.mulf %476, %459 : vector<8x128xf32>
    %486 = arith.mulf %470, %478 : vector<8x128xf32>
    %487 = arith.addf %485, %486 : vector<8x128xf32>
    %488 = math.tanh %487 : vector<8x128xf32>
    %489 = arith.mulf %484, %488 : vector<8x128xf32>
    %c1_112 = arith.constant 1 : index
    %c0_113 = arith.constant 0 : index
    %c0_114 = arith.constant 0 : index
    %490 = vector.load %arg9[%c1_112, %c0_113, %c0_114] : memref<2x8x128xf32, #tpu.memory_space<vmem>>, vector<1x8x128xf32>
    %491 = vector.shape_cast %490 : vector<1x8x128xf32> to vector<8x128xf32>
    %492 = vector.shape_cast %489 : vector<8x128xf32> to vector<1x8x128xf32>
    tpu.vector_store %arg9[%c1_112, %c0_113, %c0_114], %492 {strides = array<i32>} : memref<2x8x128xf32, #tpu.memory_space<vmem>>, vector<1x8x128xf32>,
    %c1_115 = arith.constant 1 : index
    %c0_116 = arith.constant 0 : index
    %c0_117 = arith.constant 0 : index
    %493 = vector.load %arg10[%c1_115, %c0_116, %c0_117] : memref<2x8x128xf32, #tpu.memory_space<vmem>>, vector<1x8x128xf32>
    %494 = vector.shape_cast %493 : vector<1x8x128xf32> to vector<8x128xf32>
    %495 = vector.shape_cast %487 : vector<8x128xf32> to vector<1x8x128xf32>
    tpu.vector_store %arg10[%c1_115, %c0_116, %c0_117], %495 {strides = array<i32>} : memref<2x8x128xf32, #tpu.memory_space<vmem>>, vector<1x8x128xf32>,
    %c0_118 = arith.constant 0 : index
    %c0_119 = arith.constant 0 : index
    %496 = vector.load %arg6[%c0_118, %c0_119] : memref<128x128xf32, #tpu.memory_space<vmem>>, vector<128x128xf32>
    %cst_120 = arith.constant dense<0.000000e+00> : vector<8x128xf32>
    %497 = tpu.matmul %489, %496, %cst_120 {dimension_numbers = #tpu.dot_dimension_numbers<[1], [0], [0], [1], [0, 0, 1, 1], [], []>} : vector<8x128xf32>, vector<128x128xf32>, vector<8x128xf32> -> vector<8x128xf32>
    %c0_121 = arith.constant 0 : index
    %c0_122 = arith.constant 0 : index
    %498 = vector.load %arg7[%c0_121, %c0_122] : memref<1x128xf32, #tpu.memory_space<vmem>>, vector<1x128xf32>
    %499 = vector.broadcast %498 : vector<1x128xf32> to vector<8x128xf32>
    %500 = arith.addf %497, %499 : vector<8x128xf32>
    %501 = arith.negf %500 : vector<8x128xf32>
    %502 = math.exp %501 : vector<8x128xf32>
    %cst_123 = arith.constant 1.000000e+00 : f32
    %503 = vector.broadcast %cst_123 : f32 to vector<8x128xf32>
    %504 = arith.addf %503, %502 : vector<8x128xf32>
    %505 = arith.divf %503, %504 : vector<8x128xf32>
    %c0_124 = arith.constant 0 : index
    %c0_125 = arith.constant 0 : index
    %506 = vector.load %arg8[%c0_124, %c0_125] : memref<8x128xf32, #tpu.memory_space<vmem>>, vector<8x128xf32>
    tpu.vector_store %arg8[%c0_124, %c0_125], %505 {strides = array<i32>} : memref<8x128xf32, #tpu.memory_space<vmem>>, vector<8x128xf32>,
    return
  }
}

</mosaic_0001>

<llo_original>
// kernel: tpu_custom_call.1
$region0: #{tpu_custom_call.1}
  #allocation0 [shape = 'u32[]', space=smem, size = 0x4, offset = 0x4, fixed_abs, tag = 'smem constant byte address 0x4 - core index']
  #allocation1 [shape = 'u32[72,128]{1,0:T(1,128)}', space=vmem, size = 0x9000, scoped, tag = 'internal scratch']
  #allocation2 [shape = 'f32[64,128]{1,0:T(8,128)}', space=vmem, size = 0x8000, scoped, tag = 'scratch operand']
  %s0 = inlined_call_operand.hbm [shape: f32[64,128], index: 0, kind: input, shape index: {}]
  %s1 = inlined_call_operand.hbm [shape: f32[2,128,512], index: 1, kind: input, shape index: {}]
  %s2 = inlined_call_operand.hbm [shape: f32[2,128,512], index: 2, kind: input, shape index: {}]
  %s3 = inlined_call_operand.hbm [shape: f32[2,1,512], index: 3, kind: input, shape index: {}]
  %s4 = inlined_call_operand.hbm [shape: f32[2,8,128], index: 4, kind: input, shape index: {}]
  %s5 = inlined_call_operand.hbm [shape: f32[2,8,128], index: 5, kind: input, shape index: {}]
  %s6 = inlined_call_operand.hbm [shape: f32[128,128], index: 6, kind: input, shape index: {}]
  %s7 = inlined_call_operand.vmem [shape: f32[1,128], index: 7, kind: input, shape index: {}]
  %s8 = inlined_call_operand.hbm [shape: f32[8,128], index: 8, kind: output, shape index: {0}]
  %s9 = inlined_call_operand.hbm [shape: f32[2,8,128], index: 9, kind: output, shape index: {1}]
  %s10 = inlined_call_operand.hbm [shape: f32[2,8,128], index: 10, kind: output, shape index: {2}]
  %11 = xla_tuple %s8, %s9, %s10
  %s12 = sld [smem:[#allocation0]]
  $region86: #{tpu_custom_call.1} parent=0
    _
  %s14 = ssub.s32 1, %s12
  %s15 = scalar_select 0, %s14, %s12
  $region1: #{tpu_custom_call.1} parent=0
    #allocation3 [shape = 'u8[32768]{0}', space=vmem, size = 0x8000, scoped, tag = 'input window, operand 0, single buffered']
    #allocation4 [shape = 's32[1]{0}', space=sflag, size = 0x4, scoped, tag = 'scoped memory for tpu_custom_call.1']
    #allocation5 [shape = 's32[1]{0}', space=sflag, size = 0x4, scoped, tag = 'scoped memory for tpu_custom_call.1']
    #allocation6 [shape = 'u8[524288]{0}', space=vmem, size = 0x80000, scoped, tag = 'input window, operand 1, single buffered']
    #allocation7 [shape = 's32[1]{0}', space=sflag, size = 0x4, scoped, tag = 'scoped memory for tpu_custom_call.1']
    #allocation8 [shape = 'u8[524288]{0}', space=vmem, size = 0x80000, scoped, tag = 'input window, operand 2, single buffered']
    #allocation9 [shape = 'u8[4096]{0}', space=vmem, size = 0x1000, scoped, tag = 'input window, operand 3, single buffered']
    #allocation10 [shape = 's32[1]{0}', space=sflag, size = 0x4, scoped, tag = 'scoped memory for tpu_custom_call.1']
    #allocation11 [shape = 'u8[8192]{0}', space=vmem, size = 0x2000, scoped, tag = 'input window, operand 4, single buffered']
    #allocation12 [shape = 'u8[8192]{0}', space=vmem, size = 0x2000, scoped, tag = 'input window, operand 5, single buffered']
    #allocation13 [shape = 's32[1]{0}', space=sflag, size = 0x4, scoped, tag = 'scoped memory for tpu_custom_call.1']
    #allocation14 [shape = 'u8[65536]{0}', space=vmem, size = 0x10000, scoped, tag = 'input window, operand 6, single buffered']
    #allocation15 [shape = 'u8[4096]{0}', space=vmem, size = 0x1000, scoped, tag = 'output window, operand 0, single buffered']
    #allocation16 [shape = 'u8[8192]{0}', space=vmem, size = 0x2000, scoped, tag = 'output window, operand 1, single buffered']
    #allocation17 [shape = 's32[1]{0}', space=sflag, size = 0x4, scoped, tag = 'scoped memory for tpu_custom_call.1']
    #allocation18 [shape = 'u8[8192]{0}', space=vmem, size = 0x2000, scoped, tag = 'output window, operand 2, single buffered']
    %16 = vsyncpa [#allocation4], 0
    %17 = vsyncpa [#allocation7], 0
    %18 = vsyncpa [#allocation10], 0
    %19 = vsyncpa [#allocation13], 0
    %20 = vsyncpa [#allocation5], 0
    %21 = vsyncpa [#allocation17], 0
    // Predicated region
    $region2: #{tpu_custom_call.1} parent=1 // pred_check
      _
    $region3: #{tpu_custom_call.1} parent=1 // pred_check_branch
      %23 = sbr.rel (0) target = $region5
    $region4: #{tpu_custom_call.1} parent=1 // pred_region
      %25 = vsyncadd [#allocation4], 0
      %s26 = sshll.u32 %s0, 4
      %s27 = int_to_ptr.hbm [resolvable:$true] %s26
      %s28 = sshll.u32 [#allocation3], 4
      %s29 = int_to_ptr.vmem [resolvable:$true] %s28
      %34 = dma.hbm_to_vmem [thread:$0]  %s27, 1024, %s29, [#allocation4], 128, 128, 8
    $region5: #{tpu_custom_call.1} parent=1 // pred_fallthru
      _
    // Predicated region
    $region6: #{tpu_custom_call.1} parent=1 // pred_check
      _
    $region7: #{tpu_custom_call.1} parent=1 // pred_check_branch
      %36 = sbr.rel (0) target = $region9
    $region8: #{tpu_custom_call.1} parent=1 // pred_region
      %38 = vsyncadd [#allocation7], 0
      %s39 = sshll.u32 %s1, 4
      %s40 = int_to_ptr.hbm [resolvable:$true] %s39
      %s41 = sshll.u32 [#allocation6], 4
      %s42 = int_to_ptr.vmem [resolvable:$true] %s41
      %47 = dma.hbm_to_vmem [thread:$0]  %s40, 16384, %s42, [#allocation7], 512, 512, 32
    $region9: #{tpu_custom_call.1} parent=1 // pred_fallthru
      _
    // Predicated region
    $region10: #{tpu_custom_call.1} parent=1 // pred_check
      _
    $region11: #{tpu_custom_call.1} parent=1 // pred_check_branch
      %49 = sbr.rel (0) target = $region13
    $region12: #{tpu_custom_call.1} parent=1 // pred_region
      %51 = vsyncadd [#allocation7], 0
      %s52 = sshll.u32 %s2, 4
      %s53 = int_to_ptr.hbm [resolvable:$true] %s52
      %s54 = sshll.u32 [#allocation8], 4
      %s55 = int_to_ptr.vmem [resolvable:$true] %s54
      %60 = dma.hbm_to_vmem [thread:$0]  %s53, 16384, %s55, [#allocation7], 512, 512, 32
    $region13: #{tpu_custom_call.1} parent=1 // pred_fallthru
      _
    // Predicated region
    $region14: #{tpu_custom_call.1} parent=1 // pred_check
      _
    $region15: #{tpu_custom_call.1} parent=1 // pred_check_branch
      %62 = sbr.rel (0) target = $region17
    $region16: #{tpu_custom_call.1} parent=1 // pred_region
      %64 = vsyncadd [#allocation10], 0
      %s65 = sshll.u32 %s3, 4
      %s66 = int_to_ptr.hbm [resolvable:$true] %s65
      %s67 = sshll.u32 [#allocation9], 4
      %s68 = int_to_ptr.vmem [resolvable:$true] %s67
      %73 = dma.hbm_to_vmem [thread:$0]  %s66, 128, %s68, [#allocation10], 64, 64, 4
    $region17: #{tpu_custom_call.1} parent=1 // pred_fallthru
      _
    // Predicated region
    $region18: #{tpu_custom_call.1} parent=1 // pred_check
      _
    $region19: #{tpu_custom_call.1} parent=1 // pred_check_branch
      %75 = sbr.rel (0) target = $region21
    $region20: #{tpu_custom_call.1} parent=1 // pred_region
      %77 = vsyncadd [#allocation10], 0
      %s78 = sshll.u32 %s4, 4
      %s79 = int_to_ptr.hbm [resolvable:$true] %s78
      %s80 = sshll.u32 [#allocation11], 4
      %s81 = int_to_ptr.vmem [resolvable:$true] %s80
      %86 = dma.hbm_to_vmem [thread:$0]  %s79, 256, %s81, [#allocation10], 128, 128, 8
    $region21: #{tpu_custom_call.1} parent=1 // pred_fallthru
      _
    // Predicated region
    $region22: #{tpu_custom_call.1} parent=1 // pred_check
      _
    $region23: #{tpu_custom_call.1} parent=1 // pred_check_branch
      %88 = sbr.rel (0) target = $region25
    $region24: #{tpu_custom_call.1} parent=1 // pred_region
      %90 = vsyncadd [#allocation13], 0
      %s91 = sshll.u32 %s5, 4
      %s92 = int_to_ptr.hbm [resolvable:$true] %s91
      %s93 = sshll.u32 [#allocation12], 4
      %s94 = int_to_ptr.vmem [resolvable:$true] %s93
      %99 = dma.hbm_to_vmem [thread:$0]  %s92, 256, %s94, [#allocation13], 128, 128, 8
    $region25: #{tpu_custom_call.1} parent=1 // pred_fallthru
      _
    // Predicated region
    $region26: #{tpu_custom_call.1} parent=1 // pred_check
      _
    $region27: #{tpu_custom_call.1} parent=1 // pred_check_branch
      %101 = sbr.rel (0) target = $region29
    $region28: #{tpu_custom_call.1} parent=1 // pred_region
      %103 = vsyncadd [#allocation13], 0
      %s104 = sshll.u32 %s6, 4
      %s105 = int_to_ptr.hbm [resolvable:$true] %s104
      %s106 = sshll.u32 [#allocation14], 4
      %s107 = int_to_ptr.vmem [resolvable:$true] %s106
      %112 = dma.hbm_to_vmem [thread:$0]  %s105, 2048, %s107, [#allocation13], 128, 128, 8
    $region29: #{tpu_custom_call.1} parent=1 // pred_fallthru
      _
    // Predicated region
    $region30: #{tpu_custom_call.1} parent=1 // pred_check
      _
    $region31: #{tpu_custom_call.1} parent=1 // pred_check_branch
      %114 = sbr.rel (0) target = $region33
    $region32: #{tpu_custom_call.1} parent=1 // pred_region
      _
    $region33: #{tpu_custom_call.1} parent=1 // pred_fallthru
      _
    // Predicated region
    $region34: #{tpu_custom_call.1} parent=1 // pred_check
      _
    $region35: #{tpu_custom_call.1} parent=1 // pred_check_branch
      %116 = sbr.rel (0) target = $region37
    $region36: #{tpu_custom_call.1} parent=1 // pred_region
      %118 = dma.done [#allocation4], 1024
    $region37: #{tpu_custom_call.1} parent=1 // pred_fallthru
      _
    // Predicated region
    $region38: #{tpu_custom_call.1} parent=1 // pred_check
      _
    $region39: #{tpu_custom_call.1} parent=1 // pred_check_branch
      %120 = sbr.rel (0) target = $region41
    $region40: #{tpu_custom_call.1} parent=1 // pred_region
      %122 = dma.done [#allocation7], 16384
    $region41: #{tpu_custom_call.1} parent=1 // pred_fallthru
      _
    // Predicated region
    $region42: #{tpu_custom_call.1} parent=1 // pred_check
      _
    $region43: #{tpu_custom_call.1} parent=1 // pred_check_branch
      %124 = sbr.rel (0) target = $region45
    $region44: #{tpu_custom_call.1} parent=1 // pred_region
      %126 = dma.done [#allocation7], 16384
    $region45: #{tpu_custom_call.1} parent=1 // pred_fallthru
      _
    // Predicated region
    $region46: #{tpu_custom_call.1} parent=1 // pred_check
      _
    $region47: #{tpu_custom_call.1} parent=1 // pred_check_branch
      %128 = sbr.rel (0) target = $region49
    $region48: #{tpu_custom_call.1} parent=1 // pred_region
      %130 = dma.done [#allocation10], 128
    $region49: #{tpu_custom_call.1} parent=1 // pred_fallthru
      _
    // Predicated region
    $region50: #{tpu_custom_call.1} parent=1 // pred_check
      _
    $region51: #{tpu_custom_call.1} parent=1 // pred_check_branch
      %132 = sbr.rel (0) target = $region53
    $region52: #{tpu_custom_call.1} parent=1 // pred_region
      %134 = dma.done [#allocation10], 256
    $region53: #{tpu_custom_call.1} parent=1 // pred_fallthru
      _
    // Predicated region
    $region54: #{tpu_custom_call.1} parent=1 // pred_check
      _
    $region55: #{tpu_custom_call.1} parent=1 // pred_check_branch
      %136 = sbr.rel (0) target = $region57
    $region56: #{tpu_custom_call.1} parent=1 // pred_region
      %138 = dma.done [#allocation13], 256
    $region57: #{tpu_custom_call.1} parent=1 // pred_fallthru
      _
    // Predicated region
    $region58: #{tpu_custom_call.1} parent=1 // pred_check
      _
    $region59: #{tpu_custom_call.1} parent=1 // pred_check_branch
      %140 = sbr.rel (0) target = $region61
    $region60: #{tpu_custom_call.1} parent=1 // pred_region
      %142 = dma.done [#allocation13], 2048
    $region61: #{tpu_custom_call.1} parent=1 // pred_fallthru
      _
    %v143 = vld [vmem:[#allocation6] sm:$0xff]
    %v144 = vld [vmem:[#allocation6 + $0x8] sm:$0xff]
    %v145 = vld [vmem:[#allocation6 + $0x10] sm:$0xff]
    %v146 = vld [vmem:[#allocation6 + $0x18] sm:$0xff]
    %v147 = vld [vmem:[#allocation6 + $0x20] sm:$0xff]
    %v148 = vld [vmem:[#allocation6 + $0x28] sm:$0xff]
    %v149 = vld [vmem:[#allocation6 + $0x30] sm:$0xff]
    %v150 = vld [vmem:[#allocation6 + $0x38] sm:$0xff]
    %v151 = vld [vmem:[#allocation6 + $0x40] sm:$0xff]
    %v152 = vld [vmem:[#allocation6 + $0x48] sm:$0xff]
    %v153 = vld [vmem:[#allocation6 + $0x50] sm:$0xff]
    %v154 = vld [vmem:[#allocation6 + $0x58] sm:$0xff]
    %v155 = vld [vmem:[#allocation6 + $0x60] sm:$0xff]
    %v156 = vld [vmem:[#allocation6 + $0x68] sm:$0xff]
    %v157 = vld [vmem:[#allocation6 + $0x70] sm:$0xff]
    %v158 = vld [vmem:[#allocation6 + $0x78] sm:$0xff]
    %v159 = vld [vmem:[#allocation6 + $0x80] sm:$0xff]
    %v160 = vld [vmem:[#allocation6 + $0x88] sm:$0xff]
    %v161 = vld [vmem:[#allocation6 + $0x90] sm:$0xff]
    %v162 = vld [vmem:[#allocation6 + $0x98] sm:$0xff]
    %v163 = vld [vmem:[#allocation6 + $0xa0] sm:$0xff]
    %v164 = vld [vmem:[#allocation6 + $0xa8] sm:$0xff]
    %v165 = vld [vmem:[#allocation6 + $0xb0] sm:$0xff]
    %v166 = vld [vmem:[#allocation6 + $0xb8] sm:$0xff]
    %v167 = vld [vmem:[#allocation6 + $0xc0] sm:$0xff]
    %v168 = vld [vmem:[#allocation6 + $0xc8] sm:$0xff]
    %v169 = vld [vmem:[#allocation6 + $0xd0] sm:$0xff]
    %v170 = vld [vmem:[#allocation6 + $0xd8] sm:$0xff]
    %v171 = vld [vmem:[#allocation6 + $0xe0] sm:$0xff]
    %v172 = vld [vmem:[#allocation6 + $0xe8] sm:$0xff]
    %v173 = vld [vmem:[#allocation6 + $0xf0] sm:$0xff]
    %v174 = vld [vmem:[#allocation6 + $0xf8] sm:$0xff]
    %v175 = vld [vmem:[#allocation6 + $0x100] sm:$0xff]
    %v176 = vld [vmem:[#allocation6 + $0x108] sm:$0xff]
    %v177 = vld [vmem:[#allocation6 + $0x110] sm:$0xff]
    %v178 = vld [vmem:[#allocation6 + $0x118] sm:$0xff]
    %v179 = vld [vmem:[#allocation6 + $0x120] sm:$0xff]
    %v180 = vld [vmem:[#allocation6 + $0x128] sm:$0xff]
    %v181 = vld [vmem:[#allocation6 + $0x130] sm:$0xff]
    %v182 = vld [vmem:[#allocation6 + $0x138] sm:$0xff]
    %v183 = vld [vmem:[#allocation6 + $0x140] sm:$0xff]
    %v184 = vld [vmem:[#allocation6 + $0x148] sm:$0xff]
    %v185 = vld [vmem:[#allocation6 + $0x150] sm:$0xff]
    %v186 = vld [vmem:[#allocation6 + $0x158] sm:$0xff]
    %v187 = vld [vmem:[#allocation6 + $0x160] sm:$0xff]
    %v188 = vld [vmem:[#allocation6 + $0x168] sm:$0xff]
    %v189 = vld [vmem:[#allocation6 + $0x170] sm:$0xff]
    %v190 = vld [vmem:[#allocation6 + $0x178] sm:$0xff]
    %v191 = vld [vmem:[#allocation6 + $0x180] sm:$0xff]
    %v192 = vld [vmem:[#allocation6 + $0x188] sm:$0xff]
    %v193 = vld [vmem:[#allocation6 + $0x190] sm:$0xff]
    %v194 = vld [vmem:[#allocation6 + $0x198] sm:$0xff]
    %v195 = vld [vmem:[#allocation6 + $0x1a0] sm:$0xff]
    %v196 = vld [vmem:[#allocation6 + $0x1a8] sm:$0xff]
    %v197 = vld [vmem:[#allocation6 + $0x1b0] sm:$0xff]
    %v198 = vld [vmem:[#allocation6 + $0x1b8] sm:$0xff]
    %v199 = vld [vmem:[#allocation6 + $0x1c0] sm:$0xff]
    %v200 = vld [vmem:[#allocation6 + $0x1c8] sm:$0xff]
    %v201 = vld [vmem:[#allocation6 + $0x1d0] sm:$0xff]
    %v202 = vld [vmem:[#allocation6 + $0x1d8] sm:$0xff]
    %v203 = vld [vmem:[#allocation6 + $0x1e0] sm:$0xff]
    %v204 = vld [vmem:[#allocation6 + $0x1e8] sm:$0xff]
    %v205 = vld [vmem:[#allocation6 + $0x1f0] sm:$0xff]
    %v206 = vld [vmem:[#allocation6 + $0x1f8] sm:$0xff]
    %v207 = vld [vmem:[#allocation8] sm:$0xff]
    %v208 = vld [vmem:[#allocation8 + $0x8] sm:$0xff]
    %v209 = vld [vmem:[#allocation8 + $0x10] sm:$0xff]
    %v210 = vld [vmem:[#allocation8 + $0x18] sm:$0xff]
    %v211 = vld [vmem:[#allocation8 + $0x20] sm:$0xff]
    %v212 = vld [vmem:[#allocation8 + $0x28] sm:$0xff]
    %v213 = vld [vmem:[#allocation8 + $0x30] sm:$0xff]
    %v214 = vld [vmem:[#allocation8 + $0x38] sm:$0xff]
    %v215 = vld [vmem:[#allocation8 + $0x40] sm:$0xff]
    %v216 = vld [vmem:[#allocation8 + $0x48] sm:$0xff]
    %v217 = vld [vmem:[#allocation8 + $0x50] sm:$0xff]
    %v218 = vld [vmem:[#allocation8 + $0x58] sm:$0xff]
    %v219 = vld [vmem:[#allocation8 + $0x60] sm:$0xff]
    %v220 = vld [vmem:[#allocation8 + $0x68] sm:$0xff]
    %v221 = vld [vmem:[#allocation8 + $0x70] sm:$0xff]
    %v222 = vld [vmem:[#allocation8 + $0x78] sm:$0xff]
    %v223 = vld [vmem:[#allocation8 + $0x80] sm:$0xff]
    %v224 = vld [vmem:[#allocation8 + $0x88] sm:$0xff]
    %v225 = vld [vmem:[#allocation8 + $0x90] sm:$0xff]
    %v226 = vld [vmem:[#allocation8 + $0x98] sm:$0xff]
    %v227 = vld [vmem:[#allocation8 + $0xa0] sm:$0xff]
    %v228 = vld [vmem:[#allocation8 + $0xa8] sm:$0xff]
    %v229 = vld [vmem:[#allocation8 + $0xb0] sm:$0xff]
    %v230 = vld [vmem:[#allocation8 + $0xb8] sm:$0xff]
    %v231 = vld [vmem:[#allocation8 + $0xc0] sm:$0xff]
    %v232 = vld [vmem:[#allocation8 + $0xc8] sm:$0xff]
    %v233 = vld [vmem:[#allocation8 + $0xd0] sm:$0xff]
    %v234 = vld [vmem:[#allocation8 + $0xd8] sm:$0xff]
    %v235 = vld [vmem:[#allocation8 + $0xe0] sm:$0xff]
    %v236 = vld [vmem:[#allocation8 + $0xe8] sm:$0xff]
    %v237 = vld [vmem:[#allocation8 + $0xf0] sm:$0xff]
    %v238 = vld [vmem:[#allocation8 + $0xf8] sm:$0xff]
    %v239 = vld [vmem:[#allocation8 + $0x100] sm:$0xff]
    %v240 = vld [vmem:[#allocation8 + $0x108] sm:$0xff]
    %v241 = vld [vmem:[#allocation8 + $0x110] sm:$0xff]
    %v242 = vld [vmem:[#allocation8 + $0x118] sm:$0xff]
    %v243 = vld [vmem:[#allocation8 + $0x120] sm:$0xff]
    %v244 = vld [vmem:[#allocation8 + $0x128] sm:$0xff]
    %v245 = vld [vmem:[#allocation8 + $0x130] sm:$0xff]
    %v246 = vld [vmem:[#allocation8 + $0x138] sm:$0xff]
    %v247 = vld [vmem:[#allocation8 + $0x140] sm:$0xff]
    %v248 = vld [vmem:[#allocation8 + $0x148] sm:$0xff]
    %v249 = vld [vmem:[#allocation8 + $0x150] sm:$0xff]
    %v250 = vld [vmem:[#allocation8 + $0x158] sm:$0xff]
    %v251 = vld [vmem:[#allocation8 + $0x160] sm:$0xff]
    %v252 = vld [vmem:[#allocation8 + $0x168] sm:$0xff]
    %v253 = vld [vmem:[#allocation8 + $0x170] sm:$0xff]
    %v254 = vld [vmem:[#allocation8 + $0x178] sm:$0xff]
    %v255 = vld [vmem:[#allocation8 + $0x180] sm:$0xff]
    %v256 = vld [vmem:[#allocation8 + $0x188] sm:$0xff]
    %v257 = vld [vmem:[#allocation8 + $0x190] sm:$0xff]
    %v258 = vld [vmem:[#allocation8 + $0x198] sm:$0xff]
    %v259 = vld [vmem:[#allocation8 + $0x1a0] sm:$0xff]
    %v260 = vld [vmem:[#allocation8 + $0x1a8] sm:$0xff]
    %v261 = vld [vmem:[#allocation8 + $0x1b0] sm:$0xff]
    %v262 = vld [vmem:[#allocation8 + $0x1b8] sm:$0xff]
    %v263 = vld [vmem:[#allocation8 + $0x1c0] sm:$0xff]
    %v264 = vld [vmem:[#allocation8 + $0x1c8] sm:$0xff]
    %v265 = vld [vmem:[#allocation8 + $0x1d0] sm:$0xff]
    %v266 = vld [vmem:[#allocation8 + $0x1d8] sm:$0xff]
    %v267 = vld [vmem:[#allocation8 + $0x1e0] sm:$0xff]
    %v268 = vld [vmem:[#allocation8 + $0x1e8] sm:$0xff]
    %v269 = vld [vmem:[#allocation8 + $0x1f0] sm:$0xff]
    %v270 = vld [vmem:[#allocation8 + $0x1f8] sm:$0xff]
    %v271 = vld [vmem:[#allocation9] sm:$0xf]
    %v272 = vld [vmem:[#allocation3] sm:$0xff]
    %v273 = vld [vmem:[#allocation3 + $0x8] sm:$0xff]
    %v274 = vld [vmem:[#allocation3 + $0x10] sm:$0xff]
    %v275 = vld [vmem:[#allocation3 + $0x18] sm:$0xff]
    %v276 = vld [vmem:[#allocation3 + $0x20] sm:$0xff]
    %v277 = vld [vmem:[#allocation3 + $0x28] sm:$0xff]
    %v278 = vld [vmem:[#allocation3 + $0x30] sm:$0xff]
    %v279 = vld [vmem:[#allocation3 + $0x38] sm:$0xff]
    %v281 = vperm.slane %v271, 0
    %v282 = vperm.slane %v271, 1
    %v283 = vperm.slane %v271, 2
    %v284 = vperm.slane %v271, 3
    %289 = vmatpush.msra.mxu0 %v203
    %290 = vmatpush.msra.mxu0 %v199
    %291 = vmatpush.msra.mxu0 %v195
    %292 = vmatpush.msra.mxu0 %v191
    %293 = vmatpush.msra.mxu0 %v187
    %294 = vmatpush.msra.mxu0 %v183
    %295 = vmatpush.msra.mxu0 %v179
    %296 = vmatpush.msra.mxu0 %v175
    %297 = vmatpush.msra.mxu0 %v171
    %298 = vmatpush.msra.mxu0 %v167
    %299 = vmatpush.msra.mxu0 %v163
    %300 = vmatpush.msra.mxu0 %v159
    %301 = vmatpush.msra.mxu0 %v155
    %302 = vmatpush.msra.mxu0 %v151
    %303 = vmatpush.msra.mxu0 %v147
    %304 = vmatpush.msra.mxu0 %v143
    %305 = vmatmul.f32.gmra.mxu0 %v272
    %v306 = vpop.f32.mrf.mxu0
    %v307 = vadd.f32 %v281, %v306
    %308 = vmatmul.f32.gmra.mxu0 %v273
    %v309 = vpop.f32.mrf.mxu0
    %v310 = vadd.f32 %v281, %v309
    %311 = vmatmul.f32.gmra.mxu0 %v274
    %v312 = vpop.f32.mrf.mxu0
    %v313 = vadd.f32 %v281, %v312
    %314 = vmatmul.f32.gmra.mxu0 %v275
    %v315 = vpop.f32.mrf.mxu0
    %v316 = vadd.f32 %v281, %v315
    %317 = vmatmul.f32.gmra.mxu0 %v276
    %v318 = vpop.f32.mrf.mxu0
    %v319 = vadd.f32 %v281, %v318
    %320 = vmatmul.f32.gmra.mxu0 %v277
    %v321 = vpop.f32.mrf.mxu0
    %v322 = vadd.f32 %v281, %v321
    %323 = vmatmul.f32.gmra.mxu0 %v278
    %v324 = vpop.f32.mrf.mxu0
    %v325 = vadd.f32 %v281, %v324
    %326 = vmatmul.f32.gmra.mxu0 %v279
    %v327 = vpop.f32.mrf.mxu0
    %v328 = vadd.f32 %v281, %v327
    %329 = vdwg.mxu0
    %330 = vmatpush.msra.mxu0 %v204
    %331 = vmatpush.msra.mxu0 %v200
    %332 = vmatpush.msra.mxu0 %v196
    %333 = vmatpush.msra.mxu0 %v192
    %334 = vmatpush.msra.mxu0 %v188
    %335 = vmatpush.msra.mxu0 %v184
    %336 = vmatpush.msra.mxu0 %v180
    %337 = vmatpush.msra.mxu0 %v176
    %338 = vmatpush.msra.mxu0 %v172
    %339 = vmatpush.msra.mxu0 %v168
    %340 = vmatpush.msra.mxu0 %v164
    %341 = vmatpush.msra.mxu0 %v160
    %342 = vmatpush.msra.mxu0 %v156
    %343 = vmatpush.msra.mxu0 %v152
    %344 = vmatpush.msra.mxu0 %v148
    %345 = vmatpush.msra.mxu0 %v144
    %346 = vmatmul.f32.gmra.mxu0 %v272
    %v347 = vpop.f32.mrf.mxu0
    %v348 = vadd.f32 %v282, %v347
    %349 = vmatmul.f32.gmra.mxu0 %v273
    %v350 = vpop.f32.mrf.mxu0
    %v351 = vadd.f32 %v282, %v350
    %352 = vmatmul.f32.gmra.mxu0 %v274
    %v353 = vpop.f32.mrf.mxu0
    %v354 = vadd.f32 %v282, %v353
    %355 = vmatmul.f32.gmra.mxu0 %v275
    %v356 = vpop.f32.mrf.mxu0
    %v357 = vadd.f32 %v282, %v356
    %358 = vmatmul.f32.gmra.mxu0 %v276
    %v359 = vpop.f32.mrf.mxu0
    %v360 = vadd.f32 %v282, %v359
    %361 = vmatmul.f32.gmra.mxu0 %v277
    %v362 = vpop.f32.mrf.mxu0
    %v363 = vadd.f32 %v282, %v362
    %364 = vmatmul.f32.gmra.mxu0 %v278
    %v365 = vpop.f32.mrf.mxu0
    %v366 = vadd.f32 %v282, %v365
    %367 = vmatmul.f32.gmra.mxu0 %v279
    %v368 = vpop.f32.mrf.mxu0
    %v369 = vadd.f32 %v282, %v368
    %370 = vdwg.mxu0
    %371 = vmatpush.msra.mxu0 %v205
    %372 = vmatpush.msra.mxu0 %v201
    %373 = vmatpush.msra.mxu0 %v197
    %374 = vmatpush.msra.mxu0 %v193
    %375 = vmatpush.msra.mxu0 %v189
    %376 = vmatpush.msra.mxu0 %v185
    %377 = vmatpush.msra.mxu0 %v181
    %378 = vmatpush.msra.mxu0 %v177
    %379 = vmatpush.msra.mxu0 %v173
    %380 = vmatpush.msra.mxu0 %v169
    %381 = vmatpush.msra.mxu0 %v165
    %382 = vmatpush.msra.mxu0 %v161
    %383 = vmatpush.msra.mxu0 %v157
    %384 = vmatpush.msra.mxu0 %v153
    %385 = vmatpush.msra.mxu0 %v149
    %386 = vmatpush.msra.mxu0 %v145
    %387 = vmatmul.f32.gmra.mxu0 %v272
    %v388 = vpop.f32.mrf.mxu0
    %v389 = vadd.f32 %v283, %v388
    %390 = vmatmul.f32.gmra.mxu0 %v273
    %v391 = vpop.f32.mrf.mxu0
    %v392 = vadd.f32 %v283, %v391
    %393 = vmatmul.f32.gmra.mxu0 %v274
    %v394 = vpop.f32.mrf.mxu0
    %v395 = vadd.f32 %v283, %v394
    %396 = vmatmul.f32.gmra.mxu0 %v275
    %v397 = vpop.f32.mrf.mxu0
    %v398 = vadd.f32 %v283, %v397
    %399 = vmatmul.f32.gmra.mxu0 %v276
    %v400 = vpop.f32.mrf.mxu0
    %v401 = vadd.f32 %v283, %v400
    %402 = vmatmul.f32.gmra.mxu0 %v277
    %v403 = vpop.f32.mrf.mxu0
    %v404 = vadd.f32 %v283, %v403
    %405 = vmatmul.f32.gmra.mxu0 %v278
    %v406 = vpop.f32.mrf.mxu0
    %v407 = vadd.f32 %v283, %v406
    %408 = vmatmul.f32.gmra.mxu0 %v279
    %v409 = vpop.f32.mrf.mxu0
    %v410 = vadd.f32 %v283, %v409
    %411 = vdwg.mxu0
    %412 = vmatpush.msra.mxu0 %v206
    %413 = vmatpush.msra.mxu0 %v202
    %414 = vmatpush.msra.mxu0 %v198
    %415 = vmatpush.msra.mxu0 %v194
    %416 = vmatpush.msra.mxu0 %v190
    %417 = vmatpush.msra.mxu0 %v186
    %418 = vmatpush.msra.mxu0 %v182
    %419 = vmatpush.msra.mxu0 %v178
    %420 = vmatpush.msra.mxu0 %v174
    %421 = vmatpush.msra.mxu0 %v170
    %422 = vmatpush.msra.mxu0 %v166
    %423 = vmatpush.msra.mxu0 %v162
    %424 = vmatpush.msra.mxu0 %v158
    %425 = vmatpush.msra.mxu0 %v154
    %426 = vmatpush.msra.mxu0 %v150
    %427 = vmatpush.msra.mxu0 %v146
    %428 = vmatmul.f32.gmra.mxu0 %v272
    %v429 = vpop.f32.mrf.mxu0
    %v430 = vadd.f32 %v284, %v429
    %431 = vmatmul.f32.gmra.mxu0 %v273
    %v432 = vpop.f32.mrf.mxu0
    %v433 = vadd.f32 %v284, %v432
    %434 = vmatmul.f32.gmra.mxu0 %v274
    %v435 = vpop.f32.mrf.mxu0
    %v436 = vadd.f32 %v284, %v435
    %437 = vmatmul.f32.gmra.mxu0 %v275
    %v438 = vpop.f32.mrf.mxu0
    %v439 = vadd.f32 %v284, %v438
    %440 = vmatmul.f32.gmra.mxu0 %v276
    %v441 = vpop.f32.mrf.mxu0
    %v442 = vadd.f32 %v284, %v441
    %443 = vmatmul.f32.gmra.mxu0 %v277
    %v444 = vpop.f32.mrf.mxu0
    %v445 = vadd.f32 %v284, %v444
    %446 = vmatmul.f32.gmra.mxu0 %v278
    %v447 = vpop.f32.mrf.mxu0
    %v448 = vadd.f32 %v284, %v447
    %449 = vmatmul.f32.gmra.mxu0 %v279
    %v450 = vpop.f32.mrf.mxu0
    %v451 = vadd.f32 %v284, %v450
    %452 = vdwg.mxu0
    %v453 = vld [vmem:[#allocation11] sm:$0xff]
    %v454 = vld [vmem:[#allocation12] sm:$0xff]
    %455 = vmatpush.msra.mxu0 %v267
    %456 = vmatpush.msra.mxu0 %v263
    %457 = vmatpush.msra.mxu0 %v259
    %458 = vmatpush.msra.mxu0 %v255
    %459 = vmatpush.msra.mxu0 %v251
    %460 = vmatpush.msra.mxu0 %v247
    %461 = vmatpush.msra.mxu0 %v243
    %462 = vmatpush.msra.mxu0 %v239
    %463 = vmatpush.msra.mxu0 %v235
    %464 = vmatpush.msra.mxu0 %v231
    %465 = vmatpush.msra.mxu0 %v227
    %466 = vmatpush.msra.mxu0 %v223
    %467 = vmatpush.msra.mxu0 %v219
    %468 = vmatpush.msra.mxu0 %v215
    %469 = vmatpush.msra.mxu0 %v211
    %470 = vmatpush.msra.mxu0 %v207
    %471 = vmatmul.f32.gmra.mxu0 %v453
    %v472 = vpop.f32.mrf.mxu0
    %v473 = vadd.f32 0.0, %v472
    %474 = vdwg.mxu0
    %475 = vmatpush.msra.mxu0 %v268
    %476 = vmatpush.msra.mxu0 %v264
    %477 = vmatpush.msra.mxu0 %v260
    %478 = vmatpush.msra.mxu0 %v256
    %479 = vmatpush.msra.mxu0 %v252
    %480 = vmatpush.msra.mxu0 %v248
    %481 = vmatpush.msra.mxu0 %v244
    %482 = vmatpush.msra.mxu0 %v240
    %483 = vmatpush.msra.mxu0 %v236
    %484 = vmatpush.msra.mxu0 %v232
    %485 = vmatpush.msra.mxu0 %v228
    %486 = vmatpush.msra.mxu0 %v224
    %487 = vmatpush.msra.mxu0 %v220
    %488 = vmatpush.msra.mxu0 %v216
    %489 = vmatpush.msra.mxu0 %v212
    %490 = vmatpush.msra.mxu0 %v208
    %491 = vmatmul.f32.gmra.mxu0 %v453
    %v492 = vpop.f32.mrf.mxu0
    %v493 = vadd.f32 0.0, %v492
    %494 = vdwg.mxu0
    %495 = vmatpush.msra.mxu0 %v269
    %496 = vmatpush.msra.mxu0 %v265
    %497 = vmatpush.msra.mxu0 %v261
    %498 = vmatpush.msra.mxu0 %v257
    %499 = vmatpush.msra.mxu0 %v253
    %500 = vmatpush.msra.mxu0 %v249
    %501 = vmatpush.msra.mxu0 %v245
    %502 = vmatpush.msra.mxu0 %v241
    %503 = vmatpush.msra.mxu0 %v237
    %504 = vmatpush.msra.mxu0 %v233
    %505 = vmatpush.msra.mxu0 %v229
    %506 = vmatpush.msra.mxu0 %v225
    %507 = vmatpush.msra.mxu0 %v221
    %508 = vmatpush.msra.mxu0 %v217
    %509 = vmatpush.msra.mxu0 %v213
    %510 = vmatpush.msra.mxu0 %v209
    %511 = vmatmul.f32.gmra.mxu0 %v453
    %v512 = vpop.f32.mrf.mxu0
    %v513 = vadd.f32 0.0, %v512
    %514 = vdwg.mxu0
    %515 = vmatpush.msra.mxu0 %v270
    %516 = vmatpush.msra.mxu0 %v266
    %517 = vmatpush.msra.mxu0 %v262
    %518 = vmatpush.msra.mxu0 %v258
    %519 = vmatpush.msra.mxu0 %v254
    %520 = vmatpush.msra.mxu0 %v250
    %521 = vmatpush.msra.mxu0 %v246
    %522 = vmatpush.msra.mxu0 %v242
    %523 = vmatpush.msra.mxu0 %v238
    %524 = vmatpush.msra.mxu0 %v234
    %525 = vmatpush.msra.mxu0 %v230
    %526 = vmatpush.msra.mxu0 %v226
    %527 = vmatpush.msra.mxu0 %v222
    %528 = vmatpush.msra.mxu0 %v218
    %529 = vmatpush.msra.mxu0 %v214
    %530 = vmatpush.msra.mxu0 %v210
    %531 = vmatmul.f32.gmra.mxu0 %v453
    %v532 = vpop.f32.mrf.mxu0
    %v533 = vadd.f32 0.0, %v532
    %534 = vdwg.mxu0
    %v535 = vadd.f32 %v307, %v473
    %v536 = vadd.f32 %v348, %v493
    %v537 = vadd.f32 %v389, %v513
    %v538 = vadd.f32 %v430, %v533
    %v539 = vxor.u32 %v535, 2147483648
    %v540 = vmul.f32 %v539, 1.442695
    %v541 = vpow.pop %v540
    %v542 = vadd.f32 %v541, 1.0
    %v543 = vrcp.pop %v542
    %v544 = vmul.f32 %v542, %v543
    %v545 = vsub.f32 1.0, %v544
    %v546 = vmul.f32 %v543, %v545
    %v547 = vadd.f32 %v543, %v546
    %vm548 = vweird.f32 %v542
    %vm549 = vweird.f32 %v543
    %vm550 = vmor %vm548, %vm549
    %v551 = vsel %vm550, %v543, %v547
    %v552 = vand.u32 2147483647, %v542
    %vm553 = vcmp.eq.f32.partialorder %v552, 8.507059e+37
    %v554 = vand.u32 %v542, 2147483648
    %v555 = vor.u32 1.1754944e-38, %v554
    %v556 = vsel %vm553, %v555, %v551
    %v557 = vmul.f32 1.0, %v556
    %v558 = vxor.u32 %v536, 2147483648
    %v559 = vmul.f32 %v558, 1.442695
    %v560 = vpow.pop %v559
    %v561 = vadd.f32 %v560, 1.0
    %v562 = vrcp.pop %v561
    %v563 = vmul.f32 %v561, %v562
    %v564 = vsub.f32 1.0, %v563
    %v565 = vmul.f32 %v562, %v564
    %v566 = vadd.f32 %v562, %v565
    %vm567 = vweird.f32 %v561
    %vm568 = vweird.f32 %v562
    %vm569 = vmor %vm567, %vm568
    %v570 = vsel %vm569, %v562, %v566
    %v571 = vand.u32 2147483647, %v561
    %vm572 = vcmp.eq.f32.partialorder %v571, 8.507059e+37
    %v573 = vand.u32 %v561, 2147483648
    %v574 = vor.u32 1.1754944e-38, %v573
    %v575 = vsel %vm572, %v574, %v570
    %v576 = vmul.f32 1.0, %v575
    %v577 = vtanh.pop %v537
    %v578 = vxor.u32 %v538, 2147483648
    %v579 = vmul.f32 %v578, 1.442695
    %v580 = vpow.pop %v579
    %v581 = vadd.f32 %v580, 1.0
    %v582 = vrcp.pop %v581
    %v583 = vmul.f32 %v581, %v582
    %v584 = vsub.f32 1.0, %v583
    %v585 = vmul.f32 %v582, %v584
    %v586 = vadd.f32 %v582, %v585
    %vm587 = vweird.f32 %v581
    %vm588 = vweird.f32 %v582
    %vm589 = vmor %vm587, %vm588
    %v590 = vsel %vm589, %v582, %v586
    %v591 = vand.u32 2147483647, %v581
    %vm592 = vcmp.eq.f32.partialorder %v591, 8.507059e+37
    %v593 = vand.u32 %v581, 2147483648
    %v594 = vor.u32 1.1754944e-38, %v593
    %v595 = vsel %vm592, %v594, %v590
    %v596 = vmul.f32 1.0, %v595
    %v597 = vmul.f32 %v576, %v454
    %v598 = vmul.f32 %v557, %v577
    %v599 = vadd.f32 %v597, %v598
    %v600 = vtanh.pop %v599
    %v601 = vmul.f32 %v596, %v600
    %602 = vst [vmem:[#allocation2] sm:$0xff] %v601
    %603 = vmatpush.msra.mxu0 %v267
    %604 = vmatpush.msra.mxu0 %v263
    %605 = vmatpush.msra.mxu0 %v259
    %606 = vmatpush.msra.mxu0 %v255
    %607 = vmatpush.msra.mxu0 %v251
    %608 = vmatpush.msra.mxu0 %v247
    %609 = vmatpush.msra.mxu0 %v243
    %610 = vmatpush.msra.mxu0 %v239
    %611 = vmatpush.msra.mxu0 %v235
    %612 = vmatpush.msra.mxu0 %v231
    %613 = vmatpush.msra.mxu0 %v227
    %614 = vmatpush.msra.mxu0 %v223
    %615 = vmatpush.msra.mxu0 %v219
    %616 = vmatpush.msra.mxu0 %v215
    %617 = vmatpush.msra.mxu0 %v211
    %618 = vmatpush.msra.mxu0 %v207
    %619 = vmatmul.f32.gmra.mxu0 %v601
    %v620 = vpop.f32.mrf.mxu0
    %v621 = vadd.f32 0.0, %v620
    %622 = vdwg.mxu0
    %623 = vmatpush.msra.mxu0 %v268
    %624 = vmatpush.msra.mxu0 %v264
    %625 = vmatpush.msra.mxu0 %v260
    %626 = vmatpush.msra.mxu0 %v256
    %627 = vmatpush.msra.mxu0 %v252
    %628 = vmatpush.msra.mxu0 %v248
    %629 = vmatpush.msra.mxu0 %v244
    %630 = vmatpush.msra.mxu0 %v240
    %631 = vmatpush.msra.mxu0 %v236
    %632 = vmatpush.msra.mxu0 %v232
    %633 = vmatpush.msra.mxu0 %v228
    %634 = vmatpush.msra.mxu0 %v224
    %635 = vmatpush.msra.mxu0 %v220
    %636 = vmatpush.msra.mxu0 %v216
    %637 = vmatpush.msra.mxu0 %v212
    %638 = vmatpush.msra.mxu0 %v208
    %639 = vmatmul.f32.gmra.mxu0 %v601
    %v640 = vpop.f32.mrf.mxu0
    %v641 = vadd.f32 0.0, %v640
    %642 = vdwg.mxu0
    %643 = vmatpush.msra.mxu0 %v269
    %644 = vmatpush.msra.mxu0 %v265
    %645 = vmatpush.msra.mxu0 %v261
    %646 = vmatpush.msra.mxu0 %v257
    %647 = vmatpush.msra.mxu0 %v253
    %648 = vmatpush.msra.mxu0 %v249
    %649 = vmatpush.msra.mxu0 %v245
    %650 = vmatpush.msra.mxu0 %v241
    %651 = vmatpush.msra.mxu0 %v237
    %652 = vmatpush.msra.mxu0 %v233
    %653 = vmatpush.msra.mxu0 %v229
    %654 = vmatpush.msra.mxu0 %v225
    %655 = vmatpush.msra.mxu0 %v221
    %656 = vmatpush.msra.mxu0 %v217
    %657 = vmatpush.msra.mxu0 %v213
    %658 = vmatpush.msra.mxu0 %v209
    %659 = vmatmul.f32.gmra.mxu0 %v601
    %v660 = vpop.f32.mrf.mxu0
    %v661 = vadd.f32 0.0, %v660
    %662 = vdwg.mxu0
    %663 = vmatpush.msra.mxu0 %v270
    %664 = vmatpush.msra.mxu0 %v266
    %665 = vmatpush.msra.mxu0 %v262
    %666 = vmatpush.msra.mxu0 %v258
    %667 = vmatpush.msra.mxu0 %v254
    %668 = vmatpush.msra.mxu0 %v250
    %669 = vmatpush.msra.mxu0 %v246
    %670 = vmatpush.msra.mxu0 %v242
    %671 = vmatpush.msra.mxu0 %v238
    %672 = vmatpush.msra.mxu0 %v234
    %673 = vmatpush.msra.mxu0 %v230
    %674 = vmatpush.msra.mxu0 %v226
    %675 = vmatpush.msra.mxu0 %v222
    %676 = vmatpush.msra.mxu0 %v218
    %677 = vmatpush.msra.mxu0 %v214
    %678 = vmatpush.msra.mxu0 %v210
    %679 = vmatmul.f32.gmra.mxu0 %v601
    %v680 = vpop.f32.mrf.mxu0
    %v681 = vadd.f32 0.0, %v680
    %682 = vdwg.mxu0
    %v683 = vadd.f32 %v310, %v621
    %v684 = vadd.f32 %v351, %v641
    %v685 = vadd.f32 %v392, %v661
    %v686 = vadd.f32 %v433, %v681
    %v687 = vxor.u32 %v683, 2147483648
    %v688 = vmul.f32 %v687, 1.442695
    %v689 = vpow.pop %v688
    %v690 = vadd.f32 %v689, 1.0
    %v691 = vrcp.pop %v690
    %v692 = vmul.f32 %v690, %v691
    %v693 = vsub.f32 1.0, %v692
    %v694 = vmul.f32 %v691, %v693
    %v695 = vadd.f32 %v691, %v694
    %vm696 = vweird.f32 %v690
    %vm697 = vweird.f32 %v691
    %vm698 = vmor %vm696, %vm697
    %v699 = vsel %vm698, %v691, %v695
    %v700 = vand.u32 2147483647, %v690
    %vm701 = vcmp.eq.f32.partialorder %v700, 8.507059e+37
    %v702 = vand.u32 %v690, 2147483648
    %v703 = vor.u32 1.1754944e-38, %v702
    %v704 = vsel %vm701, %v703, %v699
    %v705 = vmul.f32 1.0, %v704
    %v706 = vxor.u32 %v684, 2147483648
    %v707 = vmul.f32 %v706, 1.442695
    %v708 = vpow.pop %v707
    %v709 = vadd.f32 %v708, 1.0
    %v710 = vrcp.pop %v709
    %v711 = vmul.f32 %v709, %v710
    %v712 = vsub.f32 1.0, %v711
    %v713 = vmul.f32 %v710, %v712
    %v714 = vadd.f32 %v710, %v713
    %vm715 = vweird.f32 %v709
    %vm716 = vweird.f32 %v710
    %vm717 = vmor %vm715, %vm716
    %v718 = vsel %vm717, %v710, %v714
    %v719 = vand.u32 2147483647, %v709
    %vm720 = vcmp.eq.f32.partialorder %v719, 8.507059e+37
    %v721 = vand.u32 %v709, 2147483648
    %v722 = vor.u32 1.1754944e-38, %v721
    %v723 = vsel %vm720, %v722, %v718
    %v724 = vmul.f32 1.0, %v723
    %v725 = vtanh.pop %v685
    %v726 = vxor.u32 %v686, 2147483648
    %v727 = vmul.f32 %v726, 1.442695
    %v728 = vpow.pop %v727
    %v729 = vadd.f32 %v728, 1.0
    %v730 = vrcp.pop %v729
    %v731 = vmul.f32 %v729, %v730
    %v732 = vsub.f32 1.0, %v731
    %v733 = vmul.f32 %v730, %v732
    %v734 = vadd.f32 %v730, %v733
    %vm735 = vweird.f32 %v729
    %vm736 = vweird.f32 %v730
    %vm737 = vmor %vm735, %vm736
    %v738 = vsel %vm737, %v730, %v734
    %v739 = vand.u32 2147483647, %v729
    %vm740 = vcmp.eq.f32.partialorder %v739, 8.507059e+37
    %v741 = vand.u32 %v729, 2147483648
    %v742 = vor.u32 1.1754944e-38, %v741
    %v743 = vsel %vm740, %v742, %v738
    %v744 = vmul.f32 1.0, %v743
    %v745 = vmul.f32 %v724, %v599
    %v746 = vmul.f32 %v705, %v725
    %v747 = vadd.f32 %v745, %v746
    %v748 = vtanh.pop %v747
    %v749 = vmul.f32 %v744, %v748
    %750 = vst [vmem:[#allocation2 + $0x8] sm:$0xff] %v749
    %751 = vmatpush.msra.mxu0 %v267
    %752 = vmatpush.msra.mxu0 %v263
    %753 = vmatpush.msra.mxu0 %v259
    %754 = vmatpush.msra.mxu0 %v255
    %755 = vmatpush.msra.mxu0 %v251
    %756 = vmatpush.msra.mxu0 %v247
    %757 = vmatpush.msra.mxu0 %v243
    %758 = vmatpush.msra.mxu0 %v239
    %759 = vmatpush.msra.mxu0 %v235
    %760 = vmatpush.msra.mxu0 %v231
    %761 = vmatpush.msra.mxu0 %v227
    %762 = vmatpush.msra.mxu0 %v223
    %763 = vmatpush.msra.mxu0 %v219
    %764 = vmatpush.msra.mxu0 %v215
    %765 = vmatpush.msra.mxu0 %v211
    %766 = vmatpush.msra.mxu0 %v207
    %767 = vmatmul.f32.gmra.mxu0 %v749
    %v768 = vpop.f32.mrf.mxu0
    %v769 = vadd.f32 0.0, %v768
    %770 = vdwg.mxu0
    %771 = vmatpush.msra.mxu0 %v268
    %772 = vmatpush.msra.mxu0 %v264
    %773 = vmatpush.msra.mxu0 %v260
    %774 = vmatpush.msra.mxu0 %v256
    %775 = vmatpush.msra.mxu0 %v252
    %776 = vmatpush.msra.mxu0 %v248
    %777 = vmatpush.msra.mxu0 %v244
    %778 = vmatpush.msra.mxu0 %v240
    %779 = vmatpush.msra.mxu0 %v236
    %780 = vmatpush.msra.mxu0 %v232
    %781 = vmatpush.msra.mxu0 %v228
    %782 = vmatpush.msra.mxu0 %v224
    %783 = vmatpush.msra.mxu0 %v220
    %784 = vmatpush.msra.mxu0 %v216
    %785 = vmatpush.msra.mxu0 %v212
    %786 = vmatpush.msra.mxu0 %v208
    %787 = vmatmul.f32.gmra.mxu0 %v749
    %v788 = vpop.f32.mrf.mxu0
    %v789 = vadd.f32 0.0, %v788
    %790 = vdwg.mxu0
    %791 = vmatpush.msra.mxu0 %v269
    %792 = vmatpush.msra.mxu0 %v265
    %793 = vmatpush.msra.mxu0 %v261
    %794 = vmatpush.msra.mxu0 %v257
    %795 = vmatpush.msra.mxu0 %v253
    %796 = vmatpush.msra.mxu0 %v249
    %797 = vmatpush.msra.mxu0 %v245
    %798 = vmatpush.msra.mxu0 %v241
    %799 = vmatpush.msra.mxu0 %v237
    %800 = vmatpush.msra.mxu0 %v233
    %801 = vmatpush.msra.mxu0 %v229
    %802 = vmatpush.msra.mxu0 %v225
    %803 = vmatpush.msra.mxu0 %v221
    %804 = vmatpush.msra.mxu0 %v217
    %805 = vmatpush.msra.mxu0 %v213
    %806 = vmatpush.msra.mxu0 %v209
    %807 = vmatmul.f32.gmra.mxu0 %v749
    %v808 = vpop.f32.mrf.mxu0
    %v809 = vadd.f32 0.0, %v808
    %810 = vdwg.mxu0
    %811 = vmatpush.msra.mxu0 %v270
    %812 = vmatpush.msra.mxu0 %v266
    %813 = vmatpush.msra.mxu0 %v262
    %814 = vmatpush.msra.mxu0 %v258
    %815 = vmatpush.msra.mxu0 %v254
    %816 = vmatpush.msra.mxu0 %v250
    %817 = vmatpush.msra.mxu0 %v246
    %818 = vmatpush.msra.mxu0 %v242
    %819 = vmatpush.msra.mxu0 %v238
    %820 = vmatpush.msra.mxu0 %v234
    %821 = vmatpush.msra.mxu0 %v230
    %822 = vmatpush.msra.mxu0 %v226
    %823 = vmatpush.msra.mxu0 %v222
    %824 = vmatpush.msra.mxu0 %v218
    %825 = vmatpush.msra.mxu0 %v214
    %826 = vmatpush.msra.mxu0 %v210
    %827 = vmatmul.f32.gmra.mxu0 %v749
    %v828 = vpop.f32.mrf.mxu0
    %v829 = vadd.f32 0.0, %v828
    %830 = vdwg.mxu0
    %v831 = vadd.f32 %v313, %v769
    %v832 = vadd.f32 %v354, %v789
    %v833 = vadd.f32 %v395, %v809
    %v834 = vadd.f32 %v436, %v829
    %v835 = vxor.u32 %v831, 2147483648
    %v836 = vmul.f32 %v835, 1.442695
    %v837 = vpow.pop %v836
    %v838 = vadd.f32 %v837, 1.0
    %v839 = vrcp.pop %v838
    %v840 = vmul.f32 %v838, %v839
    %v841 = vsub.f32 1.0, %v840
    %v842 = vmul.f32 %v839, %v841
    %v843 = vadd.f32 %v839, %v842
    %vm844 = vweird.f32 %v838
    %vm845 = vweird.f32 %v839
    %vm846 = vmor %vm844, %vm845
    %v847 = vsel %vm846, %v839, %v843
    %v848 = vand.u32 2147483647, %v838
    %vm849 = vcmp.eq.f32.partialorder %v848, 8.507059e+37
    %v850 = vand.u32 %v838, 2147483648
    %v851 = vor.u32 1.1754944e-38, %v850
    %v852 = vsel %vm849, %v851, %v847
    %v853 = vmul.f32 1.0, %v852
    %v854 = vxor.u32 %v832, 2147483648
    %v855 = vmul.f32 %v854, 1.442695
    %v856 = vpow.pop %v855
    %v857 = vadd.f32 %v856, 1.0
    %v858 = vrcp.pop %v857
    %v859 = vmul.f32 %v857, %v858
    %v860 = vsub.f32 1.0, %v859
    %v861 = vmul.f32 %v858, %v860
    %v862 = vadd.f32 %v858, %v861
    %vm863 = vweird.f32 %v857
    %vm864 = vweird.f32 %v858
    %vm865 = vmor %vm863, %vm864
    %v866 = vsel %vm865, %v858, %v862
    %v867 = vand.u32 2147483647, %v857
    %vm868 = vcmp.eq.f32.partialorder %v867, 8.507059e+37
    %v869 = vand.u32 %v857, 2147483648
    %v870 = vor.u32 1.1754944e-38, %v869
    %v871 = vsel %vm868, %v870, %v866
    %v872 = vmul.f32 1.0, %v871
    %v873 = vtanh.pop %v833
    %v874 = vxor.u32 %v834, 2147483648
    %v875 = vmul.f32 %v874, 1.442695
    %v876 = vpow.pop %v875
    %v877 = vadd.f32 %v876, 1.0
    %v878 = vrcp.pop %v877
    %v879 = vmul.f32 %v877, %v878
    %v880 = vsub.f32 1.0, %v879
    %v881 = vmul.f32 %v878, %v880
    %v882 = vadd.f32 %v878, %v881
    %vm883 = vweird.f32 %v877
    %vm884 = vweird.f32 %v878
    %vm885 = vmor %vm883, %vm884
    %v886 = vsel %vm885, %v878, %v882
    %v887 = vand.u32 2147483647, %v877
    %vm888 = vcmp.eq.f32.partialorder %v887, 8.507059e+37
    %v889 = vand.u32 %v877, 2147483648
    %v890 = vor.u32 1.1754944e-38, %v889
    %v891 = vsel %vm888, %v890, %v886
    %v892 = vmul.f32 1.0, %v891
    %v893 = vmul.f32 %v872, %v747
    %v894 = vmul.f32 %v853, %v873
    %v895 = vadd.f32 %v893, %v894
    %v896 = vtanh.pop %v895
    %v897 = vmul.f32 %v892, %v896
    %898 = vst [vmem:[#allocation2 + $0x10] sm:$0xff] %v897
    %899 = vmatpush.msra.mxu0 %v267
    %900 = vmatpush.msra.mxu0 %v263
    %901 = vmatpush.msra.mxu0 %v259
    %902 = vmatpush.msra.mxu0 %v255
    %903 = vmatpush.msra.mxu0 %v251
    %904 = vmatpush.msra.mxu0 %v247
    %905 = vmatpush.msra.mxu0 %v243
    %906 = vmatpush.msra.mxu0 %v239
    %907 = vmatpush.msra.mxu0 %v235
    %908 = vmatpush.msra.mxu0 %v231
    %909 = vmatpush.msra.mxu0 %v227
    %910 = vmatpush.msra.mxu0 %v223
    %911 = vmatpush.msra.mxu0 %v219
    %912 = vmatpush.msra.mxu0 %v215
    %913 = vmatpush.msra.mxu0 %v211
    %914 = vmatpush.msra.mxu0 %v207
    %915 = vmatmul.f32.gmra.mxu0 %v897
    %v916 = vpop.f32.mrf.mxu0
    %v917 = vadd.f32 0.0, %v916
    %918 = vdwg.mxu0
    %919 = vmatpush.msra.mxu0 %v268
    %920 = vmatpush.msra.mxu0 %v264
    %921 = vmatpush.msra.mxu0 %v260
    %922 = vmatpush.msra.mxu0 %v256
    %923 = vmatpush.msra.mxu0 %v252
    %924 = vmatpush.msra.mxu0 %v248
    %925 = vmatpush.msra.mxu0 %v244
    %926 = vmatpush.msra.mxu0 %v240
    %927 = vmatpush.msra.mxu0 %v236
    %928 = vmatpush.msra.mxu0 %v232
    %929 = vmatpush.msra.mxu0 %v228
    %930 = vmatpush.msra.mxu0 %v224
    %931 = vmatpush.msra.mxu0 %v220
    %932 = vmatpush.msra.mxu0 %v216
    %933 = vmatpush.msra.mxu0 %v212
    %934 = vmatpush.msra.mxu0 %v208
    %935 = vmatmul.f32.gmra.mxu0 %v897
    %v936 = vpop.f32.mrf.mxu0
    %v937 = vadd.f32 0.0, %v936
    %938 = vdwg.mxu0
    %939 = vmatpush.msra.mxu0 %v269
    %940 = vmatpush.msra.mxu0 %v265
    %941 = vmatpush.msra.mxu0 %v261
    %942 = vmatpush.msra.mxu0 %v257
    %943 = vmatpush.msra.mxu0 %v253
    %944 = vmatpush.msra.mxu0 %v249
    %945 = vmatpush.msra.mxu0 %v245
    %946 = vmatpush.msra.mxu0 %v241
    %947 = vmatpush.msra.mxu0 %v237
    %948 = vmatpush.msra.mxu0 %v233
    %949 = vmatpush.msra.mxu0 %v229
    %950 = vmatpush.msra.mxu0 %v225
    %951 = vmatpush.msra.mxu0 %v221
    %952 = vmatpush.msra.mxu0 %v217
    %953 = vmatpush.msra.mxu0 %v213
    %954 = vmatpush.msra.mxu0 %v209
    %955 = vmatmul.f32.gmra.mxu0 %v897
    %v956 = vpop.f32.mrf.mxu0
    %v957 = vadd.f32 0.0, %v956
    %958 = vdwg.mxu0
    %959 = vmatpush.msra.mxu0 %v270
    %960 = vmatpush.msra.mxu0 %v266
    %961 = vmatpush.msra.mxu0 %v262
    %962 = vmatpush.msra.mxu0 %v258
    %963 = vmatpush.msra.mxu0 %v254
    %964 = vmatpush.msra.mxu0 %v250
    %965 = vmatpush.msra.mxu0 %v246
    %966 = vmatpush.msra.mxu0 %v242
    %967 = vmatpush.msra.mxu0 %v238
    %968 = vmatpush.msra.mxu0 %v234
    %969 = vmatpush.msra.mxu0 %v230
    %970 = vmatpush.msra.mxu0 %v226
    %971 = vmatpush.msra.mxu0 %v222
    %972 = vmatpush.msra.mxu0 %v218
    %973 = vmatpush.msra.mxu0 %v214
    %974 = vmatpush.msra.mxu0 %v210
    %975 = vmatmul.f32.gmra.mxu0 %v897
    %v976 = vpop.f32.mrf.mxu0
    %v977 = vadd.f32 0.0, %v976
    %978 = vdwg.mxu0
    %v979 = vadd.f32 %v316, %v917
    %v980 = vadd.f32 %v357, %v937
    %v981 = vadd.f32 %v398, %v957
    %v982 = vadd.f32 %v439, %v977
    %v983 = vxor.u32 %v979, 2147483648
    %v984 = vmul.f32 %v983, 1.442695
    %v985 = vpow.pop %v984
    %v986 = vadd.f32 %v985, 1.0
    %v987 = vrcp.pop %v986
    %v988 = vmul.f32 %v986, %v987
    %v989 = vsub.f32 1.0, %v988
    %v990 = vmul.f32 %v987, %v989
    %v991 = vadd.f32 %v987, %v990
    %vm992 = vweird.f32 %v986
    %vm993 = vweird.f32 %v987
    %vm994 = vmor %vm992, %vm993
    %v995 = vsel %vm994, %v987, %v991
    %v996 = vand.u32 2147483647, %v986
    %vm997 = vcmp.eq.f32.partialorder %v996, 8.507059e+37
    %v998 = vand.u32 %v986, 2147483648
    %v999 = vor.u32 1.1754944e-38, %v998
    %v1000 = vsel %vm997, %v999, %v995
    %v1001 = vmul.f32 1.0, %v1000
    %v1002 = vxor.u32 %v980, 2147483648
    %v1003 = vmul.f32 %v1002, 1.442695
    %v1004 = vpow.pop %v1003
    %v1005 = vadd.f32 %v1004, 1.0
    %v1006 = vrcp.pop %v1005
    %v1007 = vmul.f32 %v1005, %v1006
    %v1008 = vsub.f32 1.0, %v1007
    %v1009 = vmul.f32 %v1006, %v1008
    %v1010 = vadd.f32 %v1006, %v1009
    %vm1011 = vweird.f32 %v1005
    %vm1012 = vweird.f32 %v1006
    %vm1013 = vmor %vm1011, %vm1012
    %v1014 = vsel %vm1013, %v1006, %v1010
    %v1015 = vand.u32 2147483647, %v1005
    %vm1016 = vcmp.eq.f32.partialorder %v1015, 8.507059e+37
    %v1017 = vand.u32 %v1005, 2147483648
    %v1018 = vor.u32 1.1754944e-38, %v1017
    %v1019 = vsel %vm1016, %v1018, %v1014
    %v1020 = vmul.f32 1.0, %v1019
    %v1021 = vtanh.pop %v981
    %v1022 = vxor.u32 %v982, 2147483648
    %v1023 = vmul.f32 %v1022, 1.442695
    %v1024 = vpow.pop %v1023
    %v1025 = vadd.f32 %v1024, 1.0
    %v1026 = vrcp.pop %v1025
    %v1027 = vmul.f32 %v1025, %v1026
    %v1028 = vsub.f32 1.0, %v1027
    %v1029 = vmul.f32 %v1026, %v1028
    %v1030 = vadd.f32 %v1026, %v1029
    %vm1031 = vweird.f32 %v1025
    %vm1032 = vweird.f32 %v1026
    %vm1033 = vmor %vm1031, %vm1032
    %v1034 = vsel %vm1033, %v1026, %v1030
    %v1035 = vand.u32 2147483647, %v1025
    %vm1036 = vcmp.eq.f32.partialorder %v1035, 8.507059e+37
    %v1037 = vand.u32 %v1025, 2147483648
    %v1038 = vor.u32 1.1754944e-38, %v1037
    %v1039 = vsel %vm1036, %v1038, %v1034
    %v1040 = vmul.f32 1.0, %v1039
    %v1041 = vmul.f32 %v1020, %v895
    %v1042 = vmul.f32 %v1001, %v1021
    %v1043 = vadd.f32 %v1041, %v1042
    %v1044 = vtanh.pop %v1043
    %v1045 = vmul.f32 %v1040, %v1044
    %1046 = vst [vmem:[#allocation2 + $0x18] sm:$0xff] %v1045
    %1047 = vmatpush.msra.mxu0 %v267
    %1048 = vmatpush.msra.mxu0 %v263
    %1049 = vmatpush.msra.mxu0 %v259
    %1050 = vmatpush.msra.mxu0 %v255
    %1051 = vmatpush.msra.mxu0 %v251
    %1052 = vmatpush.msra.mxu0 %v247
    %1053 = vmatpush.msra.mxu0 %v243
    %1054 = vmatpush.msra.mxu0 %v239
    %1055 = vmatpush.msra.mxu0 %v235
    %1056 = vmatpush.msra.mxu0 %v231
    %1057 = vmatpush.msra.mxu0 %v227
    %1058 = vmatpush.msra.mxu0 %v223
    %1059 = vmatpush.msra.mxu0 %v219
    %1060 = vmatpush.msra.mxu0 %v215
    %1061 = vmatpush.msra.mxu0 %v211
    %1062 = vmatpush.msra.mxu0 %v207
    %1063 = vmatmul.f32.gmra.mxu0 %v1045
    %v1064 = vpop.f32.mrf.mxu0
    %v1065 = vadd.f32 0.0, %v1064
    %1066 = vdwg.mxu0
    %1067 = vmatpush.msra.mxu0 %v268
    %1068 = vmatpush.msra.mxu0 %v264
    %1069 = vmatpush.msra.mxu0 %v260
    %1070 = vmatpush.msra.mxu0 %v256
    %1071 = vmatpush.msra.mxu0 %v252
    %1072 = vmatpush.msra.mxu0 %v248
    %1073 = vmatpush.msra.mxu0 %v244
    %1074 = vmatpush.msra.mxu0 %v240
    %1075 = vmatpush.msra.mxu0 %v236
    %1076 = vmatpush.msra.mxu0 %v232
    %1077 = vmatpush.msra.mxu0 %v228
    %1078 = vmatpush.msra.mxu0 %v224
    %1079 = vmatpush.msra.mxu0 %v220
    %1080 = vmatpush.msra.mxu0 %v216
    %1081 = vmatpush.msra.mxu0 %v212
    %1082 = vmatpush.msra.mxu0 %v208
    %1083 = vmatmul.f32.gmra.mxu0 %v1045
    %v1084 = vpop.f32.mrf.mxu0
    %v1085 = vadd.f32 0.0, %v1084
    %1086 = vdwg.mxu0
    %1087 = vmatpush.msra.mxu0 %v269
    %1088 = vmatpush.msra.mxu0 %v265
    %1089 = vmatpush.msra.mxu0 %v261
    %1090 = vmatpush.msra.mxu0 %v257
    %1091 = vmatpush.msra.mxu0 %v253
    %1092 = vmatpush.msra.mxu0 %v249
    %1093 = vmatpush.msra.mxu0 %v245
    %1094 = vmatpush.msra.mxu0 %v241
    %1095 = vmatpush.msra.mxu0 %v237
    %1096 = vmatpush.msra.mxu0 %v233
    %1097 = vmatpush.msra.mxu0 %v229
    %1098 = vmatpush.msra.mxu0 %v225
    %1099 = vmatpush.msra.mxu0 %v221
    %1100 = vmatpush.msra.mxu0 %v217
    %1101 = vmatpush.msra.mxu0 %v213
    %1102 = vmatpush.msra.mxu0 %v209
    %1103 = vmatmul.f32.gmra.mxu0 %v1045
    %v1104 = vpop.f32.mrf.mxu0
    %v1105 = vadd.f32 0.0, %v1104
    %1106 = vdwg.mxu0
    %1107 = vmatpush.msra.mxu0 %v270
    %1108 = vmatpush.msra.mxu0 %v266
    %1109 = vmatpush.msra.mxu0 %v262
    %1110 = vmatpush.msra.mxu0 %v258
    %1111 = vmatpush.msra.mxu0 %v254
    %1112 = vmatpush.msra.mxu0 %v250
    %1113 = vmatpush.msra.mxu0 %v246
    %1114 = vmatpush.msra.mxu0 %v242
    %1115 = vmatpush.msra.mxu0 %v238
    %1116 = vmatpush.msra.mxu0 %v234
    %1117 = vmatpush.msra.mxu0 %v230
    %1118 = vmatpush.msra.mxu0 %v226
    %1119 = vmatpush.msra.mxu0 %v222
    %1120 = vmatpush.msra.mxu0 %v218
    %1121 = vmatpush.msra.mxu0 %v214
    %1122 = vmatpush.msra.mxu0 %v210
    %1123 = vmatmul.f32.gmra.mxu0 %v1045
    %v1124 = vpop.f32.mrf.mxu0
    %v1125 = vadd.f32 0.0, %v1124
    %1126 = vdwg.mxu0
    %v1127 = vadd.f32 %v319, %v1065
    %v1128 = vadd.f32 %v360, %v1085
    %v1129 = vadd.f32 %v401, %v1105
    %v1130 = vadd.f32 %v442, %v1125
    %v1131 = vxor.u32 %v1127, 2147483648
    %v1132 = vmul.f32 %v1131, 1.442695
    %v1133 = vpow.pop %v1132
    %v1134 = vadd.f32 %v1133, 1.0
    %v1135 = vrcp.pop %v1134
    %v1136 = vmul.f32 %v1134, %v1135
    %v1137 = vsub.f32 1.0, %v1136
    %v1138 = vmul.f32 %v1135, %v1137
    %v1139 = vadd.f32 %v1135, %v1138
    %vm1140 = vweird.f32 %v1134
    %vm1141 = vweird.f32 %v1135
    %vm1142 = vmor %vm1140, %vm1141
    %v1143 = vsel %vm1142, %v1135, %v1139
    %v1144 = vand.u32 2147483647, %v1134
    %vm1145 = vcmp.eq.f32.partialorder %v1144, 8.507059e+37
    %v1146 = vand.u32 %v1134, 2147483648
    %v1147 = vor.u32 1.1754944e-38, %v1146
    %v1148 = vsel %vm1145, %v1147, %v1143
    %v1149 = vmul.f32 1.0, %v1148
    %v1150 = vxor.u32 %v1128, 2147483648
    %v1151 = vmul.f32 %v1150, 1.442695
    %v1152 = vpow.pop %v1151
    %v1153 = vadd.f32 %v1152, 1.0
    %v1154 = vrcp.pop %v1153
    %v1155 = vmul.f32 %v1153, %v1154
    %v1156 = vsub.f32 1.0, %v1155
    %v1157 = vmul.f32 %v1154, %v1156
    %v1158 = vadd.f32 %v1154, %v1157
    %vm1159 = vweird.f32 %v1153
    %vm1160 = vweird.f32 %v1154
    %vm1161 = vmor %vm1159, %vm1160
    %v1162 = vsel %vm1161, %v1154, %v1158
    %v1163 = vand.u32 2147483647, %v1153
    %vm1164 = vcmp.eq.f32.partialorder %v1163, 8.507059e+37
    %v1165 = vand.u32 %v1153, 2147483648
    %v1166 = vor.u32 1.1754944e-38, %v1165
    %v1167 = vsel %vm1164, %v1166, %v1162
    %v1168 = vmul.f32 1.0, %v1167
    %v1169 = vtanh.pop %v1129
    %v1170 = vxor.u32 %v1130, 2147483648
    %v1171 = vmul.f32 %v1170, 1.442695
    %v1172 = vpow.pop %v1171
    %v1173 = vadd.f32 %v1172, 1.0
    %v1174 = vrcp.pop %v1173
    %v1175 = vmul.f32 %v1173, %v1174
    %v1176 = vsub.f32 1.0, %v1175
    %v1177 = vmul.f32 %v1174, %v1176
    %v1178 = vadd.f32 %v1174, %v1177
    %vm1179 = vweird.f32 %v1173
    %vm1180 = vweird.f32 %v1174
    %vm1181 = vmor %vm1179, %vm1180
    %v1182 = vsel %vm1181, %v1174, %v1178
    %v1183 = vand.u32 2147483647, %v1173
    %vm1184 = vcmp.eq.f32.partialorder %v1183, 8.507059e+37
    %v1185 = vand.u32 %v1173, 2147483648
    %v1186 = vor.u32 1.1754944e-38, %v1185
    %v1187 = vsel %vm1184, %v1186, %v1182
    %v1188 = vmul.f32 1.0, %v1187
    %v1189 = vmul.f32 %v1168, %v1043
    %v1190 = vmul.f32 %v1149, %v1169
    %v1191 = vadd.f32 %v1189, %v1190
    %v1192 = vtanh.pop %v1191
    %v1193 = vmul.f32 %v1188, %v1192
    %1194 = vst [vmem:[#allocation2 + $0x20] sm:$0xff] %v1193
    %1195 = vmatpush.msra.mxu0 %v267
    %1196 = vmatpush.msra.mxu0 %v263
    %1197 = vmatpush.msra.mxu0 %v259
    %1198 = vmatpush.msra.mxu0 %v255
    %1199 = vmatpush.msra.mxu0 %v251
    %1200 = vmatpush.msra.mxu0 %v247
    %1201 = vmatpush.msra.mxu0 %v243
    %1202 = vmatpush.msra.mxu0 %v239
    %1203 = vmatpush.msra.mxu0 %v235
    %1204 = vmatpush.msra.mxu0 %v231
    %1205 = vmatpush.msra.mxu0 %v227
    %1206 = vmatpush.msra.mxu0 %v223
    %1207 = vmatpush.msra.mxu0 %v219
    %1208 = vmatpush.msra.mxu0 %v215
    %1209 = vmatpush.msra.mxu0 %v211
    %1210 = vmatpush.msra.mxu0 %v207
    %1211 = vmatmul.f32.gmra.mxu0 %v1193
    %v1212 = vpop.f32.mrf.mxu0
    %v1213 = vadd.f32 0.0, %v1212
    %1214 = vdwg.mxu0
    %1215 = vmatpush.msra.mxu0 %v268
    %1216 = vmatpush.msra.mxu0 %v264
    %1217 = vmatpush.msra.mxu0 %v260
    %1218 = vmatpush.msra.mxu0 %v256
    %1219 = vmatpush.msra.mxu0 %v252
    %1220 = vmatpush.msra.mxu0 %v248
    %1221 = vmatpush.msra.mxu0 %v244
    %1222 = vmatpush.msra.mxu0 %v240
    %1223 = vmatpush.msra.mxu0 %v236
    %1224 = vmatpush.msra.mxu0 %v232
    %1225 = vmatpush.msra.mxu0 %v228
    %1226 = vmatpush.msra.mxu0 %v224
    %1227 = vmatpush.msra.mxu0 %v220
    %1228 = vmatpush.msra.mxu0 %v216
    %1229 = vmatpush.msra.mxu0 %v212
    %1230 = vmatpush.msra.mxu0 %v208
    %1231 = vmatmul.f32.gmra.mxu0 %v1193
    %v1232 = vpop.f32.mrf.mxu0
    %v1233 = vadd.f32 0.0, %v1232
    %1234 = vdwg.mxu0
    %1235 = vmatpush.msra.mxu0 %v269
    %1236 = vmatpush.msra.mxu0 %v265
    %1237 = vmatpush.msra.mxu0 %v261
    %1238 = vmatpush.msra.mxu0 %v257
    %1239 = vmatpush.msra.mxu0 %v253
    %1240 = vmatpush.msra.mxu0 %v249
    %1241 = vmatpush.msra.mxu0 %v245
    %1242 = vmatpush.msra.mxu0 %v241
    %1243 = vmatpush.msra.mxu0 %v237
    %1244 = vmatpush.msra.mxu0 %v233
    %1245 = vmatpush.msra.mxu0 %v229
    %1246 = vmatpush.msra.mxu0 %v225
    %1247 = vmatpush.msra.mxu0 %v221
    %1248 = vmatpush.msra.mxu0 %v217
    %1249 = vmatpush.msra.mxu0 %v213
    %1250 = vmatpush.msra.mxu0 %v209
    %1251 = vmatmul.f32.gmra.mxu0 %v1193
    %v1252 = vpop.f32.mrf.mxu0
    %v1253 = vadd.f32 0.0, %v1252
    %1254 = vdwg.mxu0
    %1255 = vmatpush.msra.mxu0 %v270
    %1256 = vmatpush.msra.mxu0 %v266
    %1257 = vmatpush.msra.mxu0 %v262
    %1258 = vmatpush.msra.mxu0 %v258
    %1259 = vmatpush.msra.mxu0 %v254
    %1260 = vmatpush.msra.mxu0 %v250
    %1261 = vmatpush.msra.mxu0 %v246
    %1262 = vmatpush.msra.mxu0 %v242
    %1263 = vmatpush.msra.mxu0 %v238
    %1264 = vmatpush.msra.mxu0 %v234
    %1265 = vmatpush.msra.mxu0 %v230
    %1266 = vmatpush.msra.mxu0 %v226
    %1267 = vmatpush.msra.mxu0 %v222
    %1268 = vmatpush.msra.mxu0 %v218
    %1269 = vmatpush.msra.mxu0 %v214
    %1270 = vmatpush.msra.mxu0 %v210
    %1271 = vmatmul.f32.gmra.mxu0 %v1193
    %v1272 = vpop.f32.mrf.mxu0
    %v1273 = vadd.f32 0.0, %v1272
    %1274 = vdwg.mxu0
    %v1275 = vadd.f32 %v322, %v1213
    %v1276 = vadd.f32 %v363, %v1233
    %v1277 = vadd.f32 %v404, %v1253
    %v1278 = vadd.f32 %v445, %v1273
    %v1279 = vxor.u32 %v1275, 2147483648
    %v1280 = vmul.f32 %v1279, 1.442695
    %v1281 = vpow.pop %v1280
    %v1282 = vadd.f32 %v1281, 1.0
    %v1283 = vrcp.pop %v1282
    %v1284 = vmul.f32 %v1282, %v1283
    %v1285 = vsub.f32 1.0, %v1284
    %v1286 = vmul.f32 %v1283, %v1285
    %v1287 = vadd.f32 %v1283, %v1286
    %vm1288 = vweird.f32 %v1282
    %vm1289 = vweird.f32 %v1283
    %vm1290 = vmor %vm1288, %vm1289
    %v1291 = vsel %vm1290, %v1283, %v1287
    %v1292 = vand.u32 2147483647, %v1282
    %vm1293 = vcmp.eq.f32.partialorder %v1292, 8.507059e+37
    %v1294 = vand.u32 %v1282, 2147483648
    %v1295 = vor.u32 1.1754944e-38, %v1294
    %v1296 = vsel %vm1293, %v1295, %v1291
    %v1297 = vmul.f32 1.0, %v1296
    %v1298 = vxor.u32 %v1276, 2147483648
    %v1299 = vmul.f32 %v1298, 1.442695
    %v1300 = vpow.pop %v1299
    %v1301 = vadd.f32 %v1300, 1.0
    %v1302 = vrcp.pop %v1301
    %v1303 = vmul.f32 %v1301, %v1302
    %v1304 = vsub.f32 1.0, %v1303
    %v1305 = vmul.f32 %v1302, %v1304
    %v1306 = vadd.f32 %v1302, %v1305
    %vm1307 = vweird.f32 %v1301
    %vm1308 = vweird.f32 %v1302
    %vm1309 = vmor %vm1307, %vm1308
    %v1310 = vsel %vm1309, %v1302, %v1306
    %v1311 = vand.u32 2147483647, %v1301
    %vm1312 = vcmp.eq.f32.partialorder %v1311, 8.507059e+37
    %v1313 = vand.u32 %v1301, 2147483648
    %v1314 = vor.u32 1.1754944e-38, %v1313
    %v1315 = vsel %vm1312, %v1314, %v1310
    %v1316 = vmul.f32 1.0, %v1315
    %v1317 = vtanh.pop %v1277
    %v1318 = vxor.u32 %v1278, 2147483648
    %v1319 = vmul.f32 %v1318, 1.442695
    %v1320 = vpow.pop %v1319
    %v1321 = vadd.f32 %v1320, 1.0
    %v1322 = vrcp.pop %v1321
    %v1323 = vmul.f32 %v1321, %v1322
    %v1324 = vsub.f32 1.0, %v1323
    %v1325 = vmul.f32 %v1322, %v1324
    %v1326 = vadd.f32 %v1322, %v1325
    %vm1327 = vweird.f32 %v1321
    %vm1328 = vweird.f32 %v1322
    %vm1329 = vmor %vm1327, %vm1328
    %v1330 = vsel %vm1329, %v1322, %v1326
    %v1331 = vand.u32 2147483647, %v1321
    %vm1332 = vcmp.eq.f32.partialorder %v1331, 8.507059e+37
    %v1333 = vand.u32 %v1321, 2147483648
    %v1334 = vor.u32 1.1754944e-38, %v1333
    %v1335 = vsel %vm1332, %v1334, %v1330
    %v1336 = vmul.f32 1.0, %v1335
    %v1337 = vmul.f32 %v1316, %v1191
    %v1338 = vmul.f32 %v1297, %v1317
    %v1339 = vadd.f32 %v1337, %v1338
    %v1340 = vtanh.pop %v1339
    %v1341 = vmul.f32 %v1336, %v1340
    %1342 = vst [vmem:[#allocation2 + $0x28] sm:$0xff] %v1341
    %1343 = vmatpush.msra.mxu0 %v267
    %1344 = vmatpush.msra.mxu0 %v263
    %1345 = vmatpush.msra.mxu0 %v259
    %1346 = vmatpush.msra.mxu0 %v255
    %1347 = vmatpush.msra.mxu0 %v251
    %1348 = vmatpush.msra.mxu0 %v247
    %1349 = vmatpush.msra.mxu0 %v243
    %1350 = vmatpush.msra.mxu0 %v239
    %1351 = vmatpush.msra.mxu0 %v235
    %1352 = vmatpush.msra.mxu0 %v231
    %1353 = vmatpush.msra.mxu0 %v227
    %1354 = vmatpush.msra.mxu0 %v223
    %1355 = vmatpush.msra.mxu0 %v219
    %1356 = vmatpush.msra.mxu0 %v215
    %1357 = vmatpush.msra.mxu0 %v211
    %1358 = vmatpush.msra.mxu0 %v207
    %1359 = vmatmul.f32.gmra.mxu0 %v1341
    %v1360 = vpop.f32.mrf.mxu0
    %v1361 = vadd.f32 0.0, %v1360
    %1362 = vdwg.mxu0
    %1363 = vmatpush.msra.mxu0 %v268
    %1364 = vmatpush.msra.mxu0 %v264
    %1365 = vmatpush.msra.mxu0 %v260
    %1366 = vmatpush.msra.mxu0 %v256
    %1367 = vmatpush.msra.mxu0 %v252
    %1368 = vmatpush.msra.mxu0 %v248
    %1369 = vmatpush.msra.mxu0 %v244
    %1370 = vmatpush.msra.mxu0 %v240
    %1371 = vmatpush.msra.mxu0 %v236
    %1372 = vmatpush.msra.mxu0 %v232
    %1373 = vmatpush.msra.mxu0 %v228
    %1374 = vmatpush.msra.mxu0 %v224
    %1375 = vmatpush.msra.mxu0 %v220
    %1376 = vmatpush.msra.mxu0 %v216
    %1377 = vmatpush.msra.mxu0 %v212
    %1378 = vmatpush.msra.mxu0 %v208
    %1379 = vmatmul.f32.gmra.mxu0 %v1341
    %v1380 = vpop.f32.mrf.mxu0
    %v1381 = vadd.f32 0.0, %v1380
    %1382 = vdwg.mxu0
    %1383 = vmatpush.msra.mxu0 %v269
    %1384 = vmatpush.msra.mxu0 %v265
    %1385 = vmatpush.msra.mxu0 %v261
    %1386 = vmatpush.msra.mxu0 %v257
    %1387 = vmatpush.msra.mxu0 %v253
    %1388 = vmatpush.msra.mxu0 %v249
    %1389 = vmatpush.msra.mxu0 %v245
    %1390 = vmatpush.msra.mxu0 %v241
    %1391 = vmatpush.msra.mxu0 %v237
    %1392 = vmatpush.msra.mxu0 %v233
    %1393 = vmatpush.msra.mxu0 %v229
    %1394 = vmatpush.msra.mxu0 %v225
    %1395 = vmatpush.msra.mxu0 %v221
    %1396 = vmatpush.msra.mxu0 %v217
    %1397 = vmatpush.msra.mxu0 %v213
    %1398 = vmatpush.msra.mxu0 %v209
    %1399 = vmatmul.f32.gmra.mxu0 %v1341
    %v1400 = vpop.f32.mrf.mxu0
    %v1401 = vadd.f32 0.0, %v1400
    %1402 = vdwg.mxu0
    %1403 = vmatpush.msra.mxu0 %v270
    %1404 = vmatpush.msra.mxu0 %v266
    %1405 = vmatpush.msra.mxu0 %v262
    %1406 = vmatpush.msra.mxu0 %v258
    %1407 = vmatpush.msra.mxu0 %v254
    %1408 = vmatpush.msra.mxu0 %v250
    %1409 = vmatpush.msra.mxu0 %v246
    %1410 = vmatpush.msra.mxu0 %v242
    %1411 = vmatpush.msra.mxu0 %v238
    %1412 = vmatpush.msra.mxu0 %v234
    %1413 = vmatpush.msra.mxu0 %v230
    %1414 = vmatpush.msra.mxu0 %v226
    %1415 = vmatpush.msra.mxu0 %v222
    %1416 = vmatpush.msra.mxu0 %v218
    %1417 = vmatpush.msra.mxu0 %v214
    %1418 = vmatpush.msra.mxu0 %v210
    %1419 = vmatmul.f32.gmra.mxu0 %v1341
    %v1420 = vpop.f32.mrf.mxu0
    %v1421 = vadd.f32 0.0, %v1420
    %1422 = vdwg.mxu0
    %v1423 = vadd.f32 %v325, %v1361
    %v1424 = vadd.f32 %v366, %v1381
    %v1425 = vadd.f32 %v407, %v1401
    %v1426 = vadd.f32 %v448, %v1421
    %v1427 = vxor.u32 %v1423, 2147483648
    %v1428 = vmul.f32 %v1427, 1.442695
    %v1429 = vpow.pop %v1428
    %v1430 = vadd.f32 %v1429, 1.0
    %v1431 = vrcp.pop %v1430
    %v1432 = vmul.f32 %v1430, %v1431
    %v1433 = vsub.f32 1.0, %v1432
    %v1434 = vmul.f32 %v1431, %v1433
    %v1435 = vadd.f32 %v1431, %v1434
    %vm1436 = vweird.f32 %v1430
    %vm1437 = vweird.f32 %v1431
    %vm1438 = vmor %vm1436, %vm1437
    %v1439 = vsel %vm1438, %v1431, %v1435
    %v1440 = vand.u32 2147483647, %v1430
    %vm1441 = vcmp.eq.f32.partialorder %v1440, 8.507059e+37
    %v1442 = vand.u32 %v1430, 2147483648
    %v1443 = vor.u32 1.1754944e-38, %v1442
    %v1444 = vsel %vm1441, %v1443, %v1439
    %v1445 = vmul.f32 1.0, %v1444
    %v1446 = vxor.u32 %v1424, 2147483648
    %v1447 = vmul.f32 %v1446, 1.442695
    %v1448 = vpow.pop %v1447
    %v1449 = vadd.f32 %v1448, 1.0
    %v1450 = vrcp.pop %v1449
    %v1451 = vmul.f32 %v1449, %v1450
    %v1452 = vsub.f32 1.0, %v1451
    %v1453 = vmul.f32 %v1450, %v1452
    %v1454 = vadd.f32 %v1450, %v1453
    %vm1455 = vweird.f32 %v1449
    %vm1456 = vweird.f32 %v1450
    %vm1457 = vmor %vm1455, %vm1456
    %v1458 = vsel %vm1457, %v1450, %v1454
    %v1459 = vand.u32 2147483647, %v1449
    %vm1460 = vcmp.eq.f32.partialorder %v1459, 8.507059e+37
    %v1461 = vand.u32 %v1449, 2147483648
    %v1462 = vor.u32 1.1754944e-38, %v1461
    %v1463 = vsel %vm1460, %v1462, %v1458
    %v1464 = vmul.f32 1.0, %v1463
    %v1465 = vtanh.pop %v1425
    %v1466 = vxor.u32 %v1426, 2147483648
    %v1467 = vmul.f32 %v1466, 1.442695
    %v1468 = vpow.pop %v1467
    %v1469 = vadd.f32 %v1468, 1.0
    %v1470 = vrcp.pop %v1469
    %v1471 = vmul.f32 %v1469, %v1470
    %v1472 = vsub.f32 1.0, %v1471
    %v1473 = vmul.f32 %v1470, %v1472
    %v1474 = vadd.f32 %v1470, %v1473
    %vm1475 = vweird.f32 %v1469
    %vm1476 = vweird.f32 %v1470
    %vm1477 = vmor %vm1475, %vm1476
    %v1478 = vsel %vm1477, %v1470, %v1474
    %v1479 = vand.u32 2147483647, %v1469
    %vm1480 = vcmp.eq.f32.partialorder %v1479, 8.507059e+37
    %v1481 = vand.u32 %v1469, 2147483648
    %v1482 = vor.u32 1.1754944e-38, %v1481
    %v1483 = vsel %vm1480, %v1482, %v1478
    %v1484 = vmul.f32 1.0, %v1483
    %v1485 = vmul.f32 %v1464, %v1339
    %v1486 = vmul.f32 %v1445, %v1465
    %v1487 = vadd.f32 %v1485, %v1486
    %v1488 = vtanh.pop %v1487
    %v1489 = vmul.f32 %v1484, %v1488
    %1490 = vst [vmem:[#allocation2 + $0x30] sm:$0xff] %v1489
    %1491 = vmatpush.msra.mxu0 %v267
    %1492 = vmatpush.msra.mxu0 %v263
    %1493 = vmatpush.msra.mxu0 %v259
    %1494 = vmatpush.msra.mxu0 %v255
    %1495 = vmatpush.msra.mxu0 %v251
    %1496 = vmatpush.msra.mxu0 %v247
    %1497 = vmatpush.msra.mxu0 %v243
    %1498 = vmatpush.msra.mxu0 %v239
    %1499 = vmatpush.msra.mxu0 %v235
    %1500 = vmatpush.msra.mxu0 %v231
    %1501 = vmatpush.msra.mxu0 %v227
    %1502 = vmatpush.msra.mxu0 %v223
    %1503 = vmatpush.msra.mxu0 %v219
    %1504 = vmatpush.msra.mxu0 %v215
    %1505 = vmatpush.msra.mxu0 %v211
    %1506 = vmatpush.msra.mxu0 %v207
    %1507 = vmatmul.f32.gmra.mxu0 %v1489
    %v1508 = vpop.f32.mrf.mxu0
    %v1509 = vadd.f32 0.0, %v1508
    %1510 = vdwg.mxu0
    %1511 = vmatpush.msra.mxu0 %v268
    %1512 = vmatpush.msra.mxu0 %v264
    %1513 = vmatpush.msra.mxu0 %v260
    %1514 = vmatpush.msra.mxu0 %v256
    %1515 = vmatpush.msra.mxu0 %v252
    %1516 = vmatpush.msra.mxu0 %v248
    %1517 = vmatpush.msra.mxu0 %v244
    %1518 = vmatpush.msra.mxu0 %v240
    %1519 = vmatpush.msra.mxu0 %v236
    %1520 = vmatpush.msra.mxu0 %v232
    %1521 = vmatpush.msra.mxu0 %v228
    %1522 = vmatpush.msra.mxu0 %v224
    %1523 = vmatpush.msra.mxu0 %v220
    %1524 = vmatpush.msra.mxu0 %v216
    %1525 = vmatpush.msra.mxu0 %v212
    %1526 = vmatpush.msra.mxu0 %v208
    %1527 = vmatmul.f32.gmra.mxu0 %v1489
    %v1528 = vpop.f32.mrf.mxu0
    %v1529 = vadd.f32 0.0, %v1528
    %1530 = vdwg.mxu0
    %1531 = vmatpush.msra.mxu0 %v269
    %1532 = vmatpush.msra.mxu0 %v265
    %1533 = vmatpush.msra.mxu0 %v261
    %1534 = vmatpush.msra.mxu0 %v257
    %1535 = vmatpush.msra.mxu0 %v253
    %1536 = vmatpush.msra.mxu0 %v249
    %1537 = vmatpush.msra.mxu0 %v245
    %1538 = vmatpush.msra.mxu0 %v241
    %1539 = vmatpush.msra.mxu0 %v237
    %1540 = vmatpush.msra.mxu0 %v233
    %1541 = vmatpush.msra.mxu0 %v229
    %1542 = vmatpush.msra.mxu0 %v225
    %1543 = vmatpush.msra.mxu0 %v221
    %1544 = vmatpush.msra.mxu0 %v217
    %1545 = vmatpush.msra.mxu0 %v213
    %1546 = vmatpush.msra.mxu0 %v209
    %1547 = vmatmul.f32.gmra.mxu0 %v1489
    %v1548 = vpop.f32.mrf.mxu0
    %v1549 = vadd.f32 0.0, %v1548
    %1550 = vdwg.mxu0
    %1551 = vmatpush.msra.mxu0 %v270
    %1552 = vmatpush.msra.mxu0 %v266
    %1553 = vmatpush.msra.mxu0 %v262
    %1554 = vmatpush.msra.mxu0 %v258
    %1555 = vmatpush.msra.mxu0 %v254
    %1556 = vmatpush.msra.mxu0 %v250
    %1557 = vmatpush.msra.mxu0 %v246
    %1558 = vmatpush.msra.mxu0 %v242
    %1559 = vmatpush.msra.mxu0 %v238
    %1560 = vmatpush.msra.mxu0 %v234
    %1561 = vmatpush.msra.mxu0 %v230
    %1562 = vmatpush.msra.mxu0 %v226
    %1563 = vmatpush.msra.mxu0 %v222
    %1564 = vmatpush.msra.mxu0 %v218
    %1565 = vmatpush.msra.mxu0 %v214
    %1566 = vmatpush.msra.mxu0 %v210
    %1567 = vmatmul.f32.gmra.mxu0 %v1489
    %v1568 = vpop.f32.mrf.mxu0
    %v1569 = vadd.f32 0.0, %v1568
    %1570 = vdwg.mxu0
    %v1571 = vadd.f32 %v328, %v1509
    %v1572 = vadd.f32 %v369, %v1529
    %v1573 = vadd.f32 %v410, %v1549
    %v1574 = vadd.f32 %v451, %v1569
    %v1575 = vxor.u32 %v1571, 2147483648
    %v1576 = vmul.f32 %v1575, 1.442695
    %v1577 = vpow.pop %v1576
    %v1578 = vadd.f32 %v1577, 1.0
    %v1579 = vrcp.pop %v1578
    %v1580 = vmul.f32 %v1578, %v1579
    %v1581 = vsub.f32 1.0, %v1580
    %v1582 = vmul.f32 %v1579, %v1581
    %v1583 = vadd.f32 %v1579, %v1582
    %vm1584 = vweird.f32 %v1578
    %vm1585 = vweird.f32 %v1579
    %vm1586 = vmor %vm1584, %vm1585
    %v1587 = vsel %vm1586, %v1579, %v1583
    %v1588 = vand.u32 2147483647, %v1578
    %vm1589 = vcmp.eq.f32.partialorder %v1588, 8.507059e+37
    %v1590 = vand.u32 %v1578, 2147483648
    %v1591 = vor.u32 1.1754944e-38, %v1590
    %v1592 = vsel %vm1589, %v1591, %v1587
    %v1593 = vmul.f32 1.0, %v1592
    %v1594 = vxor.u32 %v1572, 2147483648
    %v1595 = vmul.f32 %v1594, 1.442695
    %v1596 = vpow.pop %v1595
    %v1597 = vadd.f32 %v1596, 1.0
    %v1598 = vrcp.pop %v1597
    %v1599 = vmul.f32 %v1597, %v1598
    %v1600 = vsub.f32 1.0, %v1599
    %v1601 = vmul.f32 %v1598, %v1600
    %v1602 = vadd.f32 %v1598, %v1601
    %vm1603 = vweird.f32 %v1597
    %vm1604 = vweird.f32 %v1598
    %vm1605 = vmor %vm1603, %vm1604
    %v1606 = vsel %vm1605, %v1598, %v1602
    %v1607 = vand.u32 2147483647, %v1597
    %vm1608 = vcmp.eq.f32.partialorder %v1607, 8.507059e+37
    %v1609 = vand.u32 %v1597, 2147483648
    %v1610 = vor.u32 1.1754944e-38, %v1609
    %v1611 = vsel %vm1608, %v1610, %v1606
    %v1612 = vmul.f32 1.0, %v1611
    %v1613 = vtanh.pop %v1573
    %v1614 = vxor.u32 %v1574, 2147483648
    %v1615 = vmul.f32 %v1614, 1.442695
    %v1616 = vpow.pop %v1615
    %v1617 = vadd.f32 %v1616, 1.0
    %v1618 = vrcp.pop %v1617
    %v1619 = vmul.f32 %v1617, %v1618
    %v1620 = vsub.f32 1.0, %v1619
    %v1621 = vmul.f32 %v1618, %v1620
    %v1622 = vadd.f32 %v1618, %v1621
    %vm1623 = vweird.f32 %v1617
    %vm1624 = vweird.f32 %v1618
    %vm1625 = vmor %vm1623, %vm1624
    %v1626 = vsel %vm1625, %v1618, %v1622
    %v1627 = vand.u32 2147483647, %v1617
    %vm1628 = vcmp.eq.f32.partialorder %v1627, 8.507059e+37
    %v1629 = vand.u32 %v1617, 2147483648
    %v1630 = vor.u32 1.1754944e-38, %v1629
    %v1631 = vsel %vm1628, %v1630, %v1626
    %v1632 = vmul.f32 1.0, %v1631
    %v1633 = vmul.f32 %v1612, %v1487
    %v1634 = vmul.f32 %v1593, %v1613
    %v1635 = vadd.f32 %v1633, %v1634
    %v1636 = vtanh.pop %v1635
    %v1637 = vmul.f32 %v1632, %v1636
    %1638 = vst [vmem:[#allocation2 + $0x38] sm:$0xff] %v1637
    %1639 = vst [vmem:[#allocation16] sm:$0xff] %v1637
    %1640 = vst [vmem:[#allocation18] sm:$0xff] %v1635
    %s1641 = scalar_lea.vmem [#allocation6], 512
    %v1642 = vld [vmem:[%s1641] sm:$0xff]
    %v1643 = vld [vmem:[%s1641 + $0x8] sm:$0xff]
    %v1644 = vld [vmem:[%s1641 + $0x10] sm:$0xff]
    %v1645 = vld [vmem:[%s1641 + $0x18] sm:$0xff]
    %v1646 = vld [vmem:[%s1641 + $0x20] sm:$0xff]
    %v1647 = vld [vmem:[%s1641 + $0x28] sm:$0xff]
    %v1648 = vld [vmem:[%s1641 + $0x30] sm:$0xff]
    %v1649 = vld [vmem:[%s1641 + $0x38] sm:$0xff]
    %v1650 = vld [vmem:[%s1641 + $0x40] sm:$0xff]
    %v1651 = vld [vmem:[%s1641 + $0x48] sm:$0xff]
    %v1652 = vld [vmem:[%s1641 + $0x50] sm:$0xff]
    %v1653 = vld [vmem:[%s1641 + $0x58] sm:$0xff]
    %v1654 = vld [vmem:[%s1641 + $0x60] sm:$0xff]
    %v1655 = vld [vmem:[%s1641 + $0x68] sm:$0xff]
    %v1656 = vld [vmem:[%s1641 + $0x70] sm:$0xff]
    %v1657 = vld [vmem:[%s1641 + $0x78] sm:$0xff]
    %v1658 = vld [vmem:[%s1641 + $0x80] sm:$0xff]
    %v1659 = vld [vmem:[%s1641 + $0x88] sm:$0xff]
    %v1660 = vld [vmem:[%s1641 + $0x90] sm:$0xff]
    %v1661 = vld [vmem:[%s1641 + $0x98] sm:$0xff]
    %v1662 = vld [vmem:[%s1641 + $0xa0] sm:$0xff]
    %v1663 = vld [vmem:[%s1641 + $0xa8] sm:$0xff]
    %v1664 = vld [vmem:[%s1641 + $0xb0] sm:$0xff]
    %v1665 = vld [vmem:[%s1641 + $0xb8] sm:$0xff]
    %v1666 = vld [vmem:[%s1641 + $0xc0] sm:$0xff]
    %v1667 = vld [vmem:[%s1641 + $0xc8] sm:$0xff]
    %v1668 = vld [vmem:[%s1641 + $0xd0] sm:$0xff]
    %v1669 = vld [vmem:[%s1641 + $0xd8] sm:$0xff]
    %v1670 = vld [vmem:[%s1641 + $0xe0] sm:$0xff]
    %v1671 = vld [vmem:[%s1641 + $0xe8] sm:$0xff]
    %v1672 = vld [vmem:[%s1641 + $0xf0] sm:$0xff]
    %v1673 = vld [vmem:[%s1641 + $0xf8] sm:$0xff]
    %v1674 = vld [vmem:[%s1641 + $0x100] sm:$0xff]
    %v1675 = vld [vmem:[%s1641 + $0x108] sm:$0xff]
    %v1676 = vld [vmem:[%s1641 + $0x110] sm:$0xff]
    %v1677 = vld [vmem:[%s1641 + $0x118] sm:$0xff]
    %v1678 = vld [vmem:[%s1641 + $0x120] sm:$0xff]
    %v1679 = vld [vmem:[%s1641 + $0x128] sm:$0xff]
    %v1680 = vld [vmem:[%s1641 + $0x130] sm:$0xff]
    %v1681 = vld [vmem:[%s1641 + $0x138] sm:$0xff]
    %v1682 = vld [vmem:[%s1641 + $0x140] sm:$0xff]
    %v1683 = vld [vmem:[%s1641 + $0x148] sm:$0xff]
    %v1684 = vld [vmem:[%s1641 + $0x150] sm:$0xff]
    %v1685 = vld [vmem:[%s1641 + $0x158] sm:$0xff]
    %v1686 = vld [vmem:[%s1641 + $0x160] sm:$0xff]
    %v1687 = vld [vmem:[%s1641 + $0x168] sm:$0xff]
    %v1688 = vld [vmem:[%s1641 + $0x170] sm:$0xff]
    %v1689 = vld [vmem:[%s1641 + $0x178] sm:$0xff]
    %v1690 = vld [vmem:[%s1641 + $0x180] sm:$0xff]
    %v1691 = vld [vmem:[%s1641 + $0x188] sm:$0xff]
    %v1692 = vld [vmem:[%s1641 + $0x190] sm:$0xff]
    %v1693 = vld [vmem:[%s1641 + $0x198] sm:$0xff]
    %v1694 = vld [vmem:[%s1641 + $0x1a0] sm:$0xff]
    %v1695 = vld [vmem:[%s1641 + $0x1a8] sm:$0xff]
    %v1696 = vld [vmem:[%s1641 + $0x1b0] sm:$0xff]
    %v1697 = vld [vmem:[%s1641 + $0x1b8] sm:$0xff]
    %v1698 = vld [vmem:[%s1641 + $0x1c0] sm:$0xff]
    %v1699 = vld [vmem:[%s1641 + $0x1c8] sm:$0xff]
    %v1700 = vld [vmem:[%s1641 + $0x1d0] sm:$0xff]
    %v1701 = vld [vmem:[%s1641 + $0x1d8] sm:$0xff]
    %v1702 = vld [vmem:[%s1641 + $0x1e0] sm:$0xff]
    %v1703 = vld [vmem:[%s1641 + $0x1e8] sm:$0xff]
    %v1704 = vld [vmem:[%s1641 + $0x1f0] sm:$0xff]
    %v1705 = vld [vmem:[%s1641 + $0x1f8] sm:$0xff]
    %s1706 = scalar_lea.vmem [#allocation8], 512
    %v1707 = vld [vmem:[%s1706] sm:$0xff]
    %v1708 = vld [vmem:[%s1706 + $0x8] sm:$0xff]
    %v1709 = vld [vmem:[%s1706 + $0x10] sm:$0xff]
    %v1710 = vld [vmem:[%s1706 + $0x18] sm:$0xff]
    %v1711 = vld [vmem:[%s1706 + $0x20] sm:$0xff]
    %v1712 = vld [vmem:[%s1706 + $0x28] sm:$0xff]
    %v1713 = vld [vmem:[%s1706 + $0x30] sm:$0xff]
    %v1714 = vld [vmem:[%s1706 + $0x38] sm:$0xff]
    %v1715 = vld [vmem:[%s1706 + $0x40] sm:$0xff]
    %v1716 = vld [vmem:[%s1706 + $0x48] sm:$0xff]
    %v1717 = vld [vmem:[%s1706 + $0x50] sm:$0xff]
    %v1718 = vld [vmem:[%s1706 + $0x58] sm:$0xff]
    %v1719 = vld [vmem:[%s1706 + $0x60] sm:$0xff]
    %v1720 = vld [vmem:[%s1706 + $0x68] sm:$0xff]
    %v1721 = vld [vmem:[%s1706 + $0x70] sm:$0xff]
    %v1722 = vld [vmem:[%s1706 + $0x78] sm:$0xff]
    %v1723 = vld [vmem:[%s1706 + $0x80] sm:$0xff]
    %v1724 = vld [vmem:[%s1706 + $0x88] sm:$0xff]
    %v1725 = vld [vmem:[%s1706 + $0x90] sm:$0xff]
    %v1726 = vld [vmem:[%s1706 + $0x98] sm:$0xff]
    %v1727 = vld [vmem:[%s1706 + $0xa0] sm:$0xff]
    %v1728 = vld [vmem:[%s1706 + $0xa8] sm:$0xff]
    %v1729 = vld [vmem:[%s1706 + $0xb0] sm:$0xff]
    %v1730 = vld [vmem:[%s1706 + $0xb8] sm:$0xff]
    %v1731 = vld [vmem:[%s1706 + $0xc0] sm:$0xff]
    %v1732 = vld [vmem:[%s1706 + $0xc8] sm:$0xff]
    %v1733 = vld [vmem:[%s1706 + $0xd0] sm:$0xff]
    %v1734 = vld [vmem:[%s1706 + $0xd8] sm:$0xff]
    %v1735 = vld [vmem:[%s1706 + $0xe0] sm:$0xff]
    %v1736 = vld [vmem:[%s1706 + $0xe8] sm:$0xff]
    %v1737 = vld [vmem:[%s1706 + $0xf0] sm:$0xff]
    %v1738 = vld [vmem:[%s1706 + $0xf8] sm:$0xff]
    %v1739 = vld [vmem:[%s1706 + $0x100] sm:$0xff]
    %v1740 = vld [vmem:[%s1706 + $0x108] sm:$0xff]
    %v1741 = vld [vmem:[%s1706 + $0x110] sm:$0xff]
    %v1742 = vld [vmem:[%s1706 + $0x118] sm:$0xff]
    %v1743 = vld [vmem:[%s1706 + $0x120] sm:$0xff]
    %v1744 = vld [vmem:[%s1706 + $0x128] sm:$0xff]
    %v1745 = vld [vmem:[%s1706 + $0x130] sm:$0xff]
    %v1746 = vld [vmem:[%s1706 + $0x138] sm:$0xff]
    %v1747 = vld [vmem:[%s1706 + $0x140] sm:$0xff]
    %v1748 = vld [vmem:[%s1706 + $0x148] sm:$0xff]
    %v1749 = vld [vmem:[%s1706 + $0x150] sm:$0xff]
    %v1750 = vld [vmem:[%s1706 + $0x158] sm:$0xff]
    %v1751 = vld [vmem:[%s1706 + $0x160] sm:$0xff]
    %v1752 = vld [vmem:[%s1706 + $0x168] sm:$0xff]
    %v1753 = vld [vmem:[%s1706 + $0x170] sm:$0xff]
    %v1754 = vld [vmem:[%s1706 + $0x178] sm:$0xff]
    %v1755 = vld [vmem:[%s1706 + $0x180] sm:$0xff]
    %v1756 = vld [vmem:[%s1706 + $0x188] sm:$0xff]
    %v1757 = vld [vmem:[%s1706 + $0x190] sm:$0xff]
    %v1758 = vld [vmem:[%s1706 + $0x198] sm:$0xff]
    %v1759 = vld [vmem:[%s1706 + $0x1a0] sm:$0xff]
    %v1760 = vld [vmem:[%s1706 + $0x1a8] sm:$0xff]
    %v1761 = vld [vmem:[%s1706 + $0x1b0] sm:$0xff]
    %v1762 = vld [vmem:[%s1706 + $0x1b8] sm:$0xff]
    %v1763 = vld [vmem:[%s1706 + $0x1c0] sm:$0xff]
    %v1764 = vld [vmem:[%s1706 + $0x1c8] sm:$0xff]
    %v1765 = vld [vmem:[%s1706 + $0x1d0] sm:$0xff]
    %v1766 = vld [vmem:[%s1706 + $0x1d8] sm:$0xff]
    %v1767 = vld [vmem:[%s1706 + $0x1e0] sm:$0xff]
    %v1768 = vld [vmem:[%s1706 + $0x1e8] sm:$0xff]
    %v1769 = vld [vmem:[%s1706 + $0x1f0] sm:$0xff]
    %v1770 = vld [vmem:[%s1706 + $0x1f8] sm:$0xff]
    %s1771 = scalar_lea.vmem [#allocation9], 4
    %v1772 = vld [vmem:[%s1771] sm:$0xf]
    %v1773 = vld [vmem:[#allocation2] sm:$0xff]
    %v1774 = vld [vmem:[#allocation2 + $0x8] sm:$0xff]
    %v1775 = vld [vmem:[#allocation2 + $0x10] sm:$0xff]
    %v1776 = vld [vmem:[#allocation2 + $0x18] sm:$0xff]
    %v1777 = vld [vmem:[#allocation2 + $0x20] sm:$0xff]
    %v1778 = vld [vmem:[#allocation2 + $0x28] sm:$0xff]
    %v1779 = vld [vmem:[#allocation2 + $0x30] sm:$0xff]
    %v1780 = vld [vmem:[#allocation2 + $0x38] sm:$0xff]
    %v1782 = vperm.slane %v1772, 0
    %v1783 = vperm.slane %v1772, 1
    %v1784 = vperm.slane %v1772, 2
    %v1785 = vperm.slane %v1772, 3
    %1790 = vmatpush.msra.mxu0 %v1702
    %1791 = vmatpush.msra.mxu0 %v1698
    %1792 = vmatpush.msra.mxu0 %v1694
    %1793 = vmatpush.msra.mxu0 %v1690
    %1794 = vmatpush.msra.mxu0 %v1686
    %1795 = vmatpush.msra.mxu0 %v1682
    %1796 = vmatpush.msra.mxu0 %v1678
    %1797 = vmatpush.msra.mxu0 %v1674
    %1798 = vmatpush.msra.mxu0 %v1670
    %1799 = vmatpush.msra.mxu0 %v1666
    %1800 = vmatpush.msra.mxu0 %v1662
    %1801 = vmatpush.msra.mxu0 %v1658
    %1802 = vmatpush.msra.mxu0 %v1654
    %1803 = vmatpush.msra.mxu0 %v1650
    %1804 = vmatpush.msra.mxu0 %v1646
    %1805 = vmatpush.msra.mxu0 %v1642
    %1806 = vmatmul.f32.gmra.mxu0 %v1773
    %v1807 = vpop.f32.mrf.mxu0
    %v1808 = vadd.f32 %v1782, %v1807
    %1809 = vmatmul.f32.gmra.mxu0 %v1774
    %v1810 = vpop.f32.mrf.mxu0
    %v1811 = vadd.f32 %v1782, %v1810
    %1812 = vmatmul.f32.gmra.mxu0 %v1775
    %v1813 = vpop.f32.mrf.mxu0
    %v1814 = vadd.f32 %v1782, %v1813
    %1815 = vmatmul.f32.gmra.mxu0 %v1776
    %v1816 = vpop.f32.mrf.mxu0
    %v1817 = vadd.f32 %v1782, %v1816
    %1818 = vmatmul.f32.gmra.mxu0 %v1777
    %v1819 = vpop.f32.mrf.mxu0
    %v1820 = vadd.f32 %v1782, %v1819
    %1821 = vmatmul.f32.gmra.mxu0 %v1778
    %v1822 = vpop.f32.mrf.mxu0
    %v1823 = vadd.f32 %v1782, %v1822
    %1824 = vmatmul.f32.gmra.mxu0 %v1779
    %v1825 = vpop.f32.mrf.mxu0
    %v1826 = vadd.f32 %v1782, %v1825
    %1827 = vmatmul.f32.gmra.mxu0 %v1780
    %v1828 = vpop.f32.mrf.mxu0
    %v1829 = vadd.f32 %v1782, %v1828
    %1830 = vdwg.mxu0
    %1831 = vmatpush.msra.mxu0 %v1703
    %1832 = vmatpush.msra.mxu0 %v1699
    %1833 = vmatpush.msra.mxu0 %v1695
    %1834 = vmatpush.msra.mxu0 %v1691
    %1835 = vmatpush.msra.mxu0 %v1687
    %1836 = vmatpush.msra.mxu0 %v1683
    %1837 = vmatpush.msra.mxu0 %v1679
    %1838 = vmatpush.msra.mxu0 %v1675
    %1839 = vmatpush.msra.mxu0 %v1671
    %1840 = vmatpush.msra.mxu0 %v1667
    %1841 = vmatpush.msra.mxu0 %v1663
    %1842 = vmatpush.msra.mxu0 %v1659
    %1843 = vmatpush.msra.mxu0 %v1655
    %1844 = vmatpush.msra.mxu0 %v1651
    %1845 = vmatpush.msra.mxu0 %v1647
    %1846 = vmatpush.msra.mxu0 %v1643
    %1847 = vmatmul.f32.gmra.mxu0 %v1773
    %v1848 = vpop.f32.mrf.mxu0
    %v1849 = vadd.f32 %v1783, %v1848
    %1850 = vmatmul.f32.gmra.mxu0 %v1774
    %v1851 = vpop.f32.mrf.mxu0
    %v1852 = vadd.f32 %v1783, %v1851
    %1853 = vmatmul.f32.gmra.mxu0 %v1775
    %v1854 = vpop.f32.mrf.mxu0
    %v1855 = vadd.f32 %v1783, %v1854
    %1856 = vmatmul.f32.gmra.mxu0 %v1776
    %v1857 = vpop.f32.mrf.mxu0
    %v1858 = vadd.f32 %v1783, %v1857
    %1859 = vmatmul.f32.gmra.mxu0 %v1777
    %v1860 = vpop.f32.mrf.mxu0
    %v1861 = vadd.f32 %v1783, %v1860
    %1862 = vmatmul.f32.gmra.mxu0 %v1778
    %v1863 = vpop.f32.mrf.mxu0
    %v1864 = vadd.f32 %v1783, %v1863
    %1865 = vmatmul.f32.gmra.mxu0 %v1779
    %v1866 = vpop.f32.mrf.mxu0
    %v1867 = vadd.f32 %v1783, %v1866
    %1868 = vmatmul.f32.gmra.mxu0 %v1780
    %v1869 = vpop.f32.mrf.mxu0
    %v1870 = vadd.f32 %v1783, %v1869
    %1871 = vdwg.mxu0
    %1872 = vmatpush.msra.mxu0 %v1704
    %1873 = vmatpush.msra.mxu0 %v1700
    %1874 = vmatpush.msra.mxu0 %v1696
    %1875 = vmatpush.msra.mxu0 %v1692
    %1876 = vmatpush.msra.mxu0 %v1688
    %1877 = vmatpush.msra.mxu0 %v1684
    %1878 = vmatpush.msra.mxu0 %v1680
    %1879 = vmatpush.msra.mxu0 %v1676
    %1880 = vmatpush.msra.mxu0 %v1672
    %1881 = vmatpush.msra.mxu0 %v1668
    %1882 = vmatpush.msra.mxu0 %v1664
    %1883 = vmatpush.msra.mxu0 %v1660
    %1884 = vmatpush.msra.mxu0 %v1656
    %1885 = vmatpush.msra.mxu0 %v1652
    %1886 = vmatpush.msra.mxu0 %v1648
    %1887 = vmatpush.msra.mxu0 %v1644
    %1888 = vmatmul.f32.gmra.mxu0 %v1773
    %v1889 = vpop.f32.mrf.mxu0
    %v1890 = vadd.f32 %v1784, %v1889
    %1891 = vmatmul.f32.gmra.mxu0 %v1774
    %v1892 = vpop.f32.mrf.mxu0
    %v1893 = vadd.f32 %v1784, %v1892
    %1894 = vmatmul.f32.gmra.mxu0 %v1775
    %v1895 = vpop.f32.mrf.mxu0
    %v1896 = vadd.f32 %v1784, %v1895
    %1897 = vmatmul.f32.gmra.mxu0 %v1776
    %v1898 = vpop.f32.mrf.mxu0
    %v1899 = vadd.f32 %v1784, %v1898
    %1900 = vmatmul.f32.gmra.mxu0 %v1777
    %v1901 = vpop.f32.mrf.mxu0
    %v1902 = vadd.f32 %v1784, %v1901
    %1903 = vmatmul.f32.gmra.mxu0 %v1778
    %v1904 = vpop.f32.mrf.mxu0
    %v1905 = vadd.f32 %v1784, %v1904
    %1906 = vmatmul.f32.gmra.mxu0 %v1779
    %v1907 = vpop.f32.mrf.mxu0
    %v1908 = vadd.f32 %v1784, %v1907
    %1909 = vmatmul.f32.gmra.mxu0 %v1780
    %v1910 = vpop.f32.mrf.mxu0
    %v1911 = vadd.f32 %v1784, %v1910
    %1912 = vdwg.mxu0
    %1913 = vmatpush.msra.mxu0 %v1705
    %1914 = vmatpush.msra.mxu0 %v1701
    %1915 = vmatpush.msra.mxu0 %v1697
    %1916 = vmatpush.msra.mxu0 %v1693
    %1917 = vmatpush.msra.mxu0 %v1689
    %1918 = vmatpush.msra.mxu0 %v1685
    %1919 = vmatpush.msra.mxu0 %v1681
    %1920 = vmatpush.msra.mxu0 %v1677
    %1921 = vmatpush.msra.mxu0 %v1673
    %1922 = vmatpush.msra.mxu0 %v1669
    %1923 = vmatpush.msra.mxu0 %v1665
    %1924 = vmatpush.msra.mxu0 %v1661
    %1925 = vmatpush.msra.mxu0 %v1657
    %1926 = vmatpush.msra.mxu0 %v1653
    %1927 = vmatpush.msra.mxu0 %v1649
    %1928 = vmatpush.msra.mxu0 %v1645
    %1929 = vmatmul.f32.gmra.mxu0 %v1773
    %v1930 = vpop.f32.mrf.mxu0
    %v1931 = vadd.f32 %v1785, %v1930
    %1932 = vmatmul.f32.gmra.mxu0 %v1774
    %v1933 = vpop.f32.mrf.mxu0
    %v1934 = vadd.f32 %v1785, %v1933
    %1935 = vmatmul.f32.gmra.mxu0 %v1775
    %v1936 = vpop.f32.mrf.mxu0
    %v1937 = vadd.f32 %v1785, %v1936
    %1938 = vmatmul.f32.gmra.mxu0 %v1776
    %v1939 = vpop.f32.mrf.mxu0
    %v1940 = vadd.f32 %v1785, %v1939
    %1941 = vmatmul.f32.gmra.mxu0 %v1777
    %v1942 = vpop.f32.mrf.mxu0
    %v1943 = vadd.f32 %v1785, %v1942
    %1944 = vmatmul.f32.gmra.mxu0 %v1778
    %v1945 = vpop.f32.mrf.mxu0
    %v1946 = vadd.f32 %v1785, %v1945
    %1947 = vmatmul.f32.gmra.mxu0 %v1779
    %v1948 = vpop.f32.mrf.mxu0
    %v1949 = vadd.f32 %v1785, %v1948
    %1950 = vmatmul.f32.gmra.mxu0 %v1780
    %v1951 = vpop.f32.mrf.mxu0
    %v1952 = vadd.f32 %v1785, %v1951
    %1953 = vdwg.mxu0
    %s1954 = scalar_lea.vmem [#allocation11], 8
    %v1955 = vld [vmem:[%s1954] sm:$0xff]
    %s1956 = scalar_lea.vmem [#allocation12], 8
    %v1957 = vld [vmem:[%s1956] sm:$0xff]
    %1958 = vmatpush.msra.mxu0 %v1767
    %1959 = vmatpush.msra.mxu0 %v1763
    %1960 = vmatpush.msra.mxu0 %v1759
    %1961 = vmatpush.msra.mxu0 %v1755
    %1962 = vmatpush.msra.mxu0 %v1751
    %1963 = vmatpush.msra.mxu0 %v1747
    %1964 = vmatpush.msra.mxu0 %v1743
    %1965 = vmatpush.msra.mxu0 %v1739
    %1966 = vmatpush.msra.mxu0 %v1735
    %1967 = vmatpush.msra.mxu0 %v1731
    %1968 = vmatpush.msra.mxu0 %v1727
    %1969 = vmatpush.msra.mxu0 %v1723
    %1970 = vmatpush.msra.mxu0 %v1719
    %1971 = vmatpush.msra.mxu0 %v1715
    %1972 = vmatpush.msra.mxu0 %v1711
    %1973 = vmatpush.msra.mxu0 %v1707
    %1974 = vmatmul.f32.gmra.mxu0 %v1955
    %v1975 = vpop.f32.mrf.mxu0
    %v1976 = vadd.f32 0.0, %v1975
    %1977 = vdwg.mxu0
    %1978 = vmatpush.msra.mxu0 %v1768
    %1979 = vmatpush.msra.mxu0 %v1764
    %1980 = vmatpush.msra.mxu0 %v1760
    %1981 = vmatpush.msra.mxu0 %v1756
    %1982 = vmatpush.msra.mxu0 %v1752
    %1983 = vmatpush.msra.mxu0 %v1748
    %1984 = vmatpush.msra.mxu0 %v1744
    %1985 = vmatpush.msra.mxu0 %v1740
    %1986 = vmatpush.msra.mxu0 %v1736
    %1987 = vmatpush.msra.mxu0 %v1732
    %1988 = vmatpush.msra.mxu0 %v1728
    %1989 = vmatpush.msra.mxu0 %v1724
    %1990 = vmatpush.msra.mxu0 %v1720
    %1991 = vmatpush.msra.mxu0 %v1716
    %1992 = vmatpush.msra.mxu0 %v1712
    %1993 = vmatpush.msra.mxu0 %v1708
    %1994 = vmatmul.f32.gmra.mxu0 %v1955
    %v1995 = vpop.f32.mrf.mxu0
    %v1996 = vadd.f32 0.0, %v1995
    %1997 = vdwg.mxu0
    %1998 = vmatpush.msra.mxu0 %v1769
    %1999 = vmatpush.msra.mxu0 %v1765
    %2000 = vmatpush.msra.mxu0 %v1761
    %2001 = vmatpush.msra.mxu0 %v1757
    %2002 = vmatpush.msra.mxu0 %v1753
    %2003 = vmatpush.msra.mxu0 %v1749
    %2004 = vmatpush.msra.mxu0 %v1745
    %2005 = vmatpush.msra.mxu0 %v1741
    %2006 = vmatpush.msra.mxu0 %v1737
    %2007 = vmatpush.msra.mxu0 %v1733
    %2008 = vmatpush.msra.mxu0 %v1729
    %2009 = vmatpush.msra.mxu0 %v1725
    %2010 = vmatpush.msra.mxu0 %v1721
    %2011 = vmatpush.msra.mxu0 %v1717
    %2012 = vmatpush.msra.mxu0 %v1713
    %2013 = vmatpush.msra.mxu0 %v1709
    %2014 = vmatmul.f32.gmra.mxu0 %v1955
    %v2015 = vpop.f32.mrf.mxu0
    %v2016 = vadd.f32 0.0, %v2015
    %2017 = vdwg.mxu0
    %2018 = vmatpush.msra.mxu0 %v1770
    %2019 = vmatpush.msra.mxu0 %v1766
    %2020 = vmatpush.msra.mxu0 %v1762
    %2021 = vmatpush.msra.mxu0 %v1758
    %2022 = vmatpush.msra.mxu0 %v1754
    %2023 = vmatpush.msra.mxu0 %v1750
    %2024 = vmatpush.msra.mxu0 %v1746
    %2025 = vmatpush.msra.mxu0 %v1742
    %2026 = vmatpush.msra.mxu0 %v1738
    %2027 = vmatpush.msra.mxu0 %v1734
    %2028 = vmatpush.msra.mxu0 %v1730
    %2029 = vmatpush.msra.mxu0 %v1726
    %2030 = vmatpush.msra.mxu0 %v1722
    %2031 = vmatpush.msra.mxu0 %v1718
    %2032 = vmatpush.msra.mxu0 %v1714
    %2033 = vmatpush.msra.mxu0 %v1710
    %2034 = vmatmul.f32.gmra.mxu0 %v1955
    %v2035 = vpop.f32.mrf.mxu0
    %v2036 = vadd.f32 0.0, %v2035
    %2037 = vdwg.mxu0
    %v2038 = vadd.f32 %v1808, %v1976
    %v2039 = vadd.f32 %v1849, %v1996
    %v2040 = vadd.f32 %v1890, %v2016
    %v2041 = vadd.f32 %v1931, %v2036
    %v2042 = vxor.u32 %v2038, 2147483648
    %v2043 = vmul.f32 %v2042, 1.442695
    %v2044 = vpow.pop %v2043
    %v2045 = vadd.f32 %v2044, 1.0
    %v2046 = vrcp.pop %v2045
    %v2047 = vmul.f32 %v2045, %v2046
    %v2048 = vsub.f32 1.0, %v2047
    %v2049 = vmul.f32 %v2046, %v2048
    %v2050 = vadd.f32 %v2046, %v2049
    %vm2051 = vweird.f32 %v2045
    %vm2052 = vweird.f32 %v2046
    %vm2053 = vmor %vm2051, %vm2052
    %v2054 = vsel %vm2053, %v2046, %v2050
    %v2055 = vand.u32 2147483647, %v2045
    %vm2056 = vcmp.eq.f32.partialorder %v2055, 8.507059e+37
    %v2057 = vand.u32 %v2045, 2147483648
    %v2058 = vor.u32 1.1754944e-38, %v2057
    %v2059 = vsel %vm2056, %v2058, %v2054
    %v2060 = vmul.f32 1.0, %v2059
    %v2061 = vxor.u32 %v2039, 2147483648
    %v2062 = vmul.f32 %v2061, 1.442695
    %v2063 = vpow.pop %v2062
    %v2064 = vadd.f32 %v2063, 1.0
    %v2065 = vrcp.pop %v2064
    %v2066 = vmul.f32 %v2064, %v2065
    %v2067 = vsub.f32 1.0, %v2066
    %v2068 = vmul.f32 %v2065, %v2067
    %v2069 = vadd.f32 %v2065, %v2068
    %vm2070 = vweird.f32 %v2064
    %vm2071 = vweird.f32 %v2065
    %vm2072 = vmor %vm2070, %vm2071
    %v2073 = vsel %vm2072, %v2065, %v2069
    %v2074 = vand.u32 2147483647, %v2064
    %vm2075 = vcmp.eq.f32.partialorder %v2074, 8.507059e+37
    %v2076 = vand.u32 %v2064, 2147483648
    %v2077 = vor.u32 1.1754944e-38, %v2076
    %v2078 = vsel %vm2075, %v2077, %v2073
    %v2079 = vmul.f32 1.0, %v2078
    %v2080 = vtanh.pop %v2040
    %v2081 = vxor.u32 %v2041, 2147483648
    %v2082 = vmul.f32 %v2081, 1.442695
    %v2083 = vpow.pop %v2082
    %v2084 = vadd.f32 %v2083, 1.0
    %v2085 = vrcp.pop %v2084
    %v2086 = vmul.f32 %v2084, %v2085
    %v2087 = vsub.f32 1.0, %v2086
    %v2088 = vmul.f32 %v2085, %v2087
    %v2089 = vadd.f32 %v2085, %v2088
    %vm2090 = vweird.f32 %v2084
    %vm2091 = vweird.f32 %v2085
    %vm2092 = vmor %vm2090, %vm2091
    %v2093 = vsel %vm2092, %v2085, %v2089
    %v2094 = vand.u32 2147483647, %v2084
    %vm2095 = vcmp.eq.f32.partialorder %v2094, 8.507059e+37
    %v2096 = vand.u32 %v2084, 2147483648
    %v2097 = vor.u32 1.1754944e-38, %v2096
    %v2098 = vsel %vm2095, %v2097, %v2093
    %v2099 = vmul.f32 1.0, %v2098
    %v2100 = vmul.f32 %v2079, %v1957
    %v2101 = vmul.f32 %v2060, %v2080
    %v2102 = vadd.f32 %v2100, %v2101
    %v2103 = vtanh.pop %v2102
    %v2104 = vmul.f32 %v2099, %v2103
    %2105 = vmatpush.msra.mxu0 %v1767
    %2106 = vmatpush.msra.mxu0 %v1763
    %2107 = vmatpush.msra.mxu0 %v1759
    %2108 = vmatpush.msra.mxu0 %v1755
    %2109 = vmatpush.msra.mxu0 %v1751
    %2110 = vmatpush.msra.mxu0 %v1747
    %2111 = vmatpush.msra.mxu0 %v1743
    %2112 = vmatpush.msra.mxu0 %v1739
    %2113 = vmatpush.msra.mxu0 %v1735
    %2114 = vmatpush.msra.mxu0 %v1731
    %2115 = vmatpush.msra.mxu0 %v1727
    %2116 = vmatpush.msra.mxu0 %v1723
    %2117 = vmatpush.msra.mxu0 %v1719
    %2118 = vmatpush.msra.mxu0 %v1715
    %2119 = vmatpush.msra.mxu0 %v1711
    %2120 = vmatpush.msra.mxu0 %v1707
    %2121 = vmatmul.f32.gmra.mxu0 %v2104
    %v2122 = vpop.f32.mrf.mxu0
    %v2123 = vadd.f32 0.0, %v2122
    %2124 = vdwg.mxu0
    %2125 = vmatpush.msra.mxu0 %v1768
    %2126 = vmatpush.msra.mxu0 %v1764
    %2127 = vmatpush.msra.mxu0 %v1760
    %2128 = vmatpush.msra.mxu0 %v1756
    %2129 = vmatpush.msra.mxu0 %v1752
    %2130 = vmatpush.msra.mxu0 %v1748
    %2131 = vmatpush.msra.mxu0 %v1744
    %2132 = vmatpush.msra.mxu0 %v1740
    %2133 = vmatpush.msra.mxu0 %v1736
    %2134 = vmatpush.msra.mxu0 %v1732
    %2135 = vmatpush.msra.mxu0 %v1728
    %2136 = vmatpush.msra.mxu0 %v1724
    %2137 = vmatpush.msra.mxu0 %v1720
    %2138 = vmatpush.msra.mxu0 %v1716
    %2139 = vmatpush.msra.mxu0 %v1712
    %2140 = vmatpush.msra.mxu0 %v1708
    %2141 = vmatmul.f32.gmra.mxu0 %v2104
    %v2142 = vpop.f32.mrf.mxu0
    %v2143 = vadd.f32 0.0, %v2142
    %2144 = vdwg.mxu0
    %2145 = vmatpush.msra.mxu0 %v1769
    %2146 = vmatpush.msra.mxu0 %v1765
    %2147 = vmatpush.msra.mxu0 %v1761
    %2148 = vmatpush.msra.mxu0 %v1757
    %2149 = vmatpush.msra.mxu0 %v1753
    %2150 = vmatpush.msra.mxu0 %v1749
    %2151 = vmatpush.msra.mxu0 %v1745
    %2152 = vmatpush.msra.mxu0 %v1741
    %2153 = vmatpush.msra.mxu0 %v1737
    %2154 = vmatpush.msra.mxu0 %v1733
    %2155 = vmatpush.msra.mxu0 %v1729
    %2156 = vmatpush.msra.mxu0 %v1725
    %2157 = vmatpush.msra.mxu0 %v1721
    %2158 = vmatpush.msra.mxu0 %v1717
    %2159 = vmatpush.msra.mxu0 %v1713
    %2160 = vmatpush.msra.mxu0 %v1709
    %2161 = vmatmul.f32.gmra.mxu0 %v2104
    %v2162 = vpop.f32.mrf.mxu0
    %v2163 = vadd.f32 0.0, %v2162
    %2164 = vdwg.mxu0
    %2165 = vmatpush.msra.mxu0 %v1770
    %2166 = vmatpush.msra.mxu0 %v1766
    %2167 = vmatpush.msra.mxu0 %v1762
    %2168 = vmatpush.msra.mxu0 %v1758
    %2169 = vmatpush.msra.mxu0 %v1754
    %2170 = vmatpush.msra.mxu0 %v1750
    %2171 = vmatpush.msra.mxu0 %v1746
    %2172 = vmatpush.msra.mxu0 %v1742
    %2173 = vmatpush.msra.mxu0 %v1738
    %2174 = vmatpush.msra.mxu0 %v1734
    %2175 = vmatpush.msra.mxu0 %v1730
    %2176 = vmatpush.msra.mxu0 %v1726
    %2177 = vmatpush.msra.mxu0 %v1722
    %2178 = vmatpush.msra.mxu0 %v1718
    %2179 = vmatpush.msra.mxu0 %v1714
    %2180 = vmatpush.msra.mxu0 %v1710
    %2181 = vmatmul.f32.gmra.mxu0 %v2104
    %v2182 = vpop.f32.mrf.mxu0
    %v2183 = vadd.f32 0.0, %v2182
    %2184 = vdwg.mxu0
    %v2185 = vadd.f32 %v1811, %v2123
    %v2186 = vadd.f32 %v1852, %v2143
    %v2187 = vadd.f32 %v1893, %v2163
    %v2188 = vadd.f32 %v1934, %v2183
    %v2189 = vxor.u32 %v2185, 2147483648
    %v2190 = vmul.f32 %v2189, 1.442695
    %v2191 = vpow.pop %v2190
    %v2192 = vadd.f32 %v2191, 1.0
    %v2193 = vrcp.pop %v2192
    %v2194 = vmul.f32 %v2192, %v2193
    %v2195 = vsub.f32 1.0, %v2194
    %v2196 = vmul.f32 %v2193, %v2195
    %v2197 = vadd.f32 %v2193, %v2196
    %vm2198 = vweird.f32 %v2192
    %vm2199 = vweird.f32 %v2193
    %vm2200 = vmor %vm2198, %vm2199
    %v2201 = vsel %vm2200, %v2193, %v2197
    %v2202 = vand.u32 2147483647, %v2192
    %vm2203 = vcmp.eq.f32.partialorder %v2202, 8.507059e+37
    %v2204 = vand.u32 %v2192, 2147483648
    %v2205 = vor.u32 1.1754944e-38, %v2204
    %v2206 = vsel %vm2203, %v2205, %v2201
    %v2207 = vmul.f32 1.0, %v2206
    %v2208 = vxor.u32 %v2186, 2147483648
    %v2209 = vmul.f32 %v2208, 1.442695
    %v2210 = vpow.pop %v2209
    %v2211 = vadd.f32 %v2210, 1.0
    %v2212 = vrcp.pop %v2211
    %v2213 = vmul.f32 %v2211, %v2212
    %v2214 = vsub.f32 1.0, %v2213
    %v2215 = vmul.f32 %v2212, %v2214
    %v2216 = vadd.f32 %v2212, %v2215
    %vm2217 = vweird.f32 %v2211
    %vm2218 = vweird.f32 %v2212
    %vm2219 = vmor %vm2217, %vm2218
    %v2220 = vsel %vm2219, %v2212, %v2216
    %v2221 = vand.u32 2147483647, %v2211
    %vm2222 = vcmp.eq.f32.partialorder %v2221, 8.507059e+37
    %v2223 = vand.u32 %v2211, 2147483648
    %v2224 = vor.u32 1.1754944e-38, %v2223
    %v2225 = vsel %vm2222, %v2224, %v2220
    %v2226 = vmul.f32 1.0, %v2225
    %v2227 = vtanh.pop %v2187
    %v2228 = vxor.u32 %v2188, 2147483648
    %v2229 = vmul.f32 %v2228, 1.442695
    %v2230 = vpow.pop %v2229
    %v2231 = vadd.f32 %v2230, 1.0
    %v2232 = vrcp.pop %v2231
    %v2233 = vmul.f32 %v2231, %v2232
    %v2234 = vsub.f32 1.0, %v2233
    %v2235 = vmul.f32 %v2232, %v2234
    %v2236 = vadd.f32 %v2232, %v2235
    %vm2237 = vweird.f32 %v2231
    %vm2238 = vweird.f32 %v2232
    %vm2239 = vmor %vm2237, %vm2238
    %v2240 = vsel %vm2239, %v2232, %v2236
    %v2241 = vand.u32 2147483647, %v2231
    %vm2242 = vcmp.eq.f32.partialorder %v2241, 8.507059e+37
    %v2243 = vand.u32 %v2231, 2147483648
    %v2244 = vor.u32 1.1754944e-38, %v2243
    %v2245 = vsel %vm2242, %v2244, %v2240
    %v2246 = vmul.f32 1.0, %v2245
    %v2247 = vmul.f32 %v2226, %v2102
    %v2248 = vmul.f32 %v2207, %v2227
    %v2249 = vadd.f32 %v2247, %v2248
    %v2250 = vtanh.pop %v2249
    %v2251 = vmul.f32 %v2246, %v2250
    %2252 = vmatpush.msra.mxu0 %v1767
    %2253 = vmatpush.msra.mxu0 %v1763
    %2254 = vmatpush.msra.mxu0 %v1759
    %2255 = vmatpush.msra.mxu0 %v1755
    %2256 = vmatpush.msra.mxu0 %v1751
    %2257 = vmatpush.msra.mxu0 %v1747
    %2258 = vmatpush.msra.mxu0 %v1743
    %2259 = vmatpush.msra.mxu0 %v1739
    %2260 = vmatpush.msra.mxu0 %v1735
    %2261 = vmatpush.msra.mxu0 %v1731
    %2262 = vmatpush.msra.mxu0 %v1727
    %2263 = vmatpush.msra.mxu0 %v1723
    %2264 = vmatpush.msra.mxu0 %v1719
    %2265 = vmatpush.msra.mxu0 %v1715
    %2266 = vmatpush.msra.mxu0 %v1711
    %2267 = vmatpush.msra.mxu0 %v1707
    %2268 = vmatmul.f32.gmra.mxu0 %v2251
    %v2269 = vpop.f32.mrf.mxu0
    %v2270 = vadd.f32 0.0, %v2269
    %2271 = vdwg.mxu0
    %2272 = vmatpush.msra.mxu0 %v1768
    %2273 = vmatpush.msra.mxu0 %v1764
    %2274 = vmatpush.msra.mxu0 %v1760
    %2275 = vmatpush.msra.mxu0 %v1756
    %2276 = vmatpush.msra.mxu0 %v1752
    %2277 = vmatpush.msra.mxu0 %v1748
    %2278 = vmatpush.msra.mxu0 %v1744
    %2279 = vmatpush.msra.mxu0 %v1740
    %2280 = vmatpush.msra.mxu0 %v1736
    %2281 = vmatpush.msra.mxu0 %v1732
    %2282 = vmatpush.msra.mxu0 %v1728
    %2283 = vmatpush.msra.mxu0 %v1724
    %2284 = vmatpush.msra.mxu0 %v1720
    %2285 = vmatpush.msra.mxu0 %v1716
    %2286 = vmatpush.msra.mxu0 %v1712
    %2287 = vmatpush.msra.mxu0 %v1708
    %2288 = vmatmul.f32.gmra.mxu0 %v2251
    %v2289 = vpop.f32.mrf.mxu0
    %v2290 = vadd.f32 0.0, %v2289
    %2291 = vdwg.mxu0
    %2292 = vmatpush.msra.mxu0 %v1769
    %2293 = vmatpush.msra.mxu0 %v1765
    %2294 = vmatpush.msra.mxu0 %v1761
    %2295 = vmatpush.msra.mxu0 %v1757
    %2296 = vmatpush.msra.mxu0 %v1753
    %2297 = vmatpush.msra.mxu0 %v1749
    %2298 = vmatpush.msra.mxu0 %v1745
    %2299 = vmatpush.msra.mxu0 %v1741
    %2300 = vmatpush.msra.mxu0 %v1737
    %2301 = vmatpush.msra.mxu0 %v1733
    %2302 = vmatpush.msra.mxu0 %v1729
    %2303 = vmatpush.msra.mxu0 %v1725
    %2304 = vmatpush.msra.mxu0 %v1721
    %2305 = vmatpush.msra.mxu0 %v1717
    %2306 = vmatpush.msra.mxu0 %v1713
    %2307 = vmatpush.msra.mxu0 %v1709
    %2308 = vmatmul.f32.gmra.mxu0 %v2251
    %v2309 = vpop.f32.mrf.mxu0
    %v2310 = vadd.f32 0.0, %v2309
    %2311 = vdwg.mxu0
    %2312 = vmatpush.msra.mxu0 %v1770
    %2313 = vmatpush.msra.mxu0 %v1766
    %2314 = vmatpush.msra.mxu0 %v1762
    %2315 = vmatpush.msra.mxu0 %v1758
    %2316 = vmatpush.msra.mxu0 %v1754
    %2317 = vmatpush.msra.mxu0 %v1750
    %2318 = vmatpush.msra.mxu0 %v1746
    %2319 = vmatpush.msra.mxu0 %v1742
    %2320 = vmatpush.msra.mxu0 %v1738
    %2321 = vmatpush.msra.mxu0 %v1734
    %2322 = vmatpush.msra.mxu0 %v1730
    %2323 = vmatpush.msra.mxu0 %v1726
    %2324 = vmatpush.msra.mxu0 %v1722
    %2325 = vmatpush.msra.mxu0 %v1718
    %2326 = vmatpush.msra.mxu0 %v1714
    %2327 = vmatpush.msra.mxu0 %v1710
    %2328 = vmatmul.f32.gmra.mxu0 %v2251
    %v2329 = vpop.f32.mrf.mxu0
    %v2330 = vadd.f32 0.0, %v2329
    %2331 = vdwg.mxu0
    %v2332 = vadd.f32 %v1814, %v2270
    %v2333 = vadd.f32 %v1855, %v2290
    %v2334 = vadd.f32 %v1896, %v2310
    %v2335 = vadd.f32 %v1937, %v2330
    %v2336 = vxor.u32 %v2332, 2147483648
    %v2337 = vmul.f32 %v2336, 1.442695
    %v2338 = vpow.pop %v2337
    %v2339 = vadd.f32 %v2338, 1.0
    %v2340 = vrcp.pop %v2339
    %v2341 = vmul.f32 %v2339, %v2340
    %v2342 = vsub.f32 1.0, %v2341
    %v2343 = vmul.f32 %v2340, %v2342
    %v2344 = vadd.f32 %v2340, %v2343
    %vm2345 = vweird.f32 %v2339
    %vm2346 = vweird.f32 %v2340
    %vm2347 = vmor %vm2345, %vm2346
    %v2348 = vsel %vm2347, %v2340, %v2344
    %v2349 = vand.u32 2147483647, %v2339
    %vm2350 = vcmp.eq.f32.partialorder %v2349, 8.507059e+37
    %v2351 = vand.u32 %v2339, 2147483648
    %v2352 = vor.u32 1.1754944e-38, %v2351
    %v2353 = vsel %vm2350, %v2352, %v2348
    %v2354 = vmul.f32 1.0, %v2353
    %v2355 = vxor.u32 %v2333, 2147483648
    %v2356 = vmul.f32 %v2355, 1.442695
    %v2357 = vpow.pop %v2356
    %v2358 = vadd.f32 %v2357, 1.0
    %v2359 = vrcp.pop %v2358
    %v2360 = vmul.f32 %v2358, %v2359
    %v2361 = vsub.f32 1.0, %v2360
    %v2362 = vmul.f32 %v2359, %v2361
    %v2363 = vadd.f32 %v2359, %v2362
    %vm2364 = vweird.f32 %v2358
    %vm2365 = vweird.f32 %v2359
    %vm2366 = vmor %vm2364, %vm2365
    %v2367 = vsel %vm2366, %v2359, %v2363
    %v2368 = vand.u32 2147483647, %v2358
    %vm2369 = vcmp.eq.f32.partialorder %v2368, 8.507059e+37
    %v2370 = vand.u32 %v2358, 2147483648
    %v2371 = vor.u32 1.1754944e-38, %v2370
    %v2372 = vsel %vm2369, %v2371, %v2367
    %v2373 = vmul.f32 1.0, %v2372
    %v2374 = vtanh.pop %v2334
    %v2375 = vxor.u32 %v2335, 2147483648
    %v2376 = vmul.f32 %v2375, 1.442695
    %v2377 = vpow.pop %v2376
    %v2378 = vadd.f32 %v2377, 1.0
    %v2379 = vrcp.pop %v2378
    %v2380 = vmul.f32 %v2378, %v2379
    %v2381 = vsub.f32 1.0, %v2380
    %v2382 = vmul.f32 %v2379, %v2381
    %v2383 = vadd.f32 %v2379, %v2382
    %vm2384 = vweird.f32 %v2378
    %vm2385 = vweird.f32 %v2379
    %vm2386 = vmor %vm2384, %vm2385
    %v2387 = vsel %vm2386, %v2379, %v2383
    %v2388 = vand.u32 2147483647, %v2378
    %vm2389 = vcmp.eq.f32.partialorder %v2388, 8.507059e+37
    %v2390 = vand.u32 %v2378, 2147483648
    %v2391 = vor.u32 1.1754944e-38, %v2390
    %v2392 = vsel %vm2389, %v2391, %v2387
    %v2393 = vmul.f32 1.0, %v2392
    %v2394 = vmul.f32 %v2373, %v2249
    %v2395 = vmul.f32 %v2354, %v2374
    %v2396 = vadd.f32 %v2394, %v2395
    %v2397 = vtanh.pop %v2396
    %v2398 = vmul.f32 %v2393, %v2397
    %2399 = vmatpush.msra.mxu0 %v1767
    %2400 = vmatpush.msra.mxu0 %v1763
    %2401 = vmatpush.msra.mxu0 %v1759
    %2402 = vmatpush.msra.mxu0 %v1755
    %2403 = vmatpush.msra.mxu0 %v1751
    %2404 = vmatpush.msra.mxu0 %v1747
    %2405 = vmatpush.msra.mxu0 %v1743
    %2406 = vmatpush.msra.mxu0 %v1739
    %2407 = vmatpush.msra.mxu0 %v1735
    %2408 = vmatpush.msra.mxu0 %v1731
    %2409 = vmatpush.msra.mxu0 %v1727
    %2410 = vmatpush.msra.mxu0 %v1723
    %2411 = vmatpush.msra.mxu0 %v1719
    %2412 = vmatpush.msra.mxu0 %v1715
    %2413 = vmatpush.msra.mxu0 %v1711
    %2414 = vmatpush.msra.mxu0 %v1707
    %2415 = vmatmul.f32.gmra.mxu0 %v2398
    %v2416 = vpop.f32.mrf.mxu0
    %v2417 = vadd.f32 0.0, %v2416
    %2418 = vdwg.mxu0
    %2419 = vmatpush.msra.mxu0 %v1768
    %2420 = vmatpush.msra.mxu0 %v1764
    %2421 = vmatpush.msra.mxu0 %v1760
    %2422 = vmatpush.msra.mxu0 %v1756
    %2423 = vmatpush.msra.mxu0 %v1752
    %2424 = vmatpush.msra.mxu0 %v1748
    %2425 = vmatpush.msra.mxu0 %v1744
    %2426 = vmatpush.msra.mxu0 %v1740
    %2427 = vmatpush.msra.mxu0 %v1736
    %2428 = vmatpush.msra.mxu0 %v1732
    %2429 = vmatpush.msra.mxu0 %v1728
    %2430 = vmatpush.msra.mxu0 %v1724
    %2431 = vmatpush.msra.mxu0 %v1720
    %2432 = vmatpush.msra.mxu0 %v1716
    %2433 = vmatpush.msra.mxu0 %v1712
    %2434 = vmatpush.msra.mxu0 %v1708
    %2435 = vmatmul.f32.gmra.mxu0 %v2398
    %v2436 = vpop.f32.mrf.mxu0
    %v2437 = vadd.f32 0.0, %v2436
    %2438 = vdwg.mxu0
    %2439 = vmatpush.msra.mxu0 %v1769
    %2440 = vmatpush.msra.mxu0 %v1765
    %2441 = vmatpush.msra.mxu0 %v1761
    %2442 = vmatpush.msra.mxu0 %v1757
    %2443 = vmatpush.msra.mxu0 %v1753
    %2444 = vmatpush.msra.mxu0 %v1749
    %2445 = vmatpush.msra.mxu0 %v1745
    %2446 = vmatpush.msra.mxu0 %v1741
    %2447 = vmatpush.msra.mxu0 %v1737
    %2448 = vmatpush.msra.mxu0 %v1733
    %2449 = vmatpush.msra.mxu0 %v1729
    %2450 = vmatpush.msra.mxu0 %v1725
    %2451 = vmatpush.msra.mxu0 %v1721
    %2452 = vmatpush.msra.mxu0 %v1717
    %2453 = vmatpush.msra.mxu0 %v1713
    %2454 = vmatpush.msra.mxu0 %v1709
    %2455 = vmatmul.f32.gmra.mxu0 %v2398
    %v2456 = vpop.f32.mrf.mxu0
    %v2457 = vadd.f32 0.0, %v2456
    %2458 = vdwg.mxu0
    %2459 = vmatpush.msra.mxu0 %v1770
    %2460 = vmatpush.msra.mxu0 %v1766
    %2461 = vmatpush.msra.mxu0 %v1762
    %2462 = vmatpush.msra.mxu0 %v1758
    %2463 = vmatpush.msra.mxu0 %v1754
    %2464 = vmatpush.msra.mxu0 %v1750
    %2465 = vmatpush.msra.mxu0 %v1746
    %2466 = vmatpush.msra.mxu0 %v1742
    %2467 = vmatpush.msra.mxu0 %v1738
    %2468 = vmatpush.msra.mxu0 %v1734
    %2469 = vmatpush.msra.mxu0 %v1730
    %2470 = vmatpush.msra.mxu0 %v1726
    %2471 = vmatpush.msra.mxu0 %v1722
    %2472 = vmatpush.msra.mxu0 %v1718
    %2473 = vmatpush.msra.mxu0 %v1714
    %2474 = vmatpush.msra.mxu0 %v1710
    %2475 = vmatmul.f32.gmra.mxu0 %v2398
    %v2476 = vpop.f32.mrf.mxu0
    %v2477 = vadd.f32 0.0, %v2476
    %2478 = vdwg.mxu0
    %v2479 = vadd.f32 %v1817, %v2417
    %v2480 = vadd.f32 %v1858, %v2437
    %v2481 = vadd.f32 %v1899, %v2457
    %v2482 = vadd.f32 %v1940, %v2477
    %v2483 = vxor.u32 %v2479, 2147483648
    %v2484 = vmul.f32 %v2483, 1.442695
    %v2485 = vpow.pop %v2484
    %v2486 = vadd.f32 %v2485, 1.0
    %v2487 = vrcp.pop %v2486
    %v2488 = vmul.f32 %v2486, %v2487
    %v2489 = vsub.f32 1.0, %v2488
    %v2490 = vmul.f32 %v2487, %v2489
    %v2491 = vadd.f32 %v2487, %v2490
    %vm2492 = vweird.f32 %v2486
    %vm2493 = vweird.f32 %v2487
    %vm2494 = vmor %vm2492, %vm2493
    %v2495 = vsel %vm2494, %v2487, %v2491
    %v2496 = vand.u32 2147483647, %v2486
    %vm2497 = vcmp.eq.f32.partialorder %v2496, 8.507059e+37
    %v2498 = vand.u32 %v2486, 2147483648
    %v2499 = vor.u32 1.1754944e-38, %v2498
    %v2500 = vsel %vm2497, %v2499, %v2495
    %v2501 = vmul.f32 1.0, %v2500
    %v2502 = vxor.u32 %v2480, 2147483648
    %v2503 = vmul.f32 %v2502, 1.442695
    %v2504 = vpow.pop %v2503
    %v2505 = vadd.f32 %v2504, 1.0
    %v2506 = vrcp.pop %v2505
    %v2507 = vmul.f32 %v2505, %v2506
    %v2508 = vsub.f32 1.0, %v2507
    %v2509 = vmul.f32 %v2506, %v2508
    %v2510 = vadd.f32 %v2506, %v2509
    %vm2511 = vweird.f32 %v2505
    %vm2512 = vweird.f32 %v2506
    %vm2513 = vmor %vm2511, %vm2512
    %v2514 = vsel %vm2513, %v2506, %v2510
    %v2515 = vand.u32 2147483647, %v2505
    %vm2516 = vcmp.eq.f32.partialorder %v2515, 8.507059e+37
    %v2517 = vand.u32 %v2505, 2147483648
    %v2518 = vor.u32 1.1754944e-38, %v2517
    %v2519 = vsel %vm2516, %v2518, %v2514
    %v2520 = vmul.f32 1.0, %v2519
    %v2521 = vtanh.pop %v2481
    %v2522 = vxor.u32 %v2482, 2147483648
    %v2523 = vmul.f32 %v2522, 1.442695
    %v2524 = vpow.pop %v2523
    %v2525 = vadd.f32 %v2524, 1.0
    %v2526 = vrcp.pop %v2525
    %v2527 = vmul.f32 %v2525, %v2526
    %v2528 = vsub.f32 1.0, %v2527
    %v2529 = vmul.f32 %v2526, %v2528
    %v2530 = vadd.f32 %v2526, %v2529
    %vm2531 = vweird.f32 %v2525
    %vm2532 = vweird.f32 %v2526
    %vm2533 = vmor %vm2531, %vm2532
    %v2534 = vsel %vm2533, %v2526, %v2530
    %v2535 = vand.u32 2147483647, %v2525
    %vm2536 = vcmp.eq.f32.partialorder %v2535, 8.507059e+37
    %v2537 = vand.u32 %v2525, 2147483648
    %v2538 = vor.u32 1.1754944e-38, %v2537
    %v2539 = vsel %vm2536, %v2538, %v2534
    %v2540 = vmul.f32 1.0, %v2539
    %v2541 = vmul.f32 %v2520, %v2396
    %v2542 = vmul.f32 %v2501, %v2521
    %v2543 = vadd.f32 %v2541, %v2542
    %v2544 = vtanh.pop %v2543
    %v2545 = vmul.f32 %v2540, %v2544
    %2546 = vmatpush.msra.mxu0 %v1767
    %2547 = vmatpush.msra.mxu0 %v1763
    %2548 = vmatpush.msra.mxu0 %v1759
    %2549 = vmatpush.msra.mxu0 %v1755
    %2550 = vmatpush.msra.mxu0 %v1751
    %2551 = vmatpush.msra.mxu0 %v1747
    %2552 = vmatpush.msra.mxu0 %v1743
    %2553 = vmatpush.msra.mxu0 %v1739
    %2554 = vmatpush.msra.mxu0 %v1735
    %2555 = vmatpush.msra.mxu0 %v1731
    %2556 = vmatpush.msra.mxu0 %v1727
    %2557 = vmatpush.msra.mxu0 %v1723
    %2558 = vmatpush.msra.mxu0 %v1719
    %2559 = vmatpush.msra.mxu0 %v1715
    %2560 = vmatpush.msra.mxu0 %v1711
    %2561 = vmatpush.msra.mxu0 %v1707
    %2562 = vmatmul.f32.gmra.mxu0 %v2545
    %v2563 = vpop.f32.mrf.mxu0
    %v2564 = vadd.f32 0.0, %v2563
    %2565 = vdwg.mxu0
    %2566 = vmatpush.msra.mxu0 %v1768
    %2567 = vmatpush.msra.mxu0 %v1764
    %2568 = vmatpush.msra.mxu0 %v1760
    %2569 = vmatpush.msra.mxu0 %v1756
    %2570 = vmatpush.msra.mxu0 %v1752
    %2571 = vmatpush.msra.mxu0 %v1748
    %2572 = vmatpush.msra.mxu0 %v1744
    %2573 = vmatpush.msra.mxu0 %v1740
    %2574 = vmatpush.msra.mxu0 %v1736
    %2575 = vmatpush.msra.mxu0 %v1732
    %2576 = vmatpush.msra.mxu0 %v1728
    %2577 = vmatpush.msra.mxu0 %v1724
    %2578 = vmatpush.msra.mxu0 %v1720
    %2579 = vmatpush.msra.mxu0 %v1716
    %2580 = vmatpush.msra.mxu0 %v1712
    %2581 = vmatpush.msra.mxu0 %v1708
    %2582 = vmatmul.f32.gmra.mxu0 %v2545
    %v2583 = vpop.f32.mrf.mxu0
    %v2584 = vadd.f32 0.0, %v2583
    %2585 = vdwg.mxu0
    %2586 = vmatpush.msra.mxu0 %v1769
    %2587 = vmatpush.msra.mxu0 %v1765
    %2588 = vmatpush.msra.mxu0 %v1761
    %2589 = vmatpush.msra.mxu0 %v1757
    %2590 = vmatpush.msra.mxu0 %v1753
    %2591 = vmatpush.msra.mxu0 %v1749
    %2592 = vmatpush.msra.mxu0 %v1745
    %2593 = vmatpush.msra.mxu0 %v1741
    %2594 = vmatpush.msra.mxu0 %v1737
    %2595 = vmatpush.msra.mxu0 %v1733
    %2596 = vmatpush.msra.mxu0 %v1729
    %2597 = vmatpush.msra.mxu0 %v1725
    %2598 = vmatpush.msra.mxu0 %v1721
    %2599 = vmatpush.msra.mxu0 %v1717
    %2600 = vmatpush.msra.mxu0 %v1713
    %2601 = vmatpush.msra.mxu0 %v1709
    %2602 = vmatmul.f32.gmra.mxu0 %v2545
    %v2603 = vpop.f32.mrf.mxu0
    %v2604 = vadd.f32 0.0, %v2603
    %2605 = vdwg.mxu0
    %2606 = vmatpush.msra.mxu0 %v1770
    %2607 = vmatpush.msra.mxu0 %v1766
    %2608 = vmatpush.msra.mxu0 %v1762
    %2609 = vmatpush.msra.mxu0 %v1758
    %2610 = vmatpush.msra.mxu0 %v1754
    %2611 = vmatpush.msra.mxu0 %v1750
    %2612 = vmatpush.msra.mxu0 %v1746
    %2613 = vmatpush.msra.mxu0 %v1742
    %2614 = vmatpush.msra.mxu0 %v1738
    %2615 = vmatpush.msra.mxu0 %v1734
    %2616 = vmatpush.msra.mxu0 %v1730
    %2617 = vmatpush.msra.mxu0 %v1726
    %2618 = vmatpush.msra.mxu0 %v1722
    %2619 = vmatpush.msra.mxu0 %v1718
    %2620 = vmatpush.msra.mxu0 %v1714
    %2621 = vmatpush.msra.mxu0 %v1710
    %2622 = vmatmul.f32.gmra.mxu0 %v2545
    %v2623 = vpop.f32.mrf.mxu0
    %v2624 = vadd.f32 0.0, %v2623
    %2625 = vdwg.mxu0
    %v2626 = vadd.f32 %v1820, %v2564
    %v2627 = vadd.f32 %v1861, %v2584
    %v2628 = vadd.f32 %v1902, %v2604
    %v2629 = vadd.f32 %v1943, %v2624
    %v2630 = vxor.u32 %v2626, 2147483648
    %v2631 = vmul.f32 %v2630, 1.442695
    %v2632 = vpow.pop %v2631
    %v2633 = vadd.f32 %v2632, 1.0
    %v2634 = vrcp.pop %v2633
    %v2635 = vmul.f32 %v2633, %v2634
    %v2636 = vsub.f32 1.0, %v2635
    %v2637 = vmul.f32 %v2634, %v2636
    %v2638 = vadd.f32 %v2634, %v2637
    %vm2639 = vweird.f32 %v2633
    %vm2640 = vweird.f32 %v2634
    %vm2641 = vmor %vm2639, %vm2640
    %v2642 = vsel %vm2641, %v2634, %v2638
    %v2643 = vand.u32 2147483647, %v2633
    %vm2644 = vcmp.eq.f32.partialorder %v2643, 8.507059e+37
    %v2645 = vand.u32 %v2633, 2147483648
    %v2646 = vor.u32 1.1754944e-38, %v2645
    %v2647 = vsel %vm2644, %v2646, %v2642
    %v2648 = vmul.f32 1.0, %v2647
    %v2649 = vxor.u32 %v2627, 2147483648
    %v2650 = vmul.f32 %v2649, 1.442695
    %v2651 = vpow.pop %v2650
    %v2652 = vadd.f32 %v2651, 1.0
    %v2653 = vrcp.pop %v2652
    %v2654 = vmul.f32 %v2652, %v2653
    %v2655 = vsub.f32 1.0, %v2654
    %v2656 = vmul.f32 %v2653, %v2655
    %v2657 = vadd.f32 %v2653, %v2656
    %vm2658 = vweird.f32 %v2652
    %vm2659 = vweird.f32 %v2653
    %vm2660 = vmor %vm2658, %vm2659
    %v2661 = vsel %vm2660, %v2653, %v2657
    %v2662 = vand.u32 2147483647, %v2652
    %vm2663 = vcmp.eq.f32.partialorder %v2662, 8.507059e+37
    %v2664 = vand.u32 %v2652, 2147483648
    %v2665 = vor.u32 1.1754944e-38, %v2664
    %v2666 = vsel %vm2663, %v2665, %v2661
    %v2667 = vmul.f32 1.0, %v2666
    %v2668 = vtanh.pop %v2628
    %v2669 = vxor.u32 %v2629, 2147483648
    %v2670 = vmul.f32 %v2669, 1.442695
    %v2671 = vpow.pop %v2670
    %v2672 = vadd.f32 %v2671, 1.0
    %v2673 = vrcp.pop %v2672
    %v2674 = vmul.f32 %v2672, %v2673
    %v2675 = vsub.f32 1.0, %v2674
    %v2676 = vmul.f32 %v2673, %v2675
    %v2677 = vadd.f32 %v2673, %v2676
    %vm2678 = vweird.f32 %v2672
    %vm2679 = vweird.f32 %v2673
    %vm2680 = vmor %vm2678, %vm2679
    %v2681 = vsel %vm2680, %v2673, %v2677
    %v2682 = vand.u32 2147483647, %v2672
    %vm2683 = vcmp.eq.f32.partialorder %v2682, 8.507059e+37
    %v2684 = vand.u32 %v2672, 2147483648
    %v2685 = vor.u32 1.1754944e-38, %v2684
    %v2686 = vsel %vm2683, %v2685, %v2681
    %v2687 = vmul.f32 1.0, %v2686
    %v2688 = vmul.f32 %v2667, %v2543
    %v2689 = vmul.f32 %v2648, %v2668
    %v2690 = vadd.f32 %v2688, %v2689
    %v2691 = vtanh.pop %v2690
    %v2692 = vmul.f32 %v2687, %v2691
    %2693 = vmatpush.msra.mxu0 %v1767
    %2694 = vmatpush.msra.mxu0 %v1763
    %2695 = vmatpush.msra.mxu0 %v1759
    %2696 = vmatpush.msra.mxu0 %v1755
    %2697 = vmatpush.msra.mxu0 %v1751
    %2698 = vmatpush.msra.mxu0 %v1747
    %2699 = vmatpush.msra.mxu0 %v1743
    %2700 = vmatpush.msra.mxu0 %v1739
    %2701 = vmatpush.msra.mxu0 %v1735
    %2702 = vmatpush.msra.mxu0 %v1731
    %2703 = vmatpush.msra.mxu0 %v1727
    %2704 = vmatpush.msra.mxu0 %v1723
    %2705 = vmatpush.msra.mxu0 %v1719
    %2706 = vmatpush.msra.mxu0 %v1715
    %2707 = vmatpush.msra.mxu0 %v1711
    %2708 = vmatpush.msra.mxu0 %v1707
    %2709 = vmatmul.f32.gmra.mxu0 %v2692
    %v2710 = vpop.f32.mrf.mxu0
    %v2711 = vadd.f32 0.0, %v2710
    %2712 = vdwg.mxu0
    %2713 = vmatpush.msra.mxu0 %v1768
    %2714 = vmatpush.msra.mxu0 %v1764
    %2715 = vmatpush.msra.mxu0 %v1760
    %2716 = vmatpush.msra.mxu0 %v1756
    %2717 = vmatpush.msra.mxu0 %v1752
    %2718 = vmatpush.msra.mxu0 %v1748
    %2719 = vmatpush.msra.mxu0 %v1744
    %2720 = vmatpush.msra.mxu0 %v1740
    %2721 = vmatpush.msra.mxu0 %v1736
    %2722 = vmatpush.msra.mxu0 %v1732
    %2723 = vmatpush.msra.mxu0 %v1728
    %2724 = vmatpush.msra.mxu0 %v1724
    %2725 = vmatpush.msra.mxu0 %v1720
    %2726 = vmatpush.msra.mxu0 %v1716
    %2727 = vmatpush.msra.mxu0 %v1712
    %2728 = vmatpush.msra.mxu0 %v1708
    %2729 = vmatmul.f32.gmra.mxu0 %v2692
    %v2730 = vpop.f32.mrf.mxu0
    %v2731 = vadd.f32 0.0, %v2730
    %2732 = vdwg.mxu0
    %2733 = vmatpush.msra.mxu0 %v1769
    %2734 = vmatpush.msra.mxu0 %v1765
    %2735 = vmatpush.msra.mxu0 %v1761
    %2736 = vmatpush.msra.mxu0 %v1757
    %2737 = vmatpush.msra.mxu0 %v1753
    %2738 = vmatpush.msra.mxu0 %v1749
    %2739 = vmatpush.msra.mxu0 %v1745
    %2740 = vmatpush.msra.mxu0 %v1741
    %2741 = vmatpush.msra.mxu0 %v1737
    %2742 = vmatpush.msra.mxu0 %v1733
    %2743 = vmatpush.msra.mxu0 %v1729
    %2744 = vmatpush.msra.mxu0 %v1725
    %2745 = vmatpush.msra.mxu0 %v1721
    %2746 = vmatpush.msra.mxu0 %v1717
    %2747 = vmatpush.msra.mxu0 %v1713
    %2748 = vmatpush.msra.mxu0 %v1709
    %2749 = vmatmul.f32.gmra.mxu0 %v2692
    %v2750 = vpop.f32.mrf.mxu0
    %v2751 = vadd.f32 0.0, %v2750
    %2752 = vdwg.mxu0
    %2753 = vmatpush.msra.mxu0 %v1770
    %2754 = vmatpush.msra.mxu0 %v1766
    %2755 = vmatpush.msra.mxu0 %v1762
    %2756 = vmatpush.msra.mxu0 %v1758
    %2757 = vmatpush.msra.mxu0 %v1754
    %2758 = vmatpush.msra.mxu0 %v1750
    %2759 = vmatpush.msra.mxu0 %v1746
    %2760 = vmatpush.msra.mxu0 %v1742
    %2761 = vmatpush.msra.mxu0 %v1738
    %2762 = vmatpush.msra.mxu0 %v1734
    %2763 = vmatpush.msra.mxu0 %v1730
    %2764 = vmatpush.msra.mxu0 %v1726
    %2765 = vmatpush.msra.mxu0 %v1722
    %2766 = vmatpush.msra.mxu0 %v1718
    %2767 = vmatpush.msra.mxu0 %v1714
    %2768 = vmatpush.msra.mxu0 %v1710
    %2769 = vmatmul.f32.gmra.mxu0 %v2692
    %v2770 = vpop.f32.mrf.mxu0
    %v2771 = vadd.f32 0.0, %v2770
    %2772 = vdwg.mxu0
    %v2773 = vadd.f32 %v1823, %v2711
    %v2774 = vadd.f32 %v1864, %v2731
    %v2775 = vadd.f32 %v1905, %v2751
    %v2776 = vadd.f32 %v1946, %v2771
    %v2777 = vxor.u32 %v2773, 2147483648
    %v2778 = vmul.f32 %v2777, 1.442695
    %v2779 = vpow.pop %v2778
    %v2780 = vadd.f32 %v2779, 1.0
    %v2781 = vrcp.pop %v2780
    %v2782 = vmul.f32 %v2780, %v2781
    %v2783 = vsub.f32 1.0, %v2782
    %v2784 = vmul.f32 %v2781, %v2783
    %v2785 = vadd.f32 %v2781, %v2784
    %vm2786 = vweird.f32 %v2780
    %vm2787 = vweird.f32 %v2781
    %vm2788 = vmor %vm2786, %vm2787
    %v2789 = vsel %vm2788, %v2781, %v2785
    %v2790 = vand.u32 2147483647, %v2780
    %vm2791 = vcmp.eq.f32.partialorder %v2790, 8.507059e+37
    %v2792 = vand.u32 %v2780, 2147483648
    %v2793 = vor.u32 1.1754944e-38, %v2792
    %v2794 = vsel %vm2791, %v2793, %v2789
    %v2795 = vmul.f32 1.0, %v2794
    %v2796 = vxor.u32 %v2774, 2147483648
    %v2797 = vmul.f32 %v2796, 1.442695
    %v2798 = vpow.pop %v2797
    %v2799 = vadd.f32 %v2798, 1.0
    %v2800 = vrcp.pop %v2799
    %v2801 = vmul.f32 %v2799, %v2800
    %v2802 = vsub.f32 1.0, %v2801
    %v2803 = vmul.f32 %v2800, %v2802
    %v2804 = vadd.f32 %v2800, %v2803
    %vm2805 = vweird.f32 %v2799
    %vm2806 = vweird.f32 %v2800
    %vm2807 = vmor %vm2805, %vm2806
    %v2808 = vsel %vm2807, %v2800, %v2804
    %v2809 = vand.u32 2147483647, %v2799
    %vm2810 = vcmp.eq.f32.partialorder %v2809, 8.507059e+37
    %v2811 = vand.u32 %v2799, 2147483648
    %v2812 = vor.u32 1.1754944e-38, %v2811
    %v2813 = vsel %vm2810, %v2812, %v2808
    %v2814 = vmul.f32 1.0, %v2813
    %v2815 = vtanh.pop %v2775
    %v2816 = vxor.u32 %v2776, 2147483648
    %v2817 = vmul.f32 %v2816, 1.442695
    %v2818 = vpow.pop %v2817
    %v2819 = vadd.f32 %v2818, 1.0
    %v2820 = vrcp.pop %v2819
    %v2821 = vmul.f32 %v2819, %v2820
    %v2822 = vsub.f32 1.0, %v2821
    %v2823 = vmul.f32 %v2820, %v2822
    %v2824 = vadd.f32 %v2820, %v2823
    %vm2825 = vweird.f32 %v2819
    %vm2826 = vweird.f32 %v2820
    %vm2827 = vmor %vm2825, %vm2826
    %v2828 = vsel %vm2827, %v2820, %v2824
    %v2829 = vand.u32 2147483647, %v2819
    %vm2830 = vcmp.eq.f32.partialorder %v2829, 8.507059e+37
    %v2831 = vand.u32 %v2819, 2147483648
    %v2832 = vor.u32 1.1754944e-38, %v2831
    %v2833 = vsel %vm2830, %v2832, %v2828
    %v2834 = vmul.f32 1.0, %v2833
    %v2835 = vmul.f32 %v2814, %v2690
    %v2836 = vmul.f32 %v2795, %v2815
    %v2837 = vadd.f32 %v2835, %v2836
    %v2838 = vtanh.pop %v2837
    %v2839 = vmul.f32 %v2834, %v2838
    %2840 = vmatpush.msra.mxu0 %v1767
    %2841 = vmatpush.msra.mxu0 %v1763
    %2842 = vmatpush.msra.mxu0 %v1759
    %2843 = vmatpush.msra.mxu0 %v1755
    %2844 = vmatpush.msra.mxu0 %v1751
    %2845 = vmatpush.msra.mxu0 %v1747
    %2846 = vmatpush.msra.mxu0 %v1743
    %2847 = vmatpush.msra.mxu0 %v1739
    %2848 = vmatpush.msra.mxu0 %v1735
    %2849 = vmatpush.msra.mxu0 %v1731
    %2850 = vmatpush.msra.mxu0 %v1727
    %2851 = vmatpush.msra.mxu0 %v1723
    %2852 = vmatpush.msra.mxu0 %v1719
    %2853 = vmatpush.msra.mxu0 %v1715
    %2854 = vmatpush.msra.mxu0 %v1711
    %2855 = vmatpush.msra.mxu0 %v1707
    %2856 = vmatmul.f32.gmra.mxu0 %v2839
    %v2857 = vpop.f32.mrf.mxu0
    %v2858 = vadd.f32 0.0, %v2857
    %2859 = vdwg.mxu0
    %2860 = vmatpush.msra.mxu0 %v1768
    %2861 = vmatpush.msra.mxu0 %v1764
    %2862 = vmatpush.msra.mxu0 %v1760
    %2863 = vmatpush.msra.mxu0 %v1756
    %2864 = vmatpush.msra.mxu0 %v1752
    %2865 = vmatpush.msra.mxu0 %v1748
    %2866 = vmatpush.msra.mxu0 %v1744
    %2867 = vmatpush.msra.mxu0 %v1740
    %2868 = vmatpush.msra.mxu0 %v1736
    %2869 = vmatpush.msra.mxu0 %v1732
    %2870 = vmatpush.msra.mxu0 %v1728
    %2871 = vmatpush.msra.mxu0 %v1724
    %2872 = vmatpush.msra.mxu0 %v1720
    %2873 = vmatpush.msra.mxu0 %v1716
    %2874 = vmatpush.msra.mxu0 %v1712
    %2875 = vmatpush.msra.mxu0 %v1708
    %2876 = vmatmul.f32.gmra.mxu0 %v2839
    %v2877 = vpop.f32.mrf.mxu0
    %v2878 = vadd.f32 0.0, %v2877
    %2879 = vdwg.mxu0
    %2880 = vmatpush.msra.mxu0 %v1769
    %2881 = vmatpush.msra.mxu0 %v1765
    %2882 = vmatpush.msra.mxu0 %v1761
    %2883 = vmatpush.msra.mxu0 %v1757
    %2884 = vmatpush.msra.mxu0 %v1753
    %2885 = vmatpush.msra.mxu0 %v1749
    %2886 = vmatpush.msra.mxu0 %v1745
    %2887 = vmatpush.msra.mxu0 %v1741
    %2888 = vmatpush.msra.mxu0 %v1737
    %2889 = vmatpush.msra.mxu0 %v1733
    %2890 = vmatpush.msra.mxu0 %v1729
    %2891 = vmatpush.msra.mxu0 %v1725
    %2892 = vmatpush.msra.mxu0 %v1721
    %2893 = vmatpush.msra.mxu0 %v1717
    %2894 = vmatpush.msra.mxu0 %v1713
    %2895 = vmatpush.msra.mxu0 %v1709
    %2896 = vmatmul.f32.gmra.mxu0 %v2839
    %v2897 = vpop.f32.mrf.mxu0
    %v2898 = vadd.f32 0.0, %v2897
    %2899 = vdwg.mxu0
    %2900 = vmatpush.msra.mxu0 %v1770
    %2901 = vmatpush.msra.mxu0 %v1766
    %2902 = vmatpush.msra.mxu0 %v1762
    %2903 = vmatpush.msra.mxu0 %v1758
    %2904 = vmatpush.msra.mxu0 %v1754
    %2905 = vmatpush.msra.mxu0 %v1750
    %2906 = vmatpush.msra.mxu0 %v1746
    %2907 = vmatpush.msra.mxu0 %v1742
    %2908 = vmatpush.msra.mxu0 %v1738
    %2909 = vmatpush.msra.mxu0 %v1734
    %2910 = vmatpush.msra.mxu0 %v1730
    %2911 = vmatpush.msra.mxu0 %v1726
    %2912 = vmatpush.msra.mxu0 %v1722
    %2913 = vmatpush.msra.mxu0 %v1718
    %2914 = vmatpush.msra.mxu0 %v1714
    %2915 = vmatpush.msra.mxu0 %v1710
    %2916 = vmatmul.f32.gmra.mxu0 %v2839
    %v2917 = vpop.f32.mrf.mxu0
    %v2918 = vadd.f32 0.0, %v2917
    %2919 = vdwg.mxu0
    %v2920 = vadd.f32 %v1826, %v2858
    %v2921 = vadd.f32 %v1867, %v2878
    %v2922 = vadd.f32 %v1908, %v2898
    %v2923 = vadd.f32 %v1949, %v2918
    %v2924 = vxor.u32 %v2920, 2147483648
    %v2925 = vmul.f32 %v2924, 1.442695
    %v2926 = vpow.pop %v2925
    %v2927 = vadd.f32 %v2926, 1.0
    %v2928 = vrcp.pop %v2927
    %v2929 = vmul.f32 %v2927, %v2928
    %v2930 = vsub.f32 1.0, %v2929
    %v2931 = vmul.f32 %v2928, %v2930
    %v2932 = vadd.f32 %v2928, %v2931
    %vm2933 = vweird.f32 %v2927
    %vm2934 = vweird.f32 %v2928
    %vm2935 = vmor %vm2933, %vm2934
    %v2936 = vsel %vm2935, %v2928, %v2932
    %v2937 = vand.u32 2147483647, %v2927
    %vm2938 = vcmp.eq.f32.partialorder %v2937, 8.507059e+37
    %v2939 = vand.u32 %v2927, 2147483648
    %v2940 = vor.u32 1.1754944e-38, %v2939
    %v2941 = vsel %vm2938, %v2940, %v2936
    %v2942 = vmul.f32 1.0, %v2941
    %v2943 = vxor.u32 %v2921, 2147483648
    %v2944 = vmul.f32 %v2943, 1.442695
    %v2945 = vpow.pop %v2944
    %v2946 = vadd.f32 %v2945, 1.0
    %v2947 = vrcp.pop %v2946
    %v2948 = vmul.f32 %v2946, %v2947
    %v2949 = vsub.f32 1.0, %v2948
    %v2950 = vmul.f32 %v2947, %v2949
    %v2951 = vadd.f32 %v2947, %v2950
    %vm2952 = vweird.f32 %v2946
    %vm2953 = vweird.f32 %v2947
    %vm2954 = vmor %vm2952, %vm2953
    %v2955 = vsel %vm2954, %v2947, %v2951
    %v2956 = vand.u32 2147483647, %v2946
    %vm2957 = vcmp.eq.f32.partialorder %v2956, 8.507059e+37
    %v2958 = vand.u32 %v2946, 2147483648
    %v2959 = vor.u32 1.1754944e-38, %v2958
    %v2960 = vsel %vm2957, %v2959, %v2955
    %v2961 = vmul.f32 1.0, %v2960
    %v2962 = vtanh.pop %v2922
    %v2963 = vxor.u32 %v2923, 2147483648
    %v2964 = vmul.f32 %v2963, 1.442695
    %v2965 = vpow.pop %v2964
    %v2966 = vadd.f32 %v2965, 1.0
    %v2967 = vrcp.pop %v2966
    %v2968 = vmul.f32 %v2966, %v2967
    %v2969 = vsub.f32 1.0, %v2968
    %v2970 = vmul.f32 %v2967, %v2969
    %v2971 = vadd.f32 %v2967, %v2970
    %vm2972 = vweird.f32 %v2966
    %vm2973 = vweird.f32 %v2967
    %vm2974 = vmor %vm2972, %vm2973
    %v2975 = vsel %vm2974, %v2967, %v2971
    %v2976 = vand.u32 2147483647, %v2966
    %vm2977 = vcmp.eq.f32.partialorder %v2976, 8.507059e+37
    %v2978 = vand.u32 %v2966, 2147483648
    %v2979 = vor.u32 1.1754944e-38, %v2978
    %v2980 = vsel %vm2977, %v2979, %v2975
    %v2981 = vmul.f32 1.0, %v2980
    %v2982 = vmul.f32 %v2961, %v2837
    %v2983 = vmul.f32 %v2942, %v2962
    %v2984 = vadd.f32 %v2982, %v2983
    %v2985 = vtanh.pop %v2984
    %v2986 = vmul.f32 %v2981, %v2985
    %2987 = vmatpush.msra.mxu0 %v1767
    %2988 = vmatpush.msra.mxu0 %v1763
    %2989 = vmatpush.msra.mxu0 %v1759
    %2990 = vmatpush.msra.mxu0 %v1755
    %2991 = vmatpush.msra.mxu0 %v1751
    %2992 = vmatpush.msra.mxu0 %v1747
    %2993 = vmatpush.msra.mxu0 %v1743
    %2994 = vmatpush.msra.mxu0 %v1739
    %2995 = vmatpush.msra.mxu0 %v1735
    %2996 = vmatpush.msra.mxu0 %v1731
    %2997 = vmatpush.msra.mxu0 %v1727
    %2998 = vmatpush.msra.mxu0 %v1723
    %2999 = vmatpush.msra.mxu0 %v1719
    %3000 = vmatpush.msra.mxu0 %v1715
    %3001 = vmatpush.msra.mxu0 %v1711
    %3002 = vmatpush.msra.mxu0 %v1707
    %3003 = vmatmul.f32.gmra.mxu0 %v2986
    %v3004 = vpop.f32.mrf.mxu0
    %v3005 = vadd.f32 0.0, %v3004
    %3006 = vdwg.mxu0
    %3007 = vmatpush.msra.mxu0 %v1768
    %3008 = vmatpush.msra.mxu0 %v1764
    %3009 = vmatpush.msra.mxu0 %v1760
    %3010 = vmatpush.msra.mxu0 %v1756
    %3011 = vmatpush.msra.mxu0 %v1752
    %3012 = vmatpush.msra.mxu0 %v1748
    %3013 = vmatpush.msra.mxu0 %v1744
    %3014 = vmatpush.msra.mxu0 %v1740
    %3015 = vmatpush.msra.mxu0 %v1736
    %3016 = vmatpush.msra.mxu0 %v1732
    %3017 = vmatpush.msra.mxu0 %v1728
    %3018 = vmatpush.msra.mxu0 %v1724
    %3019 = vmatpush.msra.mxu0 %v1720
    %3020 = vmatpush.msra.mxu0 %v1716
    %3021 = vmatpush.msra.mxu0 %v1712
    %3022 = vmatpush.msra.mxu0 %v1708
    %3023 = vmatmul.f32.gmra.mxu0 %v2986
    %v3024 = vpop.f32.mrf.mxu0
    %v3025 = vadd.f32 0.0, %v3024
    %3026 = vdwg.mxu0
    %3027 = vmatpush.msra.mxu0 %v1769
    %3028 = vmatpush.msra.mxu0 %v1765
    %3029 = vmatpush.msra.mxu0 %v1761
    %3030 = vmatpush.msra.mxu0 %v1757
    %3031 = vmatpush.msra.mxu0 %v1753
    %3032 = vmatpush.msra.mxu0 %v1749
    %3033 = vmatpush.msra.mxu0 %v1745
    %3034 = vmatpush.msra.mxu0 %v1741
    %3035 = vmatpush.msra.mxu0 %v1737
    %3036 = vmatpush.msra.mxu0 %v1733
    %3037 = vmatpush.msra.mxu0 %v1729
    %3038 = vmatpush.msra.mxu0 %v1725
    %3039 = vmatpush.msra.mxu0 %v1721
    %3040 = vmatpush.msra.mxu0 %v1717
    %3041 = vmatpush.msra.mxu0 %v1713
    %3042 = vmatpush.msra.mxu0 %v1709
    %3043 = vmatmul.f32.gmra.mxu0 %v2986
    %v3044 = vpop.f32.mrf.mxu0
    %v3045 = vadd.f32 0.0, %v3044
    %3046 = vdwg.mxu0
    %3047 = vmatpush.msra.mxu0 %v1770
    %3048 = vmatpush.msra.mxu0 %v1766
    %3049 = vmatpush.msra.mxu0 %v1762
    %3050 = vmatpush.msra.mxu0 %v1758
    %3051 = vmatpush.msra.mxu0 %v1754
    %3052 = vmatpush.msra.mxu0 %v1750
    %3053 = vmatpush.msra.mxu0 %v1746
    %3054 = vmatpush.msra.mxu0 %v1742
    %3055 = vmatpush.msra.mxu0 %v1738
    %3056 = vmatpush.msra.mxu0 %v1734
    %3057 = vmatpush.msra.mxu0 %v1730
    %3058 = vmatpush.msra.mxu0 %v1726
    %3059 = vmatpush.msra.mxu0 %v1722
    %3060 = vmatpush.msra.mxu0 %v1718
    %3061 = vmatpush.msra.mxu0 %v1714
    %3062 = vmatpush.msra.mxu0 %v1710
    %3063 = vmatmul.f32.gmra.mxu0 %v2986
    %v3064 = vpop.f32.mrf.mxu0
    %v3065 = vadd.f32 0.0, %v3064
    %3066 = vdwg.mxu0
    %v3067 = vadd.f32 %v1829, %v3005
    %v3068 = vadd.f32 %v1870, %v3025
    %v3069 = vadd.f32 %v1911, %v3045
    %v3070 = vadd.f32 %v1952, %v3065
    %v3071 = vxor.u32 %v3067, 2147483648
    %v3072 = vmul.f32 %v3071, 1.442695
    %v3073 = vpow.pop %v3072
    %v3074 = vadd.f32 %v3073, 1.0
    %v3075 = vrcp.pop %v3074
    %v3076 = vmul.f32 %v3074, %v3075
    %v3077 = vsub.f32 1.0, %v3076
    %v3078 = vmul.f32 %v3075, %v3077
    %v3079 = vadd.f32 %v3075, %v3078
    %vm3080 = vweird.f32 %v3074
    %vm3081 = vweird.f32 %v3075
    %vm3082 = vmor %vm3080, %vm3081
    %v3083 = vsel %vm3082, %v3075, %v3079
    %v3084 = vand.u32 2147483647, %v3074
    %vm3085 = vcmp.eq.f32.partialorder %v3084, 8.507059e+37
    %v3086 = vand.u32 %v3074, 2147483648
    %v3087 = vor.u32 1.1754944e-38, %v3086
    %v3088 = vsel %vm3085, %v3087, %v3083
    %v3089 = vmul.f32 1.0, %v3088
    %v3090 = vxor.u32 %v3068, 2147483648
    %v3091 = vmul.f32 %v3090, 1.442695
    %v3092 = vpow.pop %v3091
    %v3093 = vadd.f32 %v3092, 1.0
    %v3094 = vrcp.pop %v3093
    %v3095 = vmul.f32 %v3093, %v3094
    %v3096 = vsub.f32 1.0, %v3095
    %v3097 = vmul.f32 %v3094, %v3096
    %v3098 = vadd.f32 %v3094, %v3097
    %vm3099 = vweird.f32 %v3093
    %vm3100 = vweird.f32 %v3094
    %vm3101 = vmor %vm3099, %vm3100
    %v3102 = vsel %vm3101, %v3094, %v3098
    %v3103 = vand.u32 2147483647, %v3093
    %vm3104 = vcmp.eq.f32.partialorder %v3103, 8.507059e+37
    %v3105 = vand.u32 %v3093, 2147483648
    %v3106 = vor.u32 1.1754944e-38, %v3105
    %v3107 = vsel %vm3104, %v3106, %v3102
    %v3108 = vmul.f32 1.0, %v3107
    %v3109 = vtanh.pop %v3069
    %v3110 = vxor.u32 %v3070, 2147483648
    %v3111 = vmul.f32 %v3110, 1.442695
    %v3112 = vpow.pop %v3111
    %v3113 = vadd.f32 %v3112, 1.0
    %v3114 = vrcp.pop %v3113
    %v3115 = vmul.f32 %v3113, %v3114
    %v3116 = vsub.f32 1.0, %v3115
    %v3117 = vmul.f32 %v3114, %v3116
    %v3118 = vadd.f32 %v3114, %v3117
    %vm3119 = vweird.f32 %v3113
    %vm3120 = vweird.f32 %v3114
    %vm3121 = vmor %vm3119, %vm3120
    %v3122 = vsel %vm3121, %v3114, %v3118
    %v3123 = vand.u32 2147483647, %v3113
    %vm3124 = vcmp.eq.f32.partialorder %v3123, 8.507059e+37
    %v3125 = vand.u32 %v3113, 2147483648
    %v3126 = vor.u32 1.1754944e-38, %v3125
    %v3127 = vsel %vm3124, %v3126, %v3122
    %v3128 = vmul.f32 1.0, %v3127
    %v3129 = vmul.f32 %v3108, %v2984
    %v3130 = vmul.f32 %v3089, %v3109
    %v3131 = vadd.f32 %v3129, %v3130
    %v3132 = vtanh.pop %v3131
    %v3133 = vmul.f32 %v3128, %v3132
    %s3134 = scalar_lea.vmem [#allocation16], 8
    %3135 = vst [vmem:[%s3134] sm:$0xff] %v3133
    %s3136 = scalar_lea.vmem [#allocation18], 8
    %3137 = vst [vmem:[%s3136] sm:$0xff] %v3131
    %v3138 = vld [vmem:[#allocation14] sm:$0xff]
    %v3139 = vld [vmem:[#allocation14 + $0x8] sm:$0xff]
    %v3140 = vld [vmem:[#allocation14 + $0x10] sm:$0xff]
    %v3141 = vld [vmem:[#allocation14 + $0x18] sm:$0xff]
    %v3142 = vld [vmem:[#allocation14 + $0x20] sm:$0xff]
    %v3143 = vld [vmem:[#allocation14 + $0x28] sm:$0xff]
    %v3144 = vld [vmem:[#allocation14 + $0x30] sm:$0xff]
    %v3145 = vld [vmem:[#allocation14 + $0x38] sm:$0xff]
    %v3146 = vld [vmem:[#allocation14 + $0x40] sm:$0xff]
    %v3147 = vld [vmem:[#allocation14 + $0x48] sm:$0xff]
    %v3148 = vld [vmem:[#allocation14 + $0x50] sm:$0xff]
    %v3149 = vld [vmem:[#allocation14 + $0x58] sm:$0xff]
    %v3150 = vld [vmem:[#allocation14 + $0x60] sm:$0xff]
    %v3151 = vld [vmem:[#allocation14 + $0x68] sm:$0xff]
    %v3152 = vld [vmem:[#allocation14 + $0x70] sm:$0xff]
    %v3153 = vld [vmem:[#allocation14 + $0x78] sm:$0xff]
    %v3154 = vld [vmem:[%s7] sm:$0x1]
    %v3156 = vperm.slane %v3154, 0
    %3158 = vmatpush.msra.mxu0 %v3153
    %3159 = vmatpush.msra.mxu0 %v3152
    %3160 = vmatpush.msra.mxu0 %v3151
    %3161 = vmatpush.msra.mxu0 %v3150
    %3162 = vmatpush.msra.mxu0 %v3149
    %3163 = vmatpush.msra.mxu0 %v3148
    %3164 = vmatpush.msra.mxu0 %v3147
    %3165 = vmatpush.msra.mxu0 %v3146
    %3166 = vmatpush.msra.mxu0 %v3145
    %3167 = vmatpush.msra.mxu0 %v3144
    %3168 = vmatpush.msra.mxu0 %v3143
    %3169 = vmatpush.msra.mxu0 %v3142
    %3170 = vmatpush.msra.mxu0 %v3141
    %3171 = vmatpush.msra.mxu0 %v3140
    %3172 = vmatpush.msra.mxu0 %v3139
    %3173 = vmatpush.msra.mxu0 %v3138
    %3174 = vmatmul.f32.gmra.mxu0 %v3133
    %v3175 = vpop.f32.mrf.mxu0
    %v3176 = vadd.f32 %v3156, %v3175
    %3177 = vdwg.mxu0
    %v3178 = vxor.u32 %v3176, 2147483648
    %v3179 = vmul.f32 %v3178, 1.442695
    %v3180 = vpow.pop %v3179
    %v3181 = vadd.f32 %v3180, 1.0
    %v3182 = vrcp.pop %v3181
    %v3183 = vmul.f32 %v3181, %v3182
    %v3184 = vsub.f32 1.0, %v3183
    %v3185 = vmul.f32 %v3182, %v3184
    %v3186 = vadd.f32 %v3182, %v3185
    %vm3187 = vweird.f32 %v3181
    %vm3188 = vweird.f32 %v3182
    %vm3189 = vmor %vm3187, %vm3188
    %v3190 = vsel %vm3189, %v3182, %v3186
    %v3191 = vand.u32 2147483647, %v3181
    %vm3192 = vcmp.eq.f32.partialorder %v3191, 8.507059e+37
    %v3193 = vand.u32 %v3181, 2147483648
    %v3194 = vor.u32 1.1754944e-38, %v3193
    %v3195 = vsel %vm3192, %v3194, %v3190
    %v3196 = vmul.f32 1.0, %v3195
    %3197 = vst [vmem:[#allocation15] sm:$0xff] %v3196
    // Predicated region
    $region62: #{tpu_custom_call.1} parent=1 // pred_check
      _
    $region63: #{tpu_custom_call.1} parent=1 // pred_check_branch
      %3199 = sbr.rel (0) target = $region65
    $region64: #{tpu_custom_call.1} parent=1 // pred_region
      %3201 = vsyncadd [#allocation5], 0
      %s3203 = sshll.u32 [#allocation15], 4
      %s3204 = int_to_ptr.vmem [resolvable:$true] %s3203
      %s3205 = sshll.u32 %s8, 4
      %s3206 = int_to_ptr.hbm [resolvable:$true] %s3205
      %3208 = dma.vmem_to_hbm [thread:$0]  %s3204, 128, %s3206, [#allocation5]
    $region65: #{tpu_custom_call.1} parent=1 // pred_fallthru
      _
    // Predicated region
    $region66: #{tpu_custom_call.1} parent=1 // pred_check
      _
    $region67: #{tpu_custom_call.1} parent=1 // pred_check_branch
      %3210 = sbr.rel (0) target = $region69
    $region68: #{tpu_custom_call.1} parent=1 // pred_region
      %3212 = vsyncadd [#allocation17], 0
      %s3213 = sshll.u32 [#allocation16], 4
      %s3214 = int_to_ptr.vmem [resolvable:$true] %s3213
      %s3215 = sshll.u32 %s9, 4
      %s3216 = int_to_ptr.hbm [resolvable:$true] %s3215
      %3221 = dma.vmem_to_hbm [thread:$0]  %s3214, 256, %s3216, [#allocation17], 128, 128, 8
    $region69: #{tpu_custom_call.1} parent=1 // pred_fallthru
      _
    // Predicated region
    $region70: #{tpu_custom_call.1} parent=1 // pred_check
      _
    $region71: #{tpu_custom_call.1} parent=1 // pred_check_branch
      %3223 = sbr.rel (0) target = $region73
    $region72: #{tpu_custom_call.1} parent=1 // pred_region
      %3225 = vsyncadd [#allocation17], 0
      %s3226 = sshll.u32 [#allocation18], 4
      %s3227 = int_to_ptr.vmem [resolvable:$true] %s3226
      %s3228 = sshll.u32 %s10, 4
      %s3229 = int_to_ptr.hbm [resolvable:$true] %s3228
      %3234 = dma.vmem_to_hbm [thread:$0]  %s3227, 256, %s3229, [#allocation17], 128, 128, 8
    $region73: #{tpu_custom_call.1} parent=1 // pred_fallthru
      _
    // Predicated region
    $region74: #{tpu_custom_call.1} parent=1 // pred_check
      _
    $region75: #{tpu_custom_call.1} parent=1 // pred_check_branch
      %3236 = sbr.rel (0) target = $region77
    $region76: #{tpu_custom_call.1} parent=1 // pred_region
      %3238 = dma.done [#allocation5], 128
    $region77: #{tpu_custom_call.1} parent=1 // pred_fallthru
      _
    // Predicated region
    $region78: #{tpu_custom_call.1} parent=1 // pred_check
      _
    $region79: #{tpu_custom_call.1} parent=1 // pred_check_branch
      %3240 = sbr.rel (0) target = $region81
    $region80: #{tpu_custom_call.1} parent=1 // pred_region
      %3242 = dma.done [#allocation17], 256
    $region81: #{tpu_custom_call.1} parent=1 // pred_fallthru
      _
    // Predicated region
    $region82: #{tpu_custom_call.1} parent=1 // pred_check
      _
    $region83: #{tpu_custom_call.1} parent=1 // pred_check_branch
      %3244 = sbr.rel (0) target = $region85
    $region84: #{tpu_custom_call.1} parent=1 // pred_region
      %3246 = dma.done [#allocation17], 256
    $region85: #{tpu_custom_call.1} parent=1 // pred_fallthru
      _
    %3247 = vsyncpa [#allocation4], 1
    %3248 = vsyncpa [#allocation7], 1
    %3249 = vsyncpa [#allocation10], 1
    %3250 = vsyncpa [#allocation13], 1
    %3251 = vsyncpa [#allocation5], 1
    %3252 = vsyncpa [#allocation17], 1

</llo_original>
